<compile_context>
chip_gen: v5e
topology: v5e:2x2
jax: 0.10.0
libtpu: 0.0.40
codegen_flags: <defaults>
</compile_context>

<pallas_src>
import jax
import jax.numpy as jnp
from jax import lax
from jax.experimental import pallas as pl
from jax.experimental.pallas import tpu as pltpu

BN_EPS = 1e-5

PREP_ORDER = [
    "cw1", "cb1", "w2", "b2", "w3", "b3",
    "sw", "sb",
    "dwcat", "db", "cdw", "cdb",
    "fgw", "fgb", "srw", "srb",
    "e1w", "e1b", "e2w", "e2b",
    "u1pw", "u1pb", "u2we", "psel", "u2b",
]


# -----------------------------------------------------------------------------
# Kernel
# -----------------------------------------------------------------------------
def _make_kernel(cfg):
    layers = cfg["layers"]
    blocks = cfg["blocks"]
    T = cfg["T"]
    bblk = cfg["bblk"]
    R = cfg["residual_channels"]
    S = cfg["skip_channels"]
    E2 = cfg["end_channels"] // 2
    BT = bblk * T

    def kernel(x_ref,
               cw1, cb1, w2, b2, w3, b3,
               sw, sb,
               dwcat, db, cdw, cdb,
               fgw, fgb, srw, srb,
               e1w, e1b, e2w, e2b,
               u1pw, u1pb, u2we, psel, u2b,
               pred_ref, unc_ref):
        x_col = x_ref[...]                                    # (BT, 1) f32

        # time index of each flattened row (row = b*T + t), computed once
        t_idx = lax.broadcasted_iota(jnp.int32, (BT, 1), 0) % T

        def shift(v, s):
            # out[b*T + t] = v[b*T + t + s] if 0 <= t + s < T else 0
            if s == 0:
                return v
            rolled = pltpu.roll(v, (-s) % BT, axis=0)         # XLU sublane roll
            mask = (t_idx < (T - s)) if s > 0 else (t_idx >= (-s))
            return jnp.where(mask, rolled, 0.0)

        def mm(a, w):
            # MXU matmul with f32 accumulation; weight dtype decides precision
            return jnp.dot(a.astype(w.dtype), w,
                           preferred_element_type=jnp.float32)

        # ---- condition net conv1 (k=7, cin=1): elementwise taps, f32 ----
        h = None
        for j in range(7):
            term = shift(x_col, j - 3) * cw1[j]               # (BT, C/4)
            h = term if h is None else h + term
        h = jnp.maximum(h + cb1[...], 0.0)

        # fused 'same' conv: k shifted copies on lanes -> ONE matmul
        def conv_fused(hin, k, w_ref, b_ref):
            p_ = k // 2
            hcat = jnp.concatenate([shift(hin, j - p_) for j in range(k)],
                                   axis=-1)
            return mm(hcat, w_ref[...]) + b_ref[...]

        h = jnp.maximum(conv_fused(h, 5, w2, b2), 0.0)        # (BT, C/2)
        cond = jnp.maximum(conv_fused(h, 3, w3, b3), 0.0)     # (BT, C)
        cond = cond.astype(jnp.bfloat16)                      # matmul input only

        # ---- start conv (1x1 on a single input channel) ----
        res0 = x_col * sw[...] + sb[...]                      # (BT, R) f32
        skip0 = jnp.zeros((BT, S), jnp.float32)

        # ---- residual stack: fori_loop over blocks, inner layers unrolled ----
        def block_body(bi, carry):
            res, skip = carry
            for li in range(layers):
                d = 2 ** li
                l = bi * layers + li                          # dynamic index
                # causal dilated conv (k=2): both taps in one (BT,2R)@(2R,G)
                din = jnp.concatenate([shift(res, -d), res],
                                      axis=-1).astype(jnp.bfloat16)
                dil = jnp.dot(din, dwcat[l],
                              preferred_element_type=jnp.float32) + db[l]
                # per-layer condition projection (cond stays live at (BT,C))
                comb = dil + jnp.dot(cond, cdw[l],
                                     preferred_element_type=jnp.float32) + cdb[l]
                # fused filter/gate 1x1: one (BT,G)@(G,2R)
                fg = mm(comb, fgw[l]) + fgb[l]
                gated = jnp.tanh(fg[:, :R]) * jax.nn.sigmoid(fg[:, R:])
                # BatchNorm folded into srw/srb.
                # TODO(synk): nn.Dropout is identity at inference; not modeled.
                sr = mm(gated, srw[l]) + srb[l]               # (BT, S+R)
                skip = skip + sr[:, :S]
                res = res + sr[:, S:]
            return res, skip

        _, skip_sum = lax.fori_loop(0, blocks, block_body, (res0, skip0))

        # ---- output stack ----
        h = jnp.maximum(skip_sum, 0.0)
        h = jnp.maximum(mm(h, e1w[...]) + e1b[...], 0.0)
        h = jnp.maximum(mm(h, e2w[...]) + e2b[...], 0.0)      # (BT, E)

        # prediction head folded into the uncertainty hidden matmul:
        # c = h @ [u1w | pw] + [u1b | pb]  -> (BT, E2+1)
        c = mm(h, u1pw[...]) + u1pb[...]
        c3 = c.reshape(bblk, T, E2 + 1)
        # lane-dense (bblk, T) outputs via multiply + lane reduction
        pred_ref[...] = jnp.sum(c3 * psel[...], axis=-1)
        u3 = jnp.maximum(c3, 0.0)                             # extra col unused
        unc_ref[...] = jax.nn.softplus(jnp.sum(u3 * u2we[...], axis=-1)
                                       + u2b[...])

    return kernel


# -----------------------------------------------------------------------------
# Host-side parameter preprocessing: BN folding, fusion, bf16 casts
# -----------------------------------------------------------------------------
def _bn_fold(bn):
    gamma, beta, mean, var = bn[0], bn[1], bn[2], bn[3]
    s = gamma / jnp.sqrt(var + BN_EPS)
    return s, beta - mean * s


def _preprocess_params(p, cfg):
    layers, blocks = cfg["layers"], cfg["blocks"]
    L = layers * blocks
    C = cfg["condition_channels"]
    E2 = cfg["end_channels"] // 2
    C4, C2 = C // 4, C // 2
    bf16, f32 = jnp.bfloat16, jnp.float32
    q = {}

    # condition net: conv -> BN -> ReLU  ==>  conv' -> ReLU
    s1, t1 = _bn_fold(p["bn1"])
    q["cw1"] = (p["cw1"] * s1[None, None, :]).astype(f32)       # (7,1,C4) elementwise
    q["cb1"] = (p["cb1"] * s1[None, :] + t1[None, :]).astype(f32)

    s2, t2 = _bn_fold(p["bn2"])
    q["w2"] = (p["cw2"] * s2[None, None, :]).reshape(5 * C4, C2).astype(bf16)
    q["b2"] = (p["cb2"] * s2[None, :] + t2[None, :]).astype(f32)

    s3, t3 = _bn_fold(p["bn3"])
    q["w3"] = (p["cw3"] * s3[None, None, :]).reshape(3 * C2, C).astype(bf16)
    q["b3"] = (p["cb3"] * s3[None, :] + t3[None, :]).astype(f32)

    q["sw"], q["sb"] = p["sw"].astype(f32), p["sb"].astype(f32)

    # dilated conv: both causal taps concatenated along Cin -> (L, 2R, G)
    q["dwcat"] = jnp.concatenate([p["dw"][:, 0], p["dw"][:, 1]], axis=1).astype(bf16)
    q["db"] = p["db"][:, None, :].astype(f32)                   # (L, 1, G)

    # per-layer condition 1x1 convs (indexed per layer inside the loop)
    q["cdw"] = p["cdw"].astype(bf16)                            # (L, C, G)
    q["cdb"] = p["cdb"][:, None, :].astype(f32)                 # (L, 1, G)

    # filter + gate 1x1 convs fused -> (L, G, 2R)
    q["fgw"] = jnp.concatenate([p["fw"], p["gw"]], axis=2).astype(bf16)
    q["fgb"] = jnp.concatenate([p["fb"], p["gb"]], axis=1)[:, None, :].astype(f32)

    # skip + residual 1x1 convs fused, per-layer BatchNorm folded in
    g, be, m, v = (p["bnb"][:, i] for i in range(4))            # each (L, R)
    sbn = g / jnp.sqrt(v + BN_EPS)
    tbn = be - m * sbn
    srw = jnp.concatenate([p["skw"], p["rw"]], axis=2)          # (L, R, S+R)
    srb = jnp.concatenate([p["skb"], p["rb"]], axis=1)          # (L, S+R)
    q["srw"] = (sbn[:, :, None] * srw).astype(bf16)
    q["srb"] = (jnp.einsum("lr,lrc->lc", tbn, srw) + srb)[:, None, :].astype(f32)

    # output stack
    q["e1w"], q["e1b"] = p["e1w"].astype(bf16), p["e1b"].astype(f32)
    q["e2w"], q["e2b"] = p["e2w"].astype(bf16), p["e2b"].astype(f32)

    # prediction head folded into the uncertainty hidden matmul
    q["u1pw"] = jnp.concatenate([p["u1w"], p["pw"]], axis=1).astype(bf16)   # (E, E2+1)
    q["u1pb"] = jnp.concatenate([p["u1b"], p["pb"]], axis=1).astype(f32)    # (1, E2+1)
    q["u2we"] = jnp.concatenate([p["u2w"][:, 0], jnp.zeros((1,), f32)]
                                ).reshape(1, 1, E2 + 1).astype(f32)
    q["psel"] = jnp.zeros((E2 + 1,), f32).at[E2].set(1.0).reshape(1, 1, E2 + 1)
    q["u2b"] = p["u2b"].astype(f32)                                         # (1, 1)
    return q


# -----------------------------------------------------------------------------
# VMEM budgeting helpers
# -----------------------------------------------------------------------------
def _round_up(v, m):
    return ((v + m - 1) // m) * m


def _lane_pad(c):
    return _round_up(max(int(c), 1), 128)


def _activation_bytes_per_row(cfg):
    """Approx. lane-padded live bytes per flattened (b, t) row inside the kernel."""
    R = cfg["residual_channels"]
    G = cfg["dilation_channels"]
    S = cfg["skip_channels"]
    E = cfg["end_channels"]
    C = cfg["condition_channels"]
    C4, C2 = C // 4, C // 2
    f32, bf16 = 4, 2
    b = 0
    b += 2 * _lane_pad(1) * f32            # x column input, double buffered
    b += _lane_pad(1) * 4                  # t_idx
    b += _lane_pad(C) * bf16               # cond (live across layer loop)
    b += 2 * _lane_pad(R) * f32            # res + shifted tap
    b += _lane_pad(S) * f32                # skip_sum
    b += _lane_pad(2 * R) * (bf16 + f32)   # din + filter/gate pre-activation
    b += 2 * _lane_pad(G) * f32            # dilated + combined
    b += _lane_pad(S + R) * f32            # fused skip/residual matmul output
    b += _lane_pad(R) * bf16               # gated
    b += _lane_pad(max(5 * C4, 3 * C2, E)) * (f32 + bf16)  # cond-net / end stack
    b += 4 * f32                           # two (bblk, T) outputs, double buffered
    return b


def _weight_bytes(plist, buffers=2):
    total = 0
    for a in plist:
        shp = a.shape
        lead = 1
        for d_ in shp[:-2]:
            lead *= int(d_)
        sub_mult = 32 // a.dtype.itemsize  # 8 for f32, 16 for bf16 tiles
        total += (lead * _round_up(int(shp[-2]), sub_mult)
                  * _lane_pad(shp[-1]) * a.dtype.itemsize)
    return total * buffers


def _pick_bblk(B, T, budget_bytes, weight_bytes, row_bytes):
    avail = max(budget_bytes - weight_bytes, 0)
    bblk_fit = int(avail // max(row_bytes * T, 1))
    candidates = [c for c in range(8, B + 1, 8) if B % c == 0] or [B]
    cap_b = max(bblk_fit, candidates[0])     # never below the smallest legal block
    fitting = [c for c in candidates if c <= cap_b]
    # prefer >= 2 grid steps so both v7x TensorCores get work
    multi = [c for c in fitting if B // c >= 2]
    return max(multi) if multi else max(fitting)


def _weight_spec(a, single_buffer):
    nd = a.ndim
    idx_map = lambda b, _nd=nd: (0,) * _nd
    if single_buffer:
        # block index never changes across the grid -> one VMEM buffer is enough
        return pl.BlockSpec(a.shape, idx_map, pipeline_mode=pl.Buffered(1))
    return pl.BlockSpec(a.shape, idx_map)


# -----------------------------------------------------------------------------
# Wrapper
# -----------------------------------------------------------------------------
def wavenet_forward(x, params, cfg):
    B, T = x.shape
    if T % 8 != 0:
        raise ValueError("wavenet_forward requires T % 8 == 0")

    prep = _preprocess_params(params, cfg)
    plist = [prep[k] for k in PREP_ORDER]

    # VMEM capacity (conservative 64 MiB fallback = v7x per-core size)
    try:
        cap = int(getattr(pltpu.get_tpu_info(), "vmem_capacity_bytes", 64 << 20))
    except Exception:
        cap = 64 << 20
    budget = int(0.45 * cap)

    row_bytes = _activation_bytes_per_row(cfg)
    wbytes = _weight_bytes(plist, buffers=2)
    bblk = _pick_bblk(B, T, budget, wbytes, row_bytes)

    cfg2 = dict(cfg, T=T, bblk=bblk)
    kernel = _make_kernel(cfg2)

    need = int(1.3 * (wbytes + bblk * T * row_bytes)) + (4 << 20)
    vmem_limit = int(min(int(0.9 * cap), max(need, 32 << 20)))

    x_flat = x.reshape(B * T, 1).astype(jnp.float32)
    out_shape = (jax.ShapeDtypeStruct((B, T), jnp.float32),
                 jax.ShapeDtypeStruct((B, T), jnp.float32))
    out_spec = pl.BlockSpec((bblk, T), lambda b: (b, 0))

    def build(single_buffer_weights):
        in_specs = [pl.BlockSpec((bblk * T, 1), lambda b: (b, 0))]
        in_specs += [_weight_spec(a, single_buffer_weights) for a in plist]
        return pl.pallas_call(
            kernel,
            out_shape=out_shape,
            grid=(B // bblk,),
            in_specs=in_specs,
            out_specs=(out_spec, out_spec),
            compiler_params=pltpu.CompilerParams(
                dimension_semantics=("parallel",),
                vmem_limit_bytes=vmem_limit),
        )

    try:
        pred, unc = build(True)(x_flat, *plist)
    except Exception:
        # pipeline_mode=pl.Buffered(1) not supported -> default double buffering
        pred, unc = build(False)(x_flat, *plist)
    return pred, unc


# -----------------------------------------------------------------------------
# Synthetic parameters (PyTorch-layout) and a pure-JAX reference
# -----------------------------------------------------------------------------
def init_params(key, cfg):
    layers, blocks = cfg["layers"], cfg["blocks"]
    L = layers * blocks
    R = cfg["residual_channels"]
    G = cfg["dilation_channels"]
    S = cfg["skip_channels"]
    E = cfg["end_channels"]
    C = cfg["condition_channels"]
    C4, C2 = C // 4, C // 2
    E2 = E // 2

    keys = iter(jax.random.split(key, 128))

    def w(shape, scale=0.1):
        return (scale * jax.random.normal(next(keys), shape)).astype(jnp.float32)

    def bn(c):
        g = 1.0 + 0.1 * jax.random.normal(next(keys), (c,))
        b = 0.05 * jax.random.normal(next(keys), (c,))
        m = 0.05 * jax.random.normal(next(keys), (c,))
        v = 1.0 + 0.1 * jax.random.uniform(next(keys), (c,))
        return jnp.stack([g, b, m, v]).astype(jnp.float32)

    p = {}
    p["cw1"], p["cb1"], p["bn1"] = w((7, 1, C4)), w((1, C4)), bn(C4)
    p["cw2"], p["cb2"], p["bn2"] = w((5, C4, C2)), w((1, C2)), bn(C2)
    p["cw3"], p["cb3"], p["bn3"] = w((3, C2, C)), w((1, C)), bn(C)
    p["sw"], p["sb"] = w((1, R)), w((1, R))
    p["dw"], p["db"] = w((L, 2, R, G)), w((L, G))
    p["cdw"], p["cdb"] = w((L, C, G)), w((L, G))
    p["fw"], p["fb"] = w((L, G, R)), w((L, R))
    p["gw"], p["gb"] = w((L, G, R)), w((L, R))
    p["skw"], p["skb"] = w((L, R, S)), w((L, S))
    p["rw"], p["rb"] = w((L, R, R)), w((L, R))
    p["bnb"] = jnp.stack([bn(R) for _ in range(L)])
    p["e1w"], p["e1b"] = w((S, E)), w((1, E))
    p["e2w"], p["e2b"] = w((E, E)), w((1, E))
    p["pw"], p["pb"] = w((E, 1)), w((1, 1))
    p["u1w"], p["u1b"] = w((E, E2)), w((1, E2))
    p["u2w"], p["u2b"] = w((E2, 1)), w((1, 1))
    return p


def _reference_forward(x, p, cfg):
    """Pure-JAX f32 reference mirroring the PyTorch module in eval mode."""
    B, T = x.shape
    layers, blocks = cfg["layers"], cfg["blocks"]
    L = layers * blocks

    def shift(v, s):  # v: (B, T, C); out[:, t] = v[:, t+s], zero padded
        if s == 0:
            return v
        if abs(s) >= T:
            return jnp.zeros_like(v)
        z = jnp.zeros((B, abs(s), v.shape[2]), v.dtype)
        if s > 0:
            return jnp.concatenate([v[:, s:], z], axis=1)
        return jnp.concatenate([z, v[:, :T + s]], axis=1)

    def mm(a, w):
        return jnp.einsum("btc,cd->btd", a, w)

    def conv_same(h, w, b):
        k = w.shape[0]
        pd = k // 2
        acc = 0.0
        for j in range(k):
            acc = acc + mm(shift(h, j - pd), w[j])
        return acc + b

    def bn(h, bnp):
        g, be, m, v = bnp[0], bnp[1], bnp[2], bnp[3]
        return (h - m) * (g / jnp.sqrt(v + BN_EPS)) + be

    xc = x[:, :, None]
    h = jax.nn.relu(bn(conv_same(xc, p["cw1"], p["cb1"]), p["bn1"]))
    h = jax.nn.relu(bn(conv_same(h, p["cw2"], p["cb2"]), p["bn2"]))
    cond = jax.nn.relu(bn(conv_same(h, p["cw3"], p["cb3"]), p["bn3"]))

    res = xc * p["sw"] + p["sb"]
    skip_sum = 0.0
    for l in range(L):
        d = 2 ** (l % layers)
        dil = mm(shift(res, -d), p["dw"][l, 0]) + mm(res, p["dw"][l, 1]) + p["db"][l]
        comb = dil + mm(cond, p["cdw"][l]) + p["cdb"][l]
        filt = jnp.tanh(mm(comb, p["fw"][l]) + p["fb"][l])
        gate = jax.nn.sigmoid(mm(comb, p["gw"][l]) + p["gb"][l])
        gated = bn(filt * gate, p["bnb"][l])
        skip_sum = skip_sum + mm(gated, p["skw"][l]) + p["skb"][l]
        res = mm(gated, p["rw"][l]) + p["rb"][l] + res

    h = jax.nn.relu(skip_sum)
    h = jax.nn.relu(mm(h, p["e1w"]) + p["e1b"])
    h = jax.nn.relu(mm(h, p["e2w"]) + p["e2b"])
    pred = (mm(h, p["pw"]) + p["pb"])[..., 0]
    u = jax.nn.relu(mm(h, p["u1w"]) + p["u1b"])
    unc = jax.nn.softplus((mm(u, p["u2w"]) + p["u2b"])[..., 0])
    return pred, unc


if __name__ == "__main__":
    cfg = dict(layers=2, blocks=2, dilation_channels=16, residual_channels=16,
               skip_channels=32, end_channels=32, condition_channels=16,
               kernel_size=2)
    B, T = 2, 16
    key = jax.random.PRNGKey(0)
    kx, kp = jax.random.split(key)
    x = jax.random.normal(kx, (B, T), dtype=jnp.float32)
    params = init_params(kp, cfg)

    pred, unc = wavenet_forward(x, params, cfg)
    jax.block_until_ready((pred, unc))

    assert pred.shape == (B, T) and unc.shape == (B, T)
    assert bool(jnp.all(jnp.isfinite(pred))) and bool(jnp.all(jnp.isfinite(unc)))
    assert bool(jnp.all(unc >= 0.0))          # Softplus output is non-negative

    # cross-check against a pure-JAX f32 reference (bf16 matmuls -> loose tol)
    pred_ref, unc_ref = _reference_forward(x, params, cfg)
    assert bool(jnp.allclose(pred, pred_ref, atol=2e-2, rtol=1e-1)), \
        float(jnp.max(jnp.abs(pred - pred_ref)))
    assert bool(jnp.allclose(unc, unc_ref, atol=2e-2, rtol=1e-1)), \
        float(jnp.max(jnp.abs(unc - unc_ref)))

    print("KERNEL_OK")
</pallas_src>

<mosaic_0001>
module attributes {stable_mosaic.version = 11 : i64} {
  func.func @kernel(%arg0: i32, %arg1: memref<32x1xf32, #tpu.memory_space<vmem>>, %arg2: memref<7x1x4xf32, #tpu.memory_space<vmem>>, %arg3: memref<1x4xf32, #tpu.memory_space<vmem>>, %arg4: memref<20x8xbf16, #tpu.memory_space<vmem>>, %arg5: memref<1x8xf32, #tpu.memory_space<vmem>>, %arg6: memref<24x16xbf16, #tpu.memory_space<vmem>>, %arg7: memref<1x16xf32, #tpu.memory_space<vmem>>, %arg8: memref<1x16xf32, #tpu.memory_space<vmem>>, %arg9: memref<1x16xf32, #tpu.memory_space<vmem>>, %arg10: memref<4x32x16xbf16, #tpu.memory_space<vmem>>, %arg11: memref<4x1x16xf32, #tpu.memory_space<vmem>>, %arg12: memref<4x16x16xbf16, #tpu.memory_space<vmem>>, %arg13: memref<4x1x16xf32, #tpu.memory_space<vmem>>, %arg14: memref<4x16x32xbf16, #tpu.memory_space<vmem>>, %arg15: memref<4x1x32xf32, #tpu.memory_space<vmem>>, %arg16: memref<4x16x48xbf16, #tpu.memory_space<vmem>>, %arg17: memref<4x1x48xf32, #tpu.memory_space<vmem>>, %arg18: memref<32x32xbf16, #tpu.memory_space<vmem>>, %arg19: memref<1x32xf32, #tpu.memory_space<vmem>>, %arg20: memref<32x32xbf16, #tpu.memory_space<vmem>>, %arg21: memref<1x32xf32, #tpu.memory_space<vmem>>, %arg22: memref<32x17xbf16, #tpu.memory_space<vmem>>, %arg23: memref<1x17xf32, #tpu.memory_space<vmem>>, %arg24: memref<1x1x17xf32, #tpu.memory_space<vmem>>, %arg25: memref<1x1x17xf32, #tpu.memory_space<vmem>>, %arg26: memref<1x1xf32, #tpu.memory_space<vmem>>, %arg27: memref<2x16xf32, #tpu.memory_space<vmem>>, %arg28: memref<2x16xf32, #tpu.memory_space<vmem>>) attributes {dimension_semantics = [#tpu.dimension_semantics<parallel>], iteration_bounds = array<i64: 1>, scalar_prefetch = 0 : i64, scratch_operands = 0 : i64, tpu.core_type = #tpu.core_type<tc>, window_params = [{transform_indices = @transform_0, window_bounds = array<i64: 32, 1>}, {pipeline_mode = #tpu.pipeline_mode<synchronous>, transform_indices = @transform_1, window_bounds = array<i64: 7, 1, 4>}, {pipeline_mode = #tpu.pipeline_mode<synchronous>, transform_indices = @transform_2, window_bounds = array<i64: 1, 4>}, {pipeline_mode = #tpu.pipeline_mode<synchronous>, transform_indices = @transform_3, window_bounds = array<i64: 20, 8>}, {pipeline_mode = #tpu.pipeline_mode<synchronous>, transform_indices = @transform_4, window_bounds = array<i64: 1, 8>}, {pipeline_mode = #tpu.pipeline_mode<synchronous>, transform_indices = @transform_5, window_bounds = array<i64: 24, 16>}, {pipeline_mode = #tpu.pipeline_mode<synchronous>, transform_indices = @transform_6, window_bounds = array<i64: 1, 16>}, {pipeline_mode = #tpu.pipeline_mode<synchronous>, transform_indices = @transform_7, window_bounds = array<i64: 1, 16>}, {pipeline_mode = #tpu.pipeline_mode<synchronous>, transform_indices = @transform_8, window_bounds = array<i64: 1, 16>}, {pipeline_mode = #tpu.pipeline_mode<synchronous>, transform_indices = @transform_9, window_bounds = array<i64: 4, 32, 16>}, {pipeline_mode = #tpu.pipeline_mode<synchronous>, transform_indices = @transform_10, window_bounds = array<i64: 4, 1, 16>}, {pipeline_mode = #tpu.pipeline_mode<synchronous>, transform_indices = @transform_11, window_bounds = array<i64: 4, 16, 16>}, {pipeline_mode = #tpu.pipeline_mode<synchronous>, transform_indices = @transform_12, window_bounds = array<i64: 4, 1, 16>}, {pipeline_mode = #tpu.pipeline_mode<synchronous>, transform_indices = @transform_13, window_bounds = array<i64: 4, 16, 32>}, {pipeline_mode = #tpu.pipeline_mode<synchronous>, transform_indices = @transform_14, window_bounds = array<i64: 4, 1, 32>}, {pipeline_mode = #tpu.pipeline_mode<synchronous>, transform_indices = @transform_15, window_bounds = array<i64: 4, 16, 48>}, {pipeline_mode = #tpu.pipeline_mode<synchronous>, transform_indices = @transform_16, window_bounds = array<i64: 4, 1, 48>}, {pipeline_mode = #tpu.pipeline_mode<synchronous>, transform_indices = @transform_17, window_bounds = array<i64: 32, 32>}, {pipeline_mode = #tpu.pipeline_mode<synchronous>, transform_indices = @transform_18, window_bounds = array<i64: 1, 32>}, {pipeline_mode = #tpu.pipeline_mode<synchronous>, transform_indices = @transform_19, window_bounds = array<i64: 32, 32>}, {pipeline_mode = #tpu.pipeline_mode<synchronous>, transform_indices = @transform_20, window_bounds = array<i64: 1, 32>}, {pipeline_mode = #tpu.pipeline_mode<synchronous>, transform_indices = @transform_21, window_bounds = array<i64: 32, 17>}, {pipeline_mode = #tpu.pipeline_mode<synchronous>, transform_indices = @transform_22, window_bounds = array<i64: 1, 17>}, {pipeline_mode = #tpu.pipeline_mode<synchronous>, transform_indices = @transform_23, window_bounds = array<i64: 1, 1, 17>}, {pipeline_mode = #tpu.pipeline_mode<synchronous>, transform_indices = @transform_24, window_bounds = array<i64: 1, 1, 17>}, {pipeline_mode = #tpu.pipeline_mode<synchronous>, transform_indices = @transform_25, window_bounds = array<i64: 1, 1>}, {transform_indices = @transform_26, window_bounds = array<i64: 2, 16>}, {transform_indices = @transform_27, window_bounds = array<i64: 2, 16>}]} {
    %c0 = arith.constant 0 : index
    %c0_0 = arith.constant 0 : index
    %0 = vector.load %arg1[%c0, %c0_0] : memref<32x1xf32, #tpu.memory_space<vmem>>, vector<32x1xf32>
    %1 = tpu.iota {dimensions = array<i32: 0>} : vector<32x1xi32>
    %c16_i32 = arith.constant 16 : i32
    %c0_i32 = arith.constant 0 : i32
    %2 = arith.cmpi eq, %c16_i32, %c0_i32 : i32
    %c1_i32 = arith.constant 1 : i32
    %3 = arith.select %2, %c1_i32, %c16_i32 : i32
    %4 = vector.broadcast %3 : i32 to vector<32x1xi32>
    %5 = arith.remsi %1, %4 : vector<32x1xi32>
    %c0_i32_1 = arith.constant 0 : i32
    %6 = vector.broadcast %c0_i32_1 : i32 to vector<32x1xi32>
    %7 = arith.cmpi ne, %5, %6 : vector<32x1xi32>
    %c0_i32_2 = arith.constant 0 : i32
    %8 = vector.broadcast %c0_i32_2 : i32 to vector<32x1xi32>
    %9 = arith.cmpi slt, %5, %8 : vector<32x1xi32>
    %c0_i32_3 = arith.constant 0 : i32
    %10 = arith.cmpi slt, %3, %c0_i32_3 : i32
    %11 = vector.broadcast %10 : i1 to vector<32x1xi1>
    %12 = vector.broadcast %11 : vector<32x1xi1> to vector<32x1xi1>
    %13 = arith.xori %9, %12 : vector<32x1xi1>
    %14 = arith.andi %13, %7 : vector<32x1xi1>
    %15 = vector.broadcast %3 : i32 to vector<32x1xi32>
    %16 = arith.addi %5, %15 : vector<32x1xi32>
    %17 = arith.select %14, %16, %5 : vector<32x1xi1>, vector<32x1xi32>
    %c3_i32 = arith.constant 3 : i32
    %18 = tpu.dynamic_rotate %0 by %c3_i32 dim 0 : vector<32x1xf32>, i32 -> vector<32x1xf32>
    %c3_i32_4 = arith.constant 3 : i32
    %19 = vector.broadcast %c3_i32_4 : i32 to vector<32x1xi32>
    %20 = arith.cmpi sge, %17, %19 : vector<32x1xi32>
    %cst = arith.constant 0.000000e+00 : f32
    %21 = vector.broadcast %cst : f32 to vector<32x1xf32>
    %22 = arith.select %20, %18, %21 : vector<32x1xi1>, vector<32x1xf32>
    %c0_5 = arith.constant 0 : index
    %c0_6 = arith.constant 0 : index
    %c0_7 = arith.constant 0 : index
    %23 = vector.load %arg2[%c0_5, %c0_6, %c0_7] : memref<7x1x4xf32, #tpu.memory_space<vmem>>, vector<1x1x4xf32>
    %24 = vector.shape_cast %23 : vector<1x1x4xf32> to vector<1x4xf32>
    %25 = vector.broadcast %22 : vector<32x1xf32> to vector<32x4xf32>
    %26 = vector.broadcast %24 : vector<1x4xf32> to vector<32x4xf32>
    %27 = arith.mulf %25, %26 : vector<32x4xf32>
    %c2_i32 = arith.constant 2 : i32
    %28 = tpu.dynamic_rotate %0 by %c2_i32 dim 0 : vector<32x1xf32>, i32 -> vector<32x1xf32>
    %c2_i32_8 = arith.constant 2 : i32
    %29 = vector.broadcast %c2_i32_8 : i32 to vector<32x1xi32>
    %30 = arith.cmpi sge, %17, %29 : vector<32x1xi32>
    %cst_9 = arith.constant 0.000000e+00 : f32
    %31 = vector.broadcast %cst_9 : f32 to vector<32x1xf32>
    %32 = arith.select %30, %28, %31 : vector<32x1xi1>, vector<32x1xf32>
    %c1 = arith.constant 1 : index
    %c0_10 = arith.constant 0 : index
    %c0_11 = arith.constant 0 : index
    %33 = vector.load %arg2[%c1, %c0_10, %c0_11] : memref<7x1x4xf32, #tpu.memory_space<vmem>>, vector<1x1x4xf32>
    %34 = vector.shape_cast %33 : vector<1x1x4xf32> to vector<1x4xf32>
    %35 = vector.broadcast %32 : vector<32x1xf32> to vector<32x4xf32>
    %36 = vector.broadcast %34 : vector<1x4xf32> to vector<32x4xf32>
    %37 = arith.mulf %35, %36 : vector<32x4xf32>
    %38 = arith.addf %27, %37 : vector<32x4xf32>
    %c1_i32_12 = arith.constant 1 : i32
    %39 = tpu.dynamic_rotate %0 by %c1_i32_12 dim 0 : vector<32x1xf32>, i32 -> vector<32x1xf32>
    %c1_i32_13 = arith.constant 1 : i32
    %40 = vector.broadcast %c1_i32_13 : i32 to vector<32x1xi32>
    %41 = arith.cmpi sge, %17, %40 : vector<32x1xi32>
    %cst_14 = arith.constant 0.000000e+00 : f32
    %42 = vector.broadcast %cst_14 : f32 to vector<32x1xf32>
    %43 = arith.select %41, %39, %42 : vector<32x1xi1>, vector<32x1xf32>
    %c2 = arith.constant 2 : index
    %c0_15 = arith.constant 0 : index
    %c0_16 = arith.constant 0 : index
    %44 = vector.load %arg2[%c2, %c0_15, %c0_16] : memref<7x1x4xf32, #tpu.memory_space<vmem>>, vector<1x1x4xf32>
    %45 = vector.shape_cast %44 : vector<1x1x4xf32> to vector<1x4xf32>
    %46 = vector.broadcast %43 : vector<32x1xf32> to vector<32x4xf32>
    %47 = vector.broadcast %45 : vector<1x4xf32> to vector<32x4xf32>
    %48 = arith.mulf %46, %47 : vector<32x4xf32>
    %49 = arith.addf %38, %48 : vector<32x4xf32>
    %c3 = arith.constant 3 : index
    %c0_17 = arith.constant 0 : index
    %c0_18 = arith.constant 0 : index
    %50 = vector.load %arg2[%c3, %c0_17, %c0_18] : memref<7x1x4xf32, #tpu.memory_space<vmem>>, vector<1x1x4xf32>
    %51 = vector.shape_cast %50 : vector<1x1x4xf32> to vector<1x4xf32>
    %52 = vector.broadcast %0 : vector<32x1xf32> to vector<32x4xf32>
    %53 = vector.broadcast %51 : vector<1x4xf32> to vector<32x4xf32>
    %54 = arith.mulf %52, %53 : vector<32x4xf32>
    %55 = arith.addf %49, %54 : vector<32x4xf32>
    %c31_i32 = arith.constant 31 : i32
    %56 = tpu.dynamic_rotate %0 by %c31_i32 dim 0 : vector<32x1xf32>, i32 -> vector<32x1xf32>
    %c15_i32 = arith.constant 15 : i32
    %57 = vector.broadcast %c15_i32 : i32 to vector<32x1xi32>
    %58 = arith.cmpi slt, %17, %57 : vector<32x1xi32>
    %cst_19 = arith.constant 0.000000e+00 : f32
    %59 = vector.broadcast %cst_19 : f32 to vector<32x1xf32>
    %60 = arith.select %58, %56, %59 : vector<32x1xi1>, vector<32x1xf32>
    %c4 = arith.constant 4 : index
    %c0_20 = arith.constant 0 : index
    %c0_21 = arith.constant 0 : index
    %61 = vector.load %arg2[%c4, %c0_20, %c0_21] : memref<7x1x4xf32, #tpu.memory_space<vmem>>, vector<1x1x4xf32>
    %62 = vector.shape_cast %61 : vector<1x1x4xf32> to vector<1x4xf32>
    %63 = vector.broadcast %60 : vector<32x1xf32> to vector<32x4xf32>
    %64 = vector.broadcast %62 : vector<1x4xf32> to vector<32x4xf32>
    %65 = arith.mulf %63, %64 : vector<32x4xf32>
    %66 = arith.addf %55, %65 : vector<32x4xf32>
    %c30_i32 = arith.constant 30 : i32
    %67 = tpu.dynamic_rotate %0 by %c30_i32 dim 0 : vector<32x1xf32>, i32 -> vector<32x1xf32>
    %c14_i32 = arith.constant 14 : i32
    %68 = vector.broadcast %c14_i32 : i32 to vector<32x1xi32>
    %69 = arith.cmpi slt, %17, %68 : vector<32x1xi32>
    %cst_22 = arith.constant 0.000000e+00 : f32
    %70 = vector.broadcast %cst_22 : f32 to vector<32x1xf32>
    %71 = arith.select %69, %67, %70 : vector<32x1xi1>, vector<32x1xf32>
    %c5 = arith.constant 5 : index
    %c0_23 = arith.constant 0 : index
    %c0_24 = arith.constant 0 : index
    %72 = vector.load %arg2[%c5, %c0_23, %c0_24] : memref<7x1x4xf32, #tpu.memory_space<vmem>>, vector<1x1x4xf32>
    %73 = vector.shape_cast %72 : vector<1x1x4xf32> to vector<1x4xf32>
    %74 = vector.broadcast %71 : vector<32x1xf32> to vector<32x4xf32>
    %75 = vector.broadcast %73 : vector<1x4xf32> to vector<32x4xf32>
    %76 = arith.mulf %74, %75 : vector<32x4xf32>
    %77 = arith.addf %66, %76 : vector<32x4xf32>
    %c29_i32 = arith.constant 29 : i32
    %78 = tpu.dynamic_rotate %0 by %c29_i32 dim 0 : vector<32x1xf32>, i32 -> vector<32x1xf32>
    %c13_i32 = arith.constant 13 : i32
    %79 = vector.broadcast %c13_i32 : i32 to vector<32x1xi32>
    %80 = arith.cmpi slt, %17, %79 : vector<32x1xi32>
    %cst_25 = arith.constant 0.000000e+00 : f32
    %81 = vector.broadcast %cst_25 : f32 to vector<32x1xf32>
    %82 = arith.select %80, %78, %81 : vector<32x1xi1>, vector<32x1xf32>
    %c6 = arith.constant 6 : index
    %c0_26 = arith.constant 0 : index
    %c0_27 = arith.constant 0 : index
    %83 = vector.load %arg2[%c6, %c0_26, %c0_27] : memref<7x1x4xf32, #tpu.memory_space<vmem>>, vector<1x1x4xf32>
    %84 = vector.shape_cast %83 : vector<1x1x4xf32> to vector<1x4xf32>
    %85 = vector.broadcast %82 : vector<32x1xf32> to vector<32x4xf32>
    %86 = vector.broadcast %84 : vector<1x4xf32> to vector<32x4xf32>
    %87 = arith.mulf %85, %86 : vector<32x4xf32>
    %88 = arith.addf %77, %87 : vector<32x4xf32>
    %c0_28 = arith.constant 0 : index
    %c0_29 = arith.constant 0 : index
    %89 = vector.load %arg3[%c0_28, %c0_29] : memref<1x4xf32, #tpu.memory_space<vmem>>, vector<1x4xf32>
    %90 = vector.broadcast %89 : vector<1x4xf32> to vector<32x4xf32>
    %91 = arith.addf %88, %90 : vector<32x4xf32>
    %cst_30 = arith.constant 0.000000e+00 : f32
    %92 = vector.broadcast %cst_30 : f32 to vector<32x4xf32>
    %93 = arith.maximumf %91, %92 : vector<32x4xf32>
    %c2_i32_31 = arith.constant 2 : i32
    %94 = tpu.dynamic_rotate %93 by %c2_i32_31 dim 0 : vector<32x4xf32>, i32 -> vector<32x4xf32>
    %c2_i32_32 = arith.constant 2 : i32
    %95 = vector.broadcast %c2_i32_32 : i32 to vector<32x1xi32>
    %96 = arith.cmpi sge, %17, %95 : vector<32x1xi32>
    %cst_33 = arith.constant 0.000000e+00 : f32
    %97 = vector.shape_cast %96 : vector<32x1xi1> to vector<32x1xi1>
    %98 = vector.broadcast %97 : vector<32x1xi1> to vector<32x4xi1>
    %99 = vector.broadcast %cst_33 : f32 to vector<32x4xf32>
    %100 = arith.select %98, %94, %99 : vector<32x4xi1>, vector<32x4xf32>
    %c1_i32_34 = arith.constant 1 : i32
    %101 = tpu.dynamic_rotate %93 by %c1_i32_34 dim 0 : vector<32x4xf32>, i32 -> vector<32x4xf32>
    %c1_i32_35 = arith.constant 1 : i32
    %102 = vector.broadcast %c1_i32_35 : i32 to vector<32x1xi32>
    %103 = arith.cmpi sge, %17, %102 : vector<32x1xi32>
    %cst_36 = arith.constant 0.000000e+00 : f32
    %104 = vector.shape_cast %103 : vector<32x1xi1> to vector<32x1xi1>
    %105 = vector.broadcast %104 : vector<32x1xi1> to vector<32x4xi1>
    %106 = vector.broadcast %cst_36 : f32 to vector<32x4xf32>
    %107 = arith.select %105, %101, %106 : vector<32x4xi1>, vector<32x4xf32>
    %c31_i32_37 = arith.constant 31 : i32
    %108 = tpu.dynamic_rotate %93 by %c31_i32_37 dim 0 : vector<32x4xf32>, i32 -> vector<32x4xf32>
    %c15_i32_38 = arith.constant 15 : i32
    %109 = vector.broadcast %c15_i32_38 : i32 to vector<32x1xi32>
    %110 = arith.cmpi slt, %17, %109 : vector<32x1xi32>
    %cst_39 = arith.constant 0.000000e+00 : f32
    %111 = vector.shape_cast %110 : vector<32x1xi1> to vector<32x1xi1>
    %112 = vector.broadcast %111 : vector<32x1xi1> to vector<32x4xi1>
    %113 = vector.broadcast %cst_39 : f32 to vector<32x4xf32>
    %114 = arith.select %112, %108, %113 : vector<32x4xi1>, vector<32x4xf32>
    %c30_i32_40 = arith.constant 30 : i32
    %115 = tpu.dynamic_rotate %93 by %c30_i32_40 dim 0 : vector<32x4xf32>, i32 -> vector<32x4xf32>
    %c14_i32_41 = arith.constant 14 : i32
    %116 = vector.broadcast %c14_i32_41 : i32 to vector<32x1xi32>
    %117 = arith.cmpi slt, %17, %116 : vector<32x1xi32>
    %cst_42 = arith.constant 0.000000e+00 : f32
    %118 = vector.shape_cast %117 : vector<32x1xi1> to vector<32x1xi1>
    %119 = vector.broadcast %118 : vector<32x1xi1> to vector<32x4xi1>
    %120 = vector.broadcast %cst_42 : f32 to vector<32x4xf32>
    %121 = arith.select %119, %115, %120 : vector<32x4xi1>, vector<32x4xf32>
    %122 = tpu.concatenate %100, %107, %93, %114, %121 in 1 : vector<32x4xf32>, vector<32x4xf32>, vector<32x4xf32>, vector<32x4xf32>, vector<32x4xf32> -> vector<32x20xf32>
    %c0_43 = arith.constant 0 : index
    %c0_44 = arith.constant 0 : index
    %123 = vector.load %arg4[%c0_43, %c0_44] : memref<20x8xbf16, #tpu.memory_space<vmem>>, vector<20x8xbf16>
    %124 = arith.truncf %122 : vector<32x20xf32> to vector<32x20xbf16>
    %cst_45 = arith.constant dense<0.000000e+00> : vector<32x8xf32>
    %125 = tpu.matmul %124, %123, %cst_45 {dimension_numbers = #tpu.dot_dimension_numbers<[1], [0], [0], [1], [0, 0, 1, 1], [], []>} : vector<32x20xbf16>, vector<20x8xbf16>, vector<32x8xf32> -> vector<32x8xf32>
    %c0_46 = arith.constant 0 : index
    %c0_47 = arith.constant 0 : index
    %126 = vector.load %arg5[%c0_46, %c0_47] : memref<1x8xf32, #tpu.memory_space<vmem>>, vector<1x8xf32>
    %127 = vector.broadcast %126 : vector<1x8xf32> to vector<32x8xf32>
    %128 = arith.addf %125, %127 : vector<32x8xf32>
    %cst_48 = arith.constant 0.000000e+00 : f32
    %129 = vector.broadcast %cst_48 : f32 to vector<32x8xf32>
    %130 = arith.maximumf %128, %129 : vector<32x8xf32>
    %c1_i32_49 = arith.constant 1 : i32
    %131 = tpu.dynamic_rotate %130 by %c1_i32_49 dim 0 : vector<32x8xf32>, i32 -> vector<32x8xf32>
    %c1_i32_50 = arith.constant 1 : i32
    %132 = vector.broadcast %c1_i32_50 : i32 to vector<32x1xi32>
    %133 = arith.cmpi sge, %17, %132 : vector<32x1xi32>
    %cst_51 = arith.constant 0.000000e+00 : f32
    %134 = vector.shape_cast %133 : vector<32x1xi1> to vector<32x1xi1>
    %135 = vector.broadcast %134 : vector<32x1xi1> to vector<32x8xi1>
    %136 = vector.broadcast %cst_51 : f32 to vector<32x8xf32>
    %137 = arith.select %135, %131, %136 : vector<32x8xi1>, vector<32x8xf32>
    %c31_i32_52 = arith.constant 31 : i32
    %138 = tpu.dynamic_rotate %130 by %c31_i32_52 dim 0 : vector<32x8xf32>, i32 -> vector<32x8xf32>
    %c15_i32_53 = arith.constant 15 : i32
    %139 = vector.broadcast %c15_i32_53 : i32 to vector<32x1xi32>
    %140 = arith.cmpi slt, %17, %139 : vector<32x1xi32>
    %cst_54 = arith.constant 0.000000e+00 : f32
    %141 = vector.shape_cast %140 : vector<32x1xi1> to vector<32x1xi1>
    %142 = vector.broadcast %141 : vector<32x1xi1> to vector<32x8xi1>
    %143 = vector.broadcast %cst_54 : f32 to vector<32x8xf32>
    %144 = arith.select %142, %138, %143 : vector<32x8xi1>, vector<32x8xf32>
    %145 = tpu.concatenate %137, %130, %144 in 1 : vector<32x8xf32>, vector<32x8xf32>, vector<32x8xf32> -> vector<32x24xf32>
    %c0_55 = arith.constant 0 : index
    %c0_56 = arith.constant 0 : index
    %146 = vector.load %arg6[%c0_55, %c0_56] : memref<24x16xbf16, #tpu.memory_space<vmem>>, vector<24x16xbf16>
    %147 = arith.truncf %145 : vector<32x24xf32> to vector<32x24xbf16>
    %cst_57 = arith.constant dense<0.000000e+00> : vector<32x16xf32>
    %148 = tpu.matmul %147, %146, %cst_57 {dimension_numbers = #tpu.dot_dimension_numbers<[1], [0], [0], [1], [0, 0, 1, 1], [], []>} : vector<32x24xbf16>, vector<24x16xbf16>, vector<32x16xf32> -> vector<32x16xf32>
    %c0_58 = arith.constant 0 : index
    %c0_59 = arith.constant 0 : index
    %149 = vector.load %arg7[%c0_58, %c0_59] : memref<1x16xf32, #tpu.memory_space<vmem>>, vector<1x16xf32>
    %150 = vector.broadcast %149 : vector<1x16xf32> to vector<32x16xf32>
    %151 = arith.addf %148, %150 : vector<32x16xf32>
    %cst_60 = arith.constant 0.000000e+00 : f32
    %152 = vector.broadcast %cst_60 : f32 to vector<32x16xf32>
    %153 = arith.maximumf %151, %152 : vector<32x16xf32>
    %154 = arith.truncf %153 : vector<32x16xf32> to vector<32x16xbf16>
    %c0_61 = arith.constant 0 : index
    %c0_62 = arith.constant 0 : index
    %155 = vector.load %arg8[%c0_61, %c0_62] : memref<1x16xf32, #tpu.memory_space<vmem>>, vector<1x16xf32>
    %156 = vector.broadcast %0 : vector<32x1xf32> to vector<32x16xf32>
    %157 = vector.broadcast %155 : vector<1x16xf32> to vector<32x16xf32>
    %158 = arith.mulf %156, %157 : vector<32x16xf32>
    %c0_63 = arith.constant 0 : index
    %c0_64 = arith.constant 0 : index
    %159 = vector.load %arg9[%c0_63, %c0_64] : memref<1x16xf32, #tpu.memory_space<vmem>>, vector<1x16xf32>
    %160 = vector.broadcast %159 : vector<1x16xf32> to vector<32x16xf32>
    %161 = arith.addf %158, %160 : vector<32x16xf32>
    %cst_65 = arith.constant 0.000000e+00 : f32
    %162 = vector.broadcast %cst_65 : f32 to vector<32x32xf32>
    %c0_i32_66 = arith.constant 0 : i32
    %c2_i32_67 = arith.constant 2 : i32
    %163 = arith.addi %c0_i32_66, %c2_i32_67 : i32
    %c1_i32_68 = arith.constant 1 : i32
    %164:2 = scf.for %arg29 = %c0_i32_66 to %163 step %c1_i32_68 iter_args(%arg30 = %161, %arg31 = %162) -> (vector<32x16xf32>, vector<32x32xf32>)  : i32 {
      %c2_i32_105 = arith.constant 2 : i32
      %219 = arith.muli %arg29, %c2_i32_105 : i32
      %c0_i32_106 = arith.constant 0 : i32
      %220 = arith.addi %219, %c0_i32_106 : i32
      %c1_i32_107 = arith.constant 1 : i32
      %221 = tpu.dynamic_rotate %arg30 by %c1_i32_107 dim 0 : vector<32x16xf32>, i32 -> vector<32x16xf32>
      %c1_i32_108 = arith.constant 1 : i32
      %222 = vector.broadcast %c1_i32_108 : i32 to vector<32x1xi32>
      %223 = arith.cmpi sge, %17, %222 : vector<32x1xi32>
      %cst_109 = arith.constant 0.000000e+00 : f32
      %224 = vector.shape_cast %223 : vector<32x1xi1> to vector<32x1xi1>
      %225 = vector.broadcast %224 : vector<32x1xi1> to vector<32x16xi1>
      %226 = vector.broadcast %cst_109 : f32 to vector<32x16xf32>
      %227 = arith.select %225, %221, %226 : vector<32x16xi1>, vector<32x16xf32>
      %228 = tpu.concatenate %227, %arg30 in 1 : vector<32x16xf32>, vector<32x16xf32> -> vector<32x32xf32>
      %229 = arith.truncf %228 : vector<32x32xf32> to vector<32x32xbf16>
      %230 = arith.index_cast %220 : i32 to index
      %c0_110 = arith.constant 0 : index
      %c0_111 = arith.constant 0 : index
      %231 = vector.load %arg10[%230, %c0_110, %c0_111] : memref<4x32x16xbf16, #tpu.memory_space<vmem>>, vector<1x32x16xbf16>
      %232 = vector.shape_cast %231 : vector<1x32x16xbf16> to vector<32x16xbf16>
      %cst_112 = arith.constant dense<0.000000e+00> : vector<32x16xf32>
      %233 = tpu.matmul %229, %232, %cst_112 {dimension_numbers = #tpu.dot_dimension_numbers<[1], [0], [0], [1], [0, 0, 1, 1], [], []>} : vector<32x32xbf16>, vector<32x16xbf16>, vector<32x16xf32> -> vector<32x16xf32>
      %234 = arith.index_cast %220 : i32 to index
      %c0_113 = arith.constant 0 : index
      %c0_114 = arith.constant 0 : index
      %235 = vector.load %arg11[%234, %c0_113, %c0_114] : memref<4x1x16xf32, #tpu.memory_space<vmem>>, vector<1x1x16xf32>
      %236 = vector.shape_cast %235 : vector<1x1x16xf32> to vector<1x16xf32>
      %237 = vector.broadcast %236 : vector<1x16xf32> to vector<32x16xf32>
      %238 = arith.addf %233, %237 : vector<32x16xf32>
      %239 = arith.index_cast %220 : i32 to index
      %c0_115 = arith.constant 0 : index
      %c0_116 = arith.constant 0 : index
      %240 = vector.load %arg12[%239, %c0_115, %c0_116] : memref<4x16x16xbf16, #tpu.memory_space<vmem>>, vector<1x16x16xbf16>
      %241 = vector.shape_cast %240 : vector<1x16x16xbf16> to vector<16x16xbf16>
      %cst_117 = arith.constant dense<0.000000e+00> : vector<32x16xf32>
      %242 = tpu.matmul %154, %241, %cst_117 {dimension_numbers = #tpu.dot_dimension_numbers<[1], [0], [0], [1], [0, 0, 1, 1], [], []>} : vector<32x16xbf16>, vector<16x16xbf16>, vector<32x16xf32> -> vector<32x16xf32>
      %243 = arith.addf %238, %242 : vector<32x16xf32>
      %244 = arith.index_cast %220 : i32 to index
      %c0_118 = arith.constant 0 : index
      %c0_119 = arith.constant 0 : index
      %245 = vector.load %arg13[%244, %c0_118, %c0_119] : memref<4x1x16xf32, #tpu.memory_space<vmem>>, vector<1x1x16xf32>
      %246 = vector.shape_cast %245 : vector<1x1x16xf32> to vector<1x16xf32>
      %247 = vector.broadcast %246 : vector<1x16xf32> to vector<32x16xf32>
      %248 = arith.addf %243, %247 : vector<32x16xf32>
      %249 = arith.index_cast %220 : i32 to index
      %c0_120 = arith.constant 0 : index
      %c0_121 = arith.constant 0 : index
      %250 = vector.load %arg14[%249, %c0_120, %c0_121] : memref<4x16x32xbf16, #tpu.memory_space<vmem>>, vector<1x16x32xbf16>
      %251 = vector.shape_cast %250 : vector<1x16x32xbf16> to vector<16x32xbf16>
      %252 = arith.truncf %248 : vector<32x16xf32> to vector<32x16xbf16>
      %cst_122 = arith.constant dense<0.000000e+00> : vector<32x32xf32>
      %253 = tpu.matmul %252, %251, %cst_122 {dimension_numbers = #tpu.dot_dimension_numbers<[1], [0], [0], [1], [0, 0, 1, 1], [], []>} : vector<32x16xbf16>, vector<16x32xbf16>, vector<32x32xf32> -> vector<32x32xf32>
      %254 = arith.index_cast %220 : i32 to index
      %c0_123 = arith.constant 0 : index
      %c0_124 = arith.constant 0 : index
      %255 = vector.load %arg15[%254, %c0_123, %c0_124] : memref<4x1x32xf32, #tpu.memory_space<vmem>>, vector<1x1x32xf32>
      %256 = vector.shape_cast %255 : vector<1x1x32xf32> to vector<1x32xf32>
      %257 = vector.broadcast %256 : vector<1x32xf32> to vector<32x32xf32>
      %258 = arith.addf %253, %257 : vector<32x32xf32>
      %259 = vector.extract_strided_slice %258 {offsets = [0, 0], sizes = [32, 16], strides = [1, 1]} : vector<32x32xf32> to vector<32x16xf32>
      %260 = math.tanh %259 : vector<32x16xf32>
      %261 = vector.extract_strided_slice %258 {offsets = [0, 16], sizes = [32, 16], strides = [1, 1]} : vector<32x32xf32> to vector<32x16xf32>
      %262 = arith.negf %261 : vector<32x16xf32>
      %263 = math.exp %262 : vector<32x16xf32>
      %cst_125 = arith.constant 1.000000e+00 : f32
      %264 = vector.broadcast %cst_125 : f32 to vector<32x16xf32>
      %265 = arith.addf %264, %263 : vector<32x16xf32>
      %266 = arith.divf %264, %265 : vector<32x16xf32>
      %267 = arith.mulf %260, %266 : vector<32x16xf32>
      %268 = arith.index_cast %220 : i32 to index
      %c0_126 = arith.constant 0 : index
      %c0_127 = arith.constant 0 : index
      %269 = vector.load %arg16[%268, %c0_126, %c0_127] : memref<4x16x48xbf16, #tpu.memory_space<vmem>>, vector<1x16x48xbf16>
      %270 = vector.shape_cast %269 : vector<1x16x48xbf16> to vector<16x48xbf16>
      %271 = arith.truncf %267 : vector<32x16xf32> to vector<32x16xbf16>
      %cst_128 = arith.constant dense<0.000000e+00> : vector<32x48xf32>
      %272 = tpu.matmul %271, %270, %cst_128 {dimension_numbers = #tpu.dot_dimension_numbers<[1], [0], [0], [1], [0, 0, 1, 1], [], []>} : vector<32x16xbf16>, vector<16x48xbf16>, vector<32x48xf32> -> vector<32x48xf32>
      %273 = arith.index_cast %220 : i32 to index
      %c0_129 = arith.constant 0 : index
      %c0_130 = arith.constant 0 : index
      %274 = vector.load %arg17[%273, %c0_129, %c0_130] : memref<4x1x48xf32, #tpu.memory_space<vmem>>, vector<1x1x48xf32>
      %275 = vector.shape_cast %274 : vector<1x1x48xf32> to vector<1x48xf32>
      %276 = vector.broadcast %275 : vector<1x48xf32> to vector<32x48xf32>
      %277 = arith.addf %272, %276 : vector<32x48xf32>
      %278 = vector.extract_strided_slice %277 {offsets = [0, 0], sizes = [32, 32], strides = [1, 1]} : vector<32x48xf32> to vector<32x32xf32>
      %279 = arith.addf %arg31, %278 : vector<32x32xf32>
      %280 = vector.extract_strided_slice %277 {offsets = [0, 32], sizes = [32, 16], strides = [1, 1]} : vector<32x48xf32> to vector<32x16xf32>
      %281 = arith.addf %arg30, %280 : vector<32x16xf32>
      %c2_i32_131 = arith.constant 2 : i32
      %282 = arith.muli %arg29, %c2_i32_131 : i32
      %c1_i32_132 = arith.constant 1 : i32
      %283 = arith.addi %282, %c1_i32_132 : i32
      %c2_i32_133 = arith.constant 2 : i32
      %284 = tpu.dynamic_rotate %281 by %c2_i32_133 dim 0 : vector<32x16xf32>, i32 -> vector<32x16xf32>
      %c2_i32_134 = arith.constant 2 : i32
      %285 = vector.broadcast %c2_i32_134 : i32 to vector<32x1xi32>
      %286 = arith.cmpi sge, %17, %285 : vector<32x1xi32>
      %cst_135 = arith.constant 0.000000e+00 : f32
      %287 = vector.shape_cast %286 : vector<32x1xi1> to vector<32x1xi1>
      %288 = vector.broadcast %287 : vector<32x1xi1> to vector<32x16xi1>
      %289 = vector.broadcast %cst_135 : f32 to vector<32x16xf32>
      %290 = arith.select %288, %284, %289 : vector<32x16xi1>, vector<32x16xf32>
      %291 = tpu.concatenate %290, %281 in 1 : vector<32x16xf32>, vector<32x16xf32> -> vector<32x32xf32>
      %292 = arith.truncf %291 : vector<32x32xf32> to vector<32x32xbf16>
      %293 = arith.index_cast %283 : i32 to index
      %c0_136 = arith.constant 0 : index
      %c0_137 = arith.constant 0 : index
      %294 = vector.load %arg10[%293, %c0_136, %c0_137] : memref<4x32x16xbf16, #tpu.memory_space<vmem>>, vector<1x32x16xbf16>
      %295 = vector.shape_cast %294 : vector<1x32x16xbf16> to vector<32x16xbf16>
      %cst_138 = arith.constant dense<0.000000e+00> : vector<32x16xf32>
      %296 = tpu.matmul %292, %295, %cst_138 {dimension_numbers = #tpu.dot_dimension_numbers<[1], [0], [0], [1], [0, 0, 1, 1], [], []>} : vector<32x32xbf16>, vector<32x16xbf16>, vector<32x16xf32> -> vector<32x16xf32>
      %297 = arith.index_cast %283 : i32 to index
      %c0_139 = arith.constant 0 : index
      %c0_140 = arith.constant 0 : index
      %298 = vector.load %arg11[%297, %c0_139, %c0_140] : memref<4x1x16xf32, #tpu.memory_space<vmem>>, vector<1x1x16xf32>
      %299 = vector.shape_cast %298 : vector<1x1x16xf32> to vector<1x16xf32>
      %300 = vector.broadcast %299 : vector<1x16xf32> to vector<32x16xf32>
      %301 = arith.addf %296, %300 : vector<32x16xf32>
      %302 = arith.index_cast %283 : i32 to index
      %c0_141 = arith.constant 0 : index
      %c0_142 = arith.constant 0 : index
      %303 = vector.load %arg12[%302, %c0_141, %c0_142] : memref<4x16x16xbf16, #tpu.memory_space<vmem>>, vector<1x16x16xbf16>
      %304 = vector.shape_cast %303 : vector<1x16x16xbf16> to vector<16x16xbf16>
      %cst_143 = arith.constant dense<0.000000e+00> : vector<32x16xf32>
      %305 = tpu.matmul %154, %304, %cst_143 {dimension_numbers = #tpu.dot_dimension_numbers<[1], [0], [0], [1], [0, 0, 1, 1], [], []>} : vector<32x16xbf16>, vector<16x16xbf16>, vector<32x16xf32> -> vector<32x16xf32>
      %306 = arith.addf %301, %305 : vector<32x16xf32>
      %307 = arith.index_cast %283 : i32 to index
      %c0_144 = arith.constant 0 : index
      %c0_145 = arith.constant 0 : index
      %308 = vector.load %arg13[%307, %c0_144, %c0_145] : memref<4x1x16xf32, #tpu.memory_space<vmem>>, vector<1x1x16xf32>
      %309 = vector.shape_cast %308 : vector<1x1x16xf32> to vector<1x16xf32>
      %310 = vector.broadcast %309 : vector<1x16xf32> to vector<32x16xf32>
      %311 = arith.addf %306, %310 : vector<32x16xf32>
      %312 = arith.index_cast %283 : i32 to index
      %c0_146 = arith.constant 0 : index
      %c0_147 = arith.constant 0 : index
      %313 = vector.load %arg14[%312, %c0_146, %c0_147] : memref<4x16x32xbf16, #tpu.memory_space<vmem>>, vector<1x16x32xbf16>
      %314 = vector.shape_cast %313 : vector<1x16x32xbf16> to vector<16x32xbf16>
      %315 = arith.truncf %311 : vector<32x16xf32> to vector<32x16xbf16>
      %cst_148 = arith.constant dense<0.000000e+00> : vector<32x32xf32>
      %316 = tpu.matmul %315, %314, %cst_148 {dimension_numbers = #tpu.dot_dimension_numbers<[1], [0], [0], [1], [0, 0, 1, 1], [], []>} : vector<32x16xbf16>, vector<16x32xbf16>, vector<32x32xf32> -> vector<32x32xf32>
      %317 = arith.index_cast %283 : i32 to index
      %c0_149 = arith.constant 0 : index
      %c0_150 = arith.constant 0 : index
      %318 = vector.load %arg15[%317, %c0_149, %c0_150] : memref<4x1x32xf32, #tpu.memory_space<vmem>>, vector<1x1x32xf32>
      %319 = vector.shape_cast %318 : vector<1x1x32xf32> to vector<1x32xf32>
      %320 = vector.broadcast %319 : vector<1x32xf32> to vector<32x32xf32>
      %321 = arith.addf %316, %320 : vector<32x32xf32>
      %322 = vector.extract_strided_slice %321 {offsets = [0, 0], sizes = [32, 16], strides = [1, 1]} : vector<32x32xf32> to vector<32x16xf32>
      %323 = math.tanh %322 : vector<32x16xf32>
      %324 = vector.extract_strided_slice %321 {offsets = [0, 16], sizes = [32, 16], strides = [1, 1]} : vector<32x32xf32> to vector<32x16xf32>
      %325 = arith.negf %324 : vector<32x16xf32>
      %326 = math.exp %325 : vector<32x16xf32>
      %cst_151 = arith.constant 1.000000e+00 : f32
      %327 = vector.broadcast %cst_151 : f32 to vector<32x16xf32>
      %328 = arith.addf %327, %326 : vector<32x16xf32>
      %329 = arith.divf %327, %328 : vector<32x16xf32>
      %330 = arith.mulf %323, %329 : vector<32x16xf32>
      %331 = arith.index_cast %283 : i32 to index
      %c0_152 = arith.constant 0 : index
      %c0_153 = arith.constant 0 : index
      %332 = vector.load %arg16[%331, %c0_152, %c0_153] : memref<4x16x48xbf16, #tpu.memory_space<vmem>>, vector<1x16x48xbf16>
      %333 = vector.shape_cast %332 : vector<1x16x48xbf16> to vector<16x48xbf16>
      %334 = arith.truncf %330 : vector<32x16xf32> to vector<32x16xbf16>
      %cst_154 = arith.constant dense<0.000000e+00> : vector<32x48xf32>
      %335 = tpu.matmul %334, %333, %cst_154 {dimension_numbers = #tpu.dot_dimension_numbers<[1], [0], [0], [1], [0, 0, 1, 1], [], []>} : vector<32x16xbf16>, vector<16x48xbf16>, vector<32x48xf32> -> vector<32x48xf32>
      %336 = arith.index_cast %283 : i32 to index
      %c0_155 = arith.constant 0 : index
      %c0_156 = arith.constant 0 : index
      %337 = vector.load %arg17[%336, %c0_155, %c0_156] : memref<4x1x48xf32, #tpu.memory_space<vmem>>, vector<1x1x48xf32>
      %338 = vector.shape_cast %337 : vector<1x1x48xf32> to vector<1x48xf32>
      %339 = vector.broadcast %338 : vector<1x48xf32> to vector<32x48xf32>
      %340 = arith.addf %335, %339 : vector<32x48xf32>
      %341 = vector.extract_strided_slice %340 {offsets = [0, 0], sizes = [32, 32], strides = [1, 1]} : vector<32x48xf32> to vector<32x32xf32>
      %342 = arith.addf %279, %341 : vector<32x32xf32>
      %343 = vector.extract_strided_slice %340 {offsets = [0, 32], sizes = [32, 16], strides = [1, 1]} : vector<32x48xf32> to vector<32x16xf32>
      %344 = arith.addf %281, %343 : vector<32x16xf32>
      scf.yield %344, %342 : vector<32x16xf32>, vector<32x32xf32>
    }
    %c2_i32_69 = arith.constant 2 : i32
    %cst_70 = arith.constant 0.000000e+00 : f32
    %165 = vector.broadcast %cst_70 : f32 to vector<32x32xf32>
    %166 = arith.maximumf %164#1, %165 : vector<32x32xf32>
    %c0_71 = arith.constant 0 : index
    %c0_72 = arith.constant 0 : index
    %167 = vector.load %arg18[%c0_71, %c0_72] : memref<32x32xbf16, #tpu.memory_space<vmem>>, vector<32x32xbf16>
    %168 = arith.truncf %166 : vector<32x32xf32> to vector<32x32xbf16>
    %cst_73 = arith.constant dense<0.000000e+00> : vector<32x32xf32>
    %169 = tpu.matmul %168, %167, %cst_73 {dimension_numbers = #tpu.dot_dimension_numbers<[1], [0], [0], [1], [0, 0, 1, 1], [], []>} : vector<32x32xbf16>, vector<32x32xbf16>, vector<32x32xf32> -> vector<32x32xf32>
    %c0_74 = arith.constant 0 : index
    %c0_75 = arith.constant 0 : index
    %170 = vector.load %arg19[%c0_74, %c0_75] : memref<1x32xf32, #tpu.memory_space<vmem>>, vector<1x32xf32>
    %171 = vector.broadcast %170 : vector<1x32xf32> to vector<32x32xf32>
    %172 = arith.addf %169, %171 : vector<32x32xf32>
    %cst_76 = arith.constant 0.000000e+00 : f32
    %173 = vector.broadcast %cst_76 : f32 to vector<32x32xf32>
    %174 = arith.maximumf %172, %173 : vector<32x32xf32>
    %c0_77 = arith.constant 0 : index
    %c0_78 = arith.constant 0 : index
    %175 = vector.load %arg20[%c0_77, %c0_78] : memref<32x32xbf16, #tpu.memory_space<vmem>>, vector<32x32xbf16>
    %176 = arith.truncf %174 : vector<32x32xf32> to vector<32x32xbf16>
    %cst_79 = arith.constant dense<0.000000e+00> : vector<32x32xf32>
    %177 = tpu.matmul %176, %175, %cst_79 {dimension_numbers = #tpu.dot_dimension_numbers<[1], [0], [0], [1], [0, 0, 1, 1], [], []>} : vector<32x32xbf16>, vector<32x32xbf16>, vector<32x32xf32> -> vector<32x32xf32>
    %c0_80 = arith.constant 0 : index
    %c0_81 = arith.constant 0 : index
    %178 = vector.load %arg21[%c0_80, %c0_81] : memref<1x32xf32, #tpu.memory_space<vmem>>, vector<1x32xf32>
    %179 = vector.broadcast %178 : vector<1x32xf32> to vector<32x32xf32>
    %180 = arith.addf %177, %179 : vector<32x32xf32>
    %cst_82 = arith.constant 0.000000e+00 : f32
    %181 = vector.broadcast %cst_82 : f32 to vector<32x32xf32>
    %182 = arith.maximumf %180, %181 : vector<32x32xf32>
    %c0_83 = arith.constant 0 : index
    %c0_84 = arith.constant 0 : index
    %183 = vector.load %arg22[%c0_83, %c0_84] : memref<32x17xbf16, #tpu.memory_space<vmem>>, vector<32x17xbf16>
    %184 = arith.truncf %182 : vector<32x32xf32> to vector<32x32xbf16>
    %cst_85 = arith.constant dense<0.000000e+00> : vector<32x17xf32>
    %185 = tpu.matmul %184, %183, %cst_85 {dimension_numbers = #tpu.dot_dimension_numbers<[1], [0], [0], [1], [0, 0, 1, 1], [], []>} : vector<32x32xbf16>, vector<32x17xbf16>, vector<32x17xf32> -> vector<32x17xf32>
    %c0_86 = arith.constant 0 : index
    %c0_87 = arith.constant 0 : index
    %186 = vector.load %arg23[%c0_86, %c0_87] : memref<1x17xf32, #tpu.memory_space<vmem>>, vector<1x17xf32>
    %187 = vector.broadcast %186 : vector<1x17xf32> to vector<32x17xf32>
    %188 = arith.addf %185, %187 : vector<32x17xf32>
    %189 = vector.shape_cast %188 : vector<32x17xf32> to vector<2x16x17xf32>
    %c0_88 = arith.constant 0 : index
    %c0_89 = arith.constant 0 : index
    %c0_90 = arith.constant 0 : index
    %190 = vector.load %arg25[%c0_88, %c0_89, %c0_90] : memref<1x1x17xf32, #tpu.memory_space<vmem>>, vector<1x1x17xf32>
    %191 = vector.broadcast %190 : vector<1x1x17xf32> to vector<2x16x17xf32>
    %192 = arith.mulf %189, %191 : vector<2x16x17xf32>
    %cst_91 = arith.constant dense<0.000000e+00> : vector<2x16xf32>
    %193 = vector.multi_reduction <add>, %192, %cst_91 [2] : vector<2x16x17xf32> to vector<2x16xf32>
    %c0_92 = arith.constant 0 : index
    %c0_93 = arith.constant 0 : index
    %194 = vector.load %arg27[%c0_92, %c0_93] : memref<2x16xf32, #tpu.memory_space<vmem>>, vector<2x16xf32>
    tpu.vector_store %arg27[%c0_92, %c0_93], %193 {strides = array<i32>} : memref<2x16xf32, #tpu.memory_space<vmem>>, vector<2x16xf32>,
    %cst_94 = arith.constant 0.000000e+00 : f32
    %195 = vector.broadcast %cst_94 : f32 to vector<2x16x17xf32>
    %196 = arith.maximumf %189, %195 : vector<2x16x17xf32>
    %c0_95 = arith.constant 0 : index
    %c0_96 = arith.constant 0 : index
    %c0_97 = arith.constant 0 : index
    %197 = vector.load %arg24[%c0_95, %c0_96, %c0_97] : memref<1x1x17xf32, #tpu.memory_space<vmem>>, vector<1x1x17xf32>
    %198 = vector.broadcast %197 : vector<1x1x17xf32> to vector<2x16x17xf32>
    %199 = arith.mulf %196, %198 : vector<2x16x17xf32>
    %cst_98 = arith.constant dense<0.000000e+00> : vector<2x16xf32>
    %200 = vector.multi_reduction <add>, %199, %cst_98 [2] : vector<2x16x17xf32> to vector<2x16xf32>
    %c0_99 = arith.constant 0 : index
    %c0_100 = arith.constant 0 : index
    %201 = vector.load %arg26[%c0_99, %c0_100] : memref<1x1xf32, #tpu.memory_space<vmem>>, vector<1x1xf32>
    %202 = vector.broadcast %201 : vector<1x1xf32> to vector<2x16xf32>
    %203 = arith.addf %200, %202 : vector<2x16xf32>
    %cst_101 = arith.constant 0.000000e+00 : f32
    %204 = vector.broadcast %cst_101 : f32 to vector<2x16xf32>
    %205 = arith.maximumf %203, %204 : vector<2x16xf32>
    %206 = vector.broadcast %cst_101 : f32 to vector<2x16xf32>
    %207 = arith.subf %203, %206 : vector<2x16xf32>
    %208 = arith.cmpf one, %207, %207 : vector<2x16xf32>
    %209 = vector.broadcast %cst_101 : f32 to vector<2x16xf32>
    %210 = arith.addf %203, %209 : vector<2x16xf32>
    %211 = math.absf %207 : vector<2x16xf32>
    %cst_102 = arith.constant 0.000000e+00 : f32
    %212 = vector.broadcast %cst_102 : f32 to vector<2x16xf32>
    %213 = arith.subf %212, %211 : vector<2x16xf32>
    %214 = math.exp %213 : vector<2x16xf32>
    %215 = math.log1p %214 : vector<2x16xf32>
    %216 = arith.addf %205, %215 : vector<2x16xf32>
    %217 = arith.select %208, %210, %216 : vector<2x16xi1>, vector<2x16xf32>
    %c0_103 = arith.constant 0 : index
    %c0_104 = arith.constant 0 : index
    %218 = vector.load %arg28[%c0_103, %c0_104] : memref<2x16xf32, #tpu.memory_space<vmem>>, vector<2x16xf32>
    tpu.vector_store %arg28[%c0_103, %c0_104], %217 {strides = array<i32>} : memref<2x16xf32, #tpu.memory_space<vmem>>, vector<2x16xf32>,
    return
  }
  func.func @transform_0(%arg0: i32) -> (i32, i32) {
    %c0_i32 = arith.constant 0 : i32
    %c0_i32_0 = arith.constant 0 : i32
    return %arg0, %c0_i32 : i32, i32
  }
  func.func @transform_1(%arg0: i32) -> (i32, i32, i32) {
    %c0_i32 = arith.constant 0 : i32
    %c0_i32_0 = arith.constant 0 : i32
    %c0_i32_1 = arith.constant 0 : i32
    %c0_i32_2 = arith.constant 0 : i32
    return %c0_i32, %c0_i32_0, %c0_i32_1 : i32, i32, i32
  }
  func.func @transform_2(%arg0: i32) -> (i32, i32) {
    %c0_i32 = arith.constant 0 : i32
    %c0_i32_0 = arith.constant 0 : i32
    %c0_i32_1 = arith.constant 0 : i32
    return %c0_i32, %c0_i32_0 : i32, i32
  }
  func.func @transform_3(%arg0: i32) -> (i32, i32) {
    %c0_i32 = arith.constant 0 : i32
    %c0_i32_0 = arith.constant 0 : i32
    %c0_i32_1 = arith.constant 0 : i32
    return %c0_i32, %c0_i32_0 : i32, i32
  }
  func.func @transform_4(%arg0: i32) -> (i32, i32) {
    %c0_i32 = arith.constant 0 : i32
    %c0_i32_0 = arith.constant 0 : i32
    %c0_i32_1 = arith.constant 0 : i32
    return %c0_i32, %c0_i32_0 : i32, i32
  }
  func.func @transform_5(%arg0: i32) -> (i32, i32) {
    %c0_i32 = arith.constant 0 : i32
    %c0_i32_0 = arith.constant 0 : i32
    %c0_i32_1 = arith.constant 0 : i32
    return %c0_i32, %c0_i32_0 : i32, i32
  }
  func.func @transform_6(%arg0: i32) -> (i32, i32) {
    %c0_i32 = arith.constant 0 : i32
    %c0_i32_0 = arith.constant 0 : i32
    %c0_i32_1 = arith.constant 0 : i32
    return %c0_i32, %c0_i32_0 : i32, i32
  }
  func.func @transform_7(%arg0: i32) -> (i32, i32) {
    %c0_i32 = arith.constant 0 : i32
    %c0_i32_0 = arith.constant 0 : i32
    %c0_i32_1 = arith.constant 0 : i32
    return %c0_i32, %c0_i32_0 : i32, i32
  }
  func.func @transform_8(%arg0: i32) -> (i32, i32) {
    %c0_i32 = arith.constant 0 : i32
    %c0_i32_0 = arith.constant 0 : i32
    %c0_i32_1 = arith.constant 0 : i32
    return %c0_i32, %c0_i32_0 : i32, i32
  }
  func.func @transform_9(%arg0: i32) -> (i32, i32, i32) {
    %c0_i32 = arith.constant 0 : i32
    %c0_i32_0 = arith.constant 0 : i32
    %c0_i32_1 = arith.constant 0 : i32
    %c0_i32_2 = arith.constant 0 : i32
    return %c0_i32, %c0_i32_0, %c0_i32_1 : i32, i32, i32
  }
  func.func @transform_10(%arg0: i32) -> (i32, i32, i32) {
    %c0_i32 = arith.constant 0 : i32
    %c0_i32_0 = arith.constant 0 : i32
    %c0_i32_1 = arith.constant 0 : i32
    %c0_i32_2 = arith.constant 0 : i32
    return %c0_i32, %c0_i32_0, %c0_i32_1 : i32, i32, i32
  }
  func.func @transform_11(%arg0: i32) -> (i32, i32, i32) {
    %c0_i32 = arith.constant 0 : i32
    %c0_i32_0 = arith.constant 0 : i32
    %c0_i32_1 = arith.constant 0 : i32
    %c0_i32_2 = arith.constant 0 : i32
    return %c0_i32, %c0_i32_0, %c0_i32_1 : i32, i32, i32
  }
  func.func @transform_12(%arg0: i32) -> (i32, i32, i32) {
    %c0_i32 = arith.constant 0 : i32
    %c0_i32_0 = arith.constant 0 : i32
    %c0_i32_1 = arith.constant 0 : i32
    %c0_i32_2 = arith.constant 0 : i32
    return %c0_i32, %c0_i32_0, %c0_i32_1 : i32, i32, i32
  }
  func.func @transform_13(%arg0: i32) -> (i32, i32, i32) {
    %c0_i32 = arith.constant 0 : i32
    %c0_i32_0 = arith.constant 0 : i32
    %c0_i32_1 = arith.constant 0 : i32
    %c0_i32_2 = arith.constant 0 : i32
    return %c0_i32, %c0_i32_0, %c0_i32_1 : i32, i32, i32
  }
  func.func @transform_14(%arg0: i32) -> (i32, i32, i32) {
    %c0_i32 = arith.constant 0 : i32
    %c0_i32_0 = arith.constant 0 : i32
    %c0_i32_1 = arith.constant 0 : i32
    %c0_i32_2 = arith.constant 0 : i32
    return %c0_i32, %c0_i32_0, %c0_i32_1 : i32, i32, i32
  }
  func.func @transform_15(%arg0: i32) -> (i32, i32, i32) {
    %c0_i32 = arith.constant 0 : i32
    %c0_i32_0 = arith.constant 0 : i32
    %c0_i32_1 = arith.constant 0 : i32
    %c0_i32_2 = arith.constant 0 : i32
    return %c0_i32, %c0_i32_0, %c0_i32_1 : i32, i32, i32
  }
  func.func @transform_16(%arg0: i32) -> (i32, i32, i32) {
    %c0_i32 = arith.constant 0 : i32
    %c0_i32_0 = arith.constant 0 : i32
    %c0_i32_1 = arith.constant 0 : i32
    %c0_i32_2 = arith.constant 0 : i32
    return %c0_i32, %c0_i32_0, %c0_i32_1 : i32, i32, i32
  }
  func.func @transform_17(%arg0: i32) -> (i32, i32) {
    %c0_i32 = arith.constant 0 : i32
    %c0_i32_0 = arith.constant 0 : i32
    %c0_i32_1 = arith.constant 0 : i32
    return %c0_i32, %c0_i32_0 : i32, i32
  }
  func.func @transform_18(%arg0: i32) -> (i32, i32) {
    %c0_i32 = arith.constant 0 : i32
    %c0_i32_0 = arith.constant 0 : i32
    %c0_i32_1 = arith.constant 0 : i32
    return %c0_i32, %c0_i32_0 : i32, i32
  }
  func.func @transform_19(%arg0: i32) -> (i32, i32) {
    %c0_i32 = arith.constant 0 : i32
    %c0_i32_0 = arith.constant 0 : i32
    %c0_i32_1 = arith.constant 0 : i32
    return %c0_i32, %c0_i32_0 : i32, i32
  }
  func.func @transform_20(%arg0: i32) -> (i32, i32) {
    %c0_i32 = arith.constant 0 : i32
    %c0_i32_0 = arith.constant 0 : i32
    %c0_i32_1 = arith.constant 0 : i32
    return %c0_i32, %c0_i32_0 : i32, i32
  }
  func.func @transform_21(%arg0: i32) -> (i32, i32) {
    %c0_i32 = arith.constant 0 : i32
    %c0_i32_0 = arith.constant 0 : i32
    %c0_i32_1 = arith.constant 0 : i32
    return %c0_i32, %c0_i32_0 : i32, i32
  }
  func.func @transform_22(%arg0: i32) -> (i32, i32) {
    %c0_i32 = arith.constant 0 : i32
    %c0_i32_0 = arith.constant 0 : i32
    %c0_i32_1 = arith.constant 0 : i32
    return %c0_i32, %c0_i32_0 : i32, i32
  }
  func.func @transform_23(%arg0: i32) -> (i32, i32, i32) {
    %c0_i32 = arith.constant 0 : i32
    %c0_i32_0 = arith.constant 0 : i32
    %c0_i32_1 = arith.constant 0 : i32
    %c0_i32_2 = arith.constant 0 : i32
    return %c0_i32, %c0_i32_0, %c0_i32_1 : i32, i32, i32
  }
  func.func @transform_24(%arg0: i32) -> (i32, i32, i32) {
    %c0_i32 = arith.constant 0 : i32
    %c0_i32_0 = arith.constant 0 : i32
    %c0_i32_1 = arith.constant 0 : i32
    %c0_i32_2 = arith.constant 0 : i32
    return %c0_i32, %c0_i32_0, %c0_i32_1 : i32, i32, i32
  }
  func.func @transform_25(%arg0: i32) -> (i32, i32) {
    %c0_i32 = arith.constant 0 : i32
    %c0_i32_0 = arith.constant 0 : i32
    %c0_i32_1 = arith.constant 0 : i32
    return %c0_i32, %c0_i32_0 : i32, i32
  }
  func.func @transform_26(%arg0: i32) -> (i32, i32) {
    %c0_i32 = arith.constant 0 : i32
    %c0_i32_0 = arith.constant 0 : i32
    return %arg0, %c0_i32 : i32, i32
  }
  func.func @transform_27(%arg0: i32) -> (i32, i32) {
    %c0_i32 = arith.constant 0 : i32
    %c0_i32_0 = arith.constant 0 : i32
    return %arg0, %c0_i32 : i32, i32
  }
}

module attributes {stable_mosaic.version = 11 : i64} {
  func.func @kernel(%arg0: i32, %arg1: memref<32x1xf32, #tpu.memory_space<vmem>>, %arg2: memref<7x1x4xf32, #tpu.memory_space<vmem>>, %arg3: memref<1x4xf32, #tpu.memory_space<vmem>>, %arg4: memref<20x8xbf16, #tpu.memory_space<vmem>>, %arg5: memref<1x8xf32, #tpu.memory_space<vmem>>, %arg6: memref<24x16xbf16, #tpu.memory_space<vmem>>, %arg7: memref<1x16xf32, #tpu.memory_space<vmem>>, %arg8: memref<1x16xf32, #tpu.memory_space<vmem>>, %arg9: memref<1x16xf32, #tpu.memory_space<vmem>>, %arg10: memref<4x32x16xbf16, #tpu.memory_space<vmem>>, %arg11: memref<4x1x16xf32, #tpu.memory_space<vmem>>, %arg12: memref<4x16x16xbf16, #tpu.memory_space<vmem>>, %arg13: memref<4x1x16xf32, #tpu.memory_space<vmem>>, %arg14: memref<4x16x32xbf16, #tpu.memory_space<vmem>>, %arg15: memref<4x1x32xf32, #tpu.memory_space<vmem>>, %arg16: memref<4x16x48xbf16, #tpu.memory_space<vmem>>, %arg17: memref<4x1x48xf32, #tpu.memory_space<vmem>>, %arg18: memref<32x32xbf16, #tpu.memory_space<vmem>>, %arg19: memref<1x32xf32, #tpu.memory_space<vmem>>, %arg20: memref<32x32xbf16, #tpu.memory_space<vmem>>, %arg21: memref<1x32xf32, #tpu.memory_space<vmem>>, %arg22: memref<32x17xbf16, #tpu.memory_space<vmem>>, %arg23: memref<1x17xf32, #tpu.memory_space<vmem>>, %arg24: memref<1x1x17xf32, #tpu.memory_space<vmem>>, %arg25: memref<1x1x17xf32, #tpu.memory_space<vmem>>, %arg26: memref<1x1xf32, #tpu.memory_space<vmem>>, %arg27: memref<2x16xf32, #tpu.memory_space<vmem>>, %arg28: memref<2x16xf32, #tpu.memory_space<vmem>>) attributes {dimension_semantics = [#tpu.dimension_semantics<parallel>], iteration_bounds = array<i64: 1>, scalar_prefetch = 0 : i64, scratch_operands = 0 : i64, tpu.core_type = #tpu.core_type<tc>, window_params = [{transform_indices = @transform_0, window_bounds = array<i64: 32, 1>}, {pipeline_mode = #tpu.pipeline_mode<synchronous>, transform_indices = @transform_1, window_bounds = array<i64: 7, 1, 4>}, {pipeline_mode = #tpu.pipeline_mode<synchronous>, transform_indices = @transform_2, window_bounds = array<i64: 1, 4>}, {pipeline_mode = #tpu.pipeline_mode<synchronous>, transform_indices = @transform_3, window_bounds = array<i64: 20, 8>}, {pipeline_mode = #tpu.pipeline_mode<synchronous>, transform_indices = @transform_4, window_bounds = array<i64: 1, 8>}, {pipeline_mode = #tpu.pipeline_mode<synchronous>, transform_indices = @transform_5, window_bounds = array<i64: 24, 16>}, {pipeline_mode = #tpu.pipeline_mode<synchronous>, transform_indices = @transform_6, window_bounds = array<i64: 1, 16>}, {pipeline_mode = #tpu.pipeline_mode<synchronous>, transform_indices = @transform_7, window_bounds = array<i64: 1, 16>}, {pipeline_mode = #tpu.pipeline_mode<synchronous>, transform_indices = @transform_8, window_bounds = array<i64: 1, 16>}, {pipeline_mode = #tpu.pipeline_mode<synchronous>, transform_indices = @transform_9, window_bounds = array<i64: 4, 32, 16>}, {pipeline_mode = #tpu.pipeline_mode<synchronous>, transform_indices = @transform_10, window_bounds = array<i64: 4, 1, 16>}, {pipeline_mode = #tpu.pipeline_mode<synchronous>, transform_indices = @transform_11, window_bounds = array<i64: 4, 16, 16>}, {pipeline_mode = #tpu.pipeline_mode<synchronous>, transform_indices = @transform_12, window_bounds = array<i64: 4, 1, 16>}, {pipeline_mode = #tpu.pipeline_mode<synchronous>, transform_indices = @transform_13, window_bounds = array<i64: 4, 16, 32>}, {pipeline_mode = #tpu.pipeline_mode<synchronous>, transform_indices = @transform_14, window_bounds = array<i64: 4, 1, 32>}, {pipeline_mode = #tpu.pipeline_mode<synchronous>, transform_indices = @transform_15, window_bounds = array<i64: 4, 16, 48>}, {pipeline_mode = #tpu.pipeline_mode<synchronous>, transform_indices = @transform_16, window_bounds = array<i64: 4, 1, 48>}, {pipeline_mode = #tpu.pipeline_mode<synchronous>, transform_indices = @transform_17, window_bounds = array<i64: 32, 32>}, {pipeline_mode = #tpu.pipeline_mode<synchronous>, transform_indices = @transform_18, window_bounds = array<i64: 1, 32>}, {pipeline_mode = #tpu.pipeline_mode<synchronous>, transform_indices = @transform_19, window_bounds = array<i64: 32, 32>}, {pipeline_mode = #tpu.pipeline_mode<synchronous>, transform_indices = @transform_20, window_bounds = array<i64: 1, 32>}, {pipeline_mode = #tpu.pipeline_mode<synchronous>, transform_indices = @transform_21, window_bounds = array<i64: 32, 17>}, {pipeline_mode = #tpu.pipeline_mode<synchronous>, transform_indices = @transform_22, window_bounds = array<i64: 1, 17>}, {pipeline_mode = #tpu.pipeline_mode<synchronous>, transform_indices = @transform_23, window_bounds = array<i64: 1, 1, 17>}, {pipeline_mode = #tpu.pipeline_mode<synchronous>, transform_indices = @transform_24, window_bounds = array<i64: 1, 1, 17>}, {pipeline_mode = #tpu.pipeline_mode<synchronous>, transform_indices = @transform_25, window_bounds = array<i64: 1, 1>}, {transform_indices = @transform_26, window_bounds = array<i64: 2, 16>}, {transform_indices = @transform_27, window_bounds = array<i64: 2, 16>}]} {
    %c0 = arith.constant 0 : index
    %c0_0 = arith.constant 0 : index
    %0 = vector.load %arg1[%c0, %c0_0] : memref<32x1xf32, #tpu.memory_space<vmem>>, vector<32x1xf32>
    %1 = tpu.iota {dimensions = array<i32: 0>} : vector<32x1xi32>
    %c16_i32 = arith.constant 16 : i32
    %c0_i32 = arith.constant 0 : i32
    %2 = arith.cmpi eq, %c16_i32, %c0_i32 : i32
    %c1_i32 = arith.constant 1 : i32
    %3 = arith.select %2, %c1_i32, %c16_i32 : i32
    %4 = vector.broadcast %3 : i32 to vector<32x1xi32>
    %5 = arith.remsi %1, %4 : vector<32x1xi32>
    %c0_i32_1 = arith.constant 0 : i32
    %6 = vector.broadcast %c0_i32_1 : i32 to vector<32x1xi32>
    %7 = arith.cmpi ne, %5, %6 : vector<32x1xi32>
    %c0_i32_2 = arith.constant 0 : i32
    %8 = vector.broadcast %c0_i32_2 : i32 to vector<32x1xi32>
    %9 = arith.cmpi slt, %5, %8 : vector<32x1xi32>
    %c0_i32_3 = arith.constant 0 : i32
    %10 = arith.cmpi slt, %3, %c0_i32_3 : i32
    %11 = vector.broadcast %10 : i1 to vector<32x1xi1>
    %12 = vector.broadcast %11 : vector<32x1xi1> to vector<32x1xi1>
    %13 = arith.xori %9, %12 : vector<32x1xi1>
    %14 = arith.andi %13, %7 : vector<32x1xi1>
    %15 = vector.broadcast %3 : i32 to vector<32x1xi32>
    %16 = arith.addi %5, %15 : vector<32x1xi32>
    %17 = arith.select %14, %16, %5 : vector<32x1xi1>, vector<32x1xi32>
    %c3_i32 = arith.constant 3 : i32
    %18 = tpu.dynamic_rotate %0 by %c3_i32 dim 0 : vector<32x1xf32>, i32 -> vector<32x1xf32>
    %c3_i32_4 = arith.constant 3 : i32
    %19 = vector.broadcast %c3_i32_4 : i32 to vector<32x1xi32>
    %20 = arith.cmpi sge, %17, %19 : vector<32x1xi32>
    %cst = arith.constant 0.000000e+00 : f32
    %21 = vector.broadcast %cst : f32 to vector<32x1xf32>
    %22 = arith.select %20, %18, %21 : vector<32x1xi1>, vector<32x1xf32>
    %c0_5 = arith.constant 0 : index
    %c0_6 = arith.constant 0 : index
    %c0_7 = arith.constant 0 : index
    %23 = vector.load %arg2[%c0_5, %c0_6, %c0_7] : memref<7x1x4xf32, #tpu.memory_space<vmem>>, vector<1x1x4xf32>
    %24 = vector.shape_cast %23 : vector<1x1x4xf32> to vector<1x4xf32>
    %25 = vector.broadcast %22 : vector<32x1xf32> to vector<32x4xf32>
    %26 = vector.broadcast %24 : vector<1x4xf32> to vector<32x4xf32>
    %27 = arith.mulf %25, %26 : vector<32x4xf32>
    %c2_i32 = arith.constant 2 : i32
    %28 = tpu.dynamic_rotate %0 by %c2_i32 dim 0 : vector<32x1xf32>, i32 -> vector<32x1xf32>
    %c2_i32_8 = arith.constant 2 : i32
    %29 = vector.broadcast %c2_i32_8 : i32 to vector<32x1xi32>
    %30 = arith.cmpi sge, %17, %29 : vector<32x1xi32>
    %cst_9 = arith.constant 0.000000e+00 : f32
    %31 = vector.broadcast %cst_9 : f32 to vector<32x1xf32>
    %32 = arith.select %30, %28, %31 : vector<32x1xi1>, vector<32x1xf32>
    %c1 = arith.constant 1 : index
    %c0_10 = arith.constant 0 : index
    %c0_11 = arith.constant 0 : index
    %33 = vector.load %arg2[%c1, %c0_10, %c0_11] : memref<7x1x4xf32, #tpu.memory_space<vmem>>, vector<1x1x4xf32>
    %34 = vector.shape_cast %33 : vector<1x1x4xf32> to vector<1x4xf32>
    %35 = vector.broadcast %32 : vector<32x1xf32> to vector<32x4xf32>
    %36 = vector.broadcast %34 : vector<1x4xf32> to vector<32x4xf32>
    %37 = arith.mulf %35, %36 : vector<32x4xf32>
    %38 = arith.addf %27, %37 : vector<32x4xf32>
    %c1_i32_12 = arith.constant 1 : i32
    %39 = tpu.dynamic_rotate %0 by %c1_i32_12 dim 0 : vector<32x1xf32>, i32 -> vector<32x1xf32>
    %c1_i32_13 = arith.constant 1 : i32
    %40 = vector.broadcast %c1_i32_13 : i32 to vector<32x1xi32>
    %41 = arith.cmpi sge, %17, %40 : vector<32x1xi32>
    %cst_14 = arith.constant 0.000000e+00 : f32
    %42 = vector.broadcast %cst_14 : f32 to vector<32x1xf32>
    %43 = arith.select %41, %39, %42 : vector<32x1xi1>, vector<32x1xf32>
    %c2 = arith.constant 2 : index
    %c0_15 = arith.constant 0 : index
    %c0_16 = arith.constant 0 : index
    %44 = vector.load %arg2[%c2, %c0_15, %c0_16] : memref<7x1x4xf32, #tpu.memory_space<vmem>>, vector<1x1x4xf32>
    %45 = vector.shape_cast %44 : vector<1x1x4xf32> to vector<1x4xf32>
    %46 = vector.broadcast %43 : vector<32x1xf32> to vector<32x4xf32>
    %47 = vector.broadcast %45 : vector<1x4xf32> to vector<32x4xf32>
    %48 = arith.mulf %46, %47 : vector<32x4xf32>
    %49 = arith.addf %38, %48 : vector<32x4xf32>
    %c3 = arith.constant 3 : index
    %c0_17 = arith.constant 0 : index
    %c0_18 = arith.constant 0 : index
    %50 = vector.load %arg2[%c3, %c0_17, %c0_18] : memref<7x1x4xf32, #tpu.memory_space<vmem>>, vector<1x1x4xf32>
    %51 = vector.shape_cast %50 : vector<1x1x4xf32> to vector<1x4xf32>
    %52 = vector.broadcast %0 : vector<32x1xf32> to vector<32x4xf32>
    %53 = vector.broadcast %51 : vector<1x4xf32> to vector<32x4xf32>
    %54 = arith.mulf %52, %53 : vector<32x4xf32>
    %55 = arith.addf %49, %54 : vector<32x4xf32>
    %c31_i32 = arith.constant 31 : i32
    %56 = tpu.dynamic_rotate %0 by %c31_i32 dim 0 : vector<32x1xf32>, i32 -> vector<32x1xf32>
    %c15_i32 = arith.constant 15 : i32
    %57 = vector.broadcast %c15_i32 : i32 to vector<32x1xi32>
    %58 = arith.cmpi slt, %17, %57 : vector<32x1xi32>
    %cst_19 = arith.constant 0.000000e+00 : f32
    %59 = vector.broadcast %cst_19 : f32 to vector<32x1xf32>
    %60 = arith.select %58, %56, %59 : vector<32x1xi1>, vector<32x1xf32>
    %c4 = arith.constant 4 : index
    %c0_20 = arith.constant 0 : index
    %c0_21 = arith.constant 0 : index
    %61 = vector.load %arg2[%c4, %c0_20, %c0_21] : memref<7x1x4xf32, #tpu.memory_space<vmem>>, vector<1x1x4xf32>
    %62 = vector.shape_cast %61 : vector<1x1x4xf32> to vector<1x4xf32>
    %63 = vector.broadcast %60 : vector<32x1xf32> to vector<32x4xf32>
    %64 = vector.broadcast %62 : vector<1x4xf32> to vector<32x4xf32>
    %65 = arith.mulf %63, %64 : vector<32x4xf32>
    %66 = arith.addf %55, %65 : vector<32x4xf32>
    %c30_i32 = arith.constant 30 : i32
    %67 = tpu.dynamic_rotate %0 by %c30_i32 dim 0 : vector<32x1xf32>, i32 -> vector<32x1xf32>
    %c14_i32 = arith.constant 14 : i32
    %68 = vector.broadcast %c14_i32 : i32 to vector<32x1xi32>
    %69 = arith.cmpi slt, %17, %68 : vector<32x1xi32>
    %cst_22 = arith.constant 0.000000e+00 : f32
    %70 = vector.broadcast %cst_22 : f32 to vector<32x1xf32>
    %71 = arith.select %69, %67, %70 : vector<32x1xi1>, vector<32x1xf32>
    %c5 = arith.constant 5 : index
    %c0_23 = arith.constant 0 : index
    %c0_24 = arith.constant 0 : index
    %72 = vector.load %arg2[%c5, %c0_23, %c0_24] : memref<7x1x4xf32, #tpu.memory_space<vmem>>, vector<1x1x4xf32>
    %73 = vector.shape_cast %72 : vector<1x1x4xf32> to vector<1x4xf32>
    %74 = vector.broadcast %71 : vector<32x1xf32> to vector<32x4xf32>
    %75 = vector.broadcast %73 : vector<1x4xf32> to vector<32x4xf32>
    %76 = arith.mulf %74, %75 : vector<32x4xf32>
    %77 = arith.addf %66, %76 : vector<32x4xf32>
    %c29_i32 = arith.constant 29 : i32
    %78 = tpu.dynamic_rotate %0 by %c29_i32 dim 0 : vector<32x1xf32>, i32 -> vector<32x1xf32>
    %c13_i32 = arith.constant 13 : i32
    %79 = vector.broadcast %c13_i32 : i32 to vector<32x1xi32>
    %80 = arith.cmpi slt, %17, %79 : vector<32x1xi32>
    %cst_25 = arith.constant 0.000000e+00 : f32
    %81 = vector.broadcast %cst_25 : f32 to vector<32x1xf32>
    %82 = arith.select %80, %78, %81 : vector<32x1xi1>, vector<32x1xf32>
    %c6 = arith.constant 6 : index
    %c0_26 = arith.constant 0 : index
    %c0_27 = arith.constant 0 : index
    %83 = vector.load %arg2[%c6, %c0_26, %c0_27] : memref<7x1x4xf32, #tpu.memory_space<vmem>>, vector<1x1x4xf32>
    %84 = vector.shape_cast %83 : vector<1x1x4xf32> to vector<1x4xf32>
    %85 = vector.broadcast %82 : vector<32x1xf32> to vector<32x4xf32>
    %86 = vector.broadcast %84 : vector<1x4xf32> to vector<32x4xf32>
    %87 = arith.mulf %85, %86 : vector<32x4xf32>
    %88 = arith.addf %77, %87 : vector<32x4xf32>
    %c0_28 = arith.constant 0 : index
    %c0_29 = arith.constant 0 : index
    %89 = vector.load %arg3[%c0_28, %c0_29] : memref<1x4xf32, #tpu.memory_space<vmem>>, vector<1x4xf32>
    %90 = vector.broadcast %89 : vector<1x4xf32> to vector<32x4xf32>
    %91 = arith.addf %88, %90 : vector<32x4xf32>
    %cst_30 = arith.constant 0.000000e+00 : f32
    %92 = vector.broadcast %cst_30 : f32 to vector<32x4xf32>
    %93 = arith.maximumf %91, %92 : vector<32x4xf32>
    %c2_i32_31 = arith.constant 2 : i32
    %94 = tpu.dynamic_rotate %93 by %c2_i32_31 dim 0 : vector<32x4xf32>, i32 -> vector<32x4xf32>
    %c2_i32_32 = arith.constant 2 : i32
    %95 = vector.broadcast %c2_i32_32 : i32 to vector<32x1xi32>
    %96 = arith.cmpi sge, %17, %95 : vector<32x1xi32>
    %cst_33 = arith.constant 0.000000e+00 : f32
    %97 = vector.shape_cast %96 : vector<32x1xi1> to vector<32x1xi1>
    %98 = vector.broadcast %97 : vector<32x1xi1> to vector<32x4xi1>
    %99 = vector.broadcast %cst_33 : f32 to vector<32x4xf32>
    %100 = arith.select %98, %94, %99 : vector<32x4xi1>, vector<32x4xf32>
    %c1_i32_34 = arith.constant 1 : i32
    %101 = tpu.dynamic_rotate %93 by %c1_i32_34 dim 0 : vector<32x4xf32>, i32 -> vector<32x4xf32>
    %c1_i32_35 = arith.constant 1 : i32
    %102 = vector.broadcast %c1_i32_35 : i32 to vector<32x1xi32>
    %103 = arith.cmpi sge, %17, %102 : vector<32x1xi32>
    %cst_36 = arith.constant 0.000000e+00 : f32
    %104 = vector.shape_cast %103 : vector<32x1xi1> to vector<32x1xi1>
    %105 = vector.broadcast %104 : vector<32x1xi1> to vector<32x4xi1>
    %106 = vector.broadcast %cst_36 : f32 to vector<32x4xf32>
    %107 = arith.select %105, %101, %106 : vector<32x4xi1>, vector<32x4xf32>
    %c31_i32_37 = arith.constant 31 : i32
    %108 = tpu.dynamic_rotate %93 by %c31_i32_37 dim 0 : vector<32x4xf32>, i32 -> vector<32x4xf32>
    %c15_i32_38 = arith.constant 15 : i32
    %109 = vector.broadcast %c15_i32_38 : i32 to vector<32x1xi32>
    %110 = arith.cmpi slt, %17, %109 : vector<32x1xi32>
    %cst_39 = arith.constant 0.000000e+00 : f32
    %111 = vector.shape_cast %110 : vector<32x1xi1> to vector<32x1xi1>
    %112 = vector.broadcast %111 : vector<32x1xi1> to vector<32x4xi1>
    %113 = vector.broadcast %cst_39 : f32 to vector<32x4xf32>
    %114 = arith.select %112, %108, %113 : vector<32x4xi1>, vector<32x4xf32>
    %c30_i32_40 = arith.constant 30 : i32
    %115 = tpu.dynamic_rotate %93 by %c30_i32_40 dim 0 : vector<32x4xf32>, i32 -> vector<32x4xf32>
    %c14_i32_41 = arith.constant 14 : i32
    %116 = vector.broadcast %c14_i32_41 : i32 to vector<32x1xi32>
    %117 = arith.cmpi slt, %17, %116 : vector<32x1xi32>
    %cst_42 = arith.constant 0.000000e+00 : f32
    %118 = vector.shape_cast %117 : vector<32x1xi1> to vector<32x1xi1>
    %119 = vector.broadcast %118 : vector<32x1xi1> to vector<32x4xi1>
    %120 = vector.broadcast %cst_42 : f32 to vector<32x4xf32>
    %121 = arith.select %119, %115, %120 : vector<32x4xi1>, vector<32x4xf32>
    %122 = tpu.concatenate %100, %107, %93, %114, %121 in 1 : vector<32x4xf32>, vector<32x4xf32>, vector<32x4xf32>, vector<32x4xf32>, vector<32x4xf32> -> vector<32x20xf32>
    %c0_43 = arith.constant 0 : index
    %c0_44 = arith.constant 0 : index
    %123 = vector.load %arg4[%c0_43, %c0_44] : memref<20x8xbf16, #tpu.memory_space<vmem>>, vector<20x8xbf16>
    %124 = arith.truncf %122 : vector<32x20xf32> to vector<32x20xbf16>
    %cst_45 = arith.constant dense<0.000000e+00> : vector<32x8xf32>
    %125 = tpu.matmul %124, %123, %cst_45 {dimension_numbers = #tpu.dot_dimension_numbers<[1], [0], [0], [1], [0, 0, 1, 1], [], []>} : vector<32x20xbf16>, vector<20x8xbf16>, vector<32x8xf32> -> vector<32x8xf32>
    %c0_46 = arith.constant 0 : index
    %c0_47 = arith.constant 0 : index
    %126 = vector.load %arg5[%c0_46, %c0_47] : memref<1x8xf32, #tpu.memory_space<vmem>>, vector<1x8xf32>
    %127 = vector.broadcast %126 : vector<1x8xf32> to vector<32x8xf32>
    %128 = arith.addf %125, %127 : vector<32x8xf32>
    %cst_48 = arith.constant 0.000000e+00 : f32
    %129 = vector.broadcast %cst_48 : f32 to vector<32x8xf32>
    %130 = arith.maximumf %128, %129 : vector<32x8xf32>
    %c1_i32_49 = arith.constant 1 : i32
    %131 = tpu.dynamic_rotate %130 by %c1_i32_49 dim 0 : vector<32x8xf32>, i32 -> vector<32x8xf32>
    %c1_i32_50 = arith.constant 1 : i32
    %132 = vector.broadcast %c1_i32_50 : i32 to vector<32x1xi32>
    %133 = arith.cmpi sge, %17, %132 : vector<32x1xi32>
    %cst_51 = arith.constant 0.000000e+00 : f32
    %134 = vector.shape_cast %133 : vector<32x1xi1> to vector<32x1xi1>
    %135 = vector.broadcast %134 : vector<32x1xi1> to vector<32x8xi1>
    %136 = vector.broadcast %cst_51 : f32 to vector<32x8xf32>
    %137 = arith.select %135, %131, %136 : vector<32x8xi1>, vector<32x8xf32>
    %c31_i32_52 = arith.constant 31 : i32
    %138 = tpu.dynamic_rotate %130 by %c31_i32_52 dim 0 : vector<32x8xf32>, i32 -> vector<32x8xf32>
    %c15_i32_53 = arith.constant 15 : i32
    %139 = vector.broadcast %c15_i32_53 : i32 to vector<32x1xi32>
    %140 = arith.cmpi slt, %17, %139 : vector<32x1xi32>
    %cst_54 = arith.constant 0.000000e+00 : f32
    %141 = vector.shape_cast %140 : vector<32x1xi1> to vector<32x1xi1>
    %142 = vector.broadcast %141 : vector<32x1xi1> to vector<32x8xi1>
    %143 = vector.broadcast %cst_54 : f32 to vector<32x8xf32>
    %144 = arith.select %142, %138, %143 : vector<32x8xi1>, vector<32x8xf32>
    %145 = tpu.concatenate %137, %130, %144 in 1 : vector<32x8xf32>, vector<32x8xf32>, vector<32x8xf32> -> vector<32x24xf32>
    %c0_55 = arith.constant 0 : index
    %c0_56 = arith.constant 0 : index
    %146 = vector.load %arg6[%c0_55, %c0_56] : memref<24x16xbf16, #tpu.memory_space<vmem>>, vector<24x16xbf16>
    %147 = arith.truncf %145 : vector<32x24xf32> to vector<32x24xbf16>
    %cst_57 = arith.constant dense<0.000000e+00> : vector<32x16xf32>
    %148 = tpu.matmul %147, %146, %cst_57 {dimension_numbers = #tpu.dot_dimension_numbers<[1], [0], [0], [1], [0, 0, 1, 1], [], []>} : vector<32x24xbf16>, vector<24x16xbf16>, vector<32x16xf32> -> vector<32x16xf32>
    %c0_58 = arith.constant 0 : index
    %c0_59 = arith.constant 0 : index
    %149 = vector.load %arg7[%c0_58, %c0_59] : memref<1x16xf32, #tpu.memory_space<vmem>>, vector<1x16xf32>
    %150 = vector.broadcast %149 : vector<1x16xf32> to vector<32x16xf32>
    %151 = arith.addf %148, %150 : vector<32x16xf32>
    %cst_60 = arith.constant 0.000000e+00 : f32
    %152 = vector.broadcast %cst_60 : f32 to vector<32x16xf32>
    %153 = arith.maximumf %151, %152 : vector<32x16xf32>
    %154 = arith.truncf %153 : vector<32x16xf32> to vector<32x16xbf16>
    %c0_61 = arith.constant 0 : index
    %c0_62 = arith.constant 0 : index
    %155 = vector.load %arg8[%c0_61, %c0_62] : memref<1x16xf32, #tpu.memory_space<vmem>>, vector<1x16xf32>
    %156 = vector.broadcast %0 : vector<32x1xf32> to vector<32x16xf32>
    %157 = vector.broadcast %155 : vector<1x16xf32> to vector<32x16xf32>
    %158 = arith.mulf %156, %157 : vector<32x16xf32>
    %c0_63 = arith.constant 0 : index
    %c0_64 = arith.constant 0 : index
    %159 = vector.load %arg9[%c0_63, %c0_64] : memref<1x16xf32, #tpu.memory_space<vmem>>, vector<1x16xf32>
    %160 = vector.broadcast %159 : vector<1x16xf32> to vector<32x16xf32>
    %161 = arith.addf %158, %160 : vector<32x16xf32>
    %cst_65 = arith.constant 0.000000e+00 : f32
    %162 = vector.broadcast %cst_65 : f32 to vector<32x32xf32>
    %c0_i32_66 = arith.constant 0 : i32
    %c2_i32_67 = arith.constant 2 : i32
    %163 = arith.addi %c0_i32_66, %c2_i32_67 : i32
    %c1_i32_68 = arith.constant 1 : i32
    %164:2 = scf.for %arg29 = %c0_i32_66 to %163 step %c1_i32_68 iter_args(%arg30 = %161, %arg31 = %162) -> (vector<32x16xf32>, vector<32x32xf32>)  : i32 {
      %c2_i32_105 = arith.constant 2 : i32
      %219 = arith.muli %arg29, %c2_i32_105 : i32
      %c0_i32_106 = arith.constant 0 : i32
      %220 = arith.addi %219, %c0_i32_106 : i32
      %c1_i32_107 = arith.constant 1 : i32
      %221 = tpu.dynamic_rotate %arg30 by %c1_i32_107 dim 0 : vector<32x16xf32>, i32 -> vector<32x16xf32>
      %c1_i32_108 = arith.constant 1 : i32
      %222 = vector.broadcast %c1_i32_108 : i32 to vector<32x1xi32>
      %223 = arith.cmpi sge, %17, %222 : vector<32x1xi32>
      %cst_109 = arith.constant 0.000000e+00 : f32
      %224 = vector.shape_cast %223 : vector<32x1xi1> to vector<32x1xi1>
      %225 = vector.broadcast %224 : vector<32x1xi1> to vector<32x16xi1>
      %226 = vector.broadcast %cst_109 : f32 to vector<32x16xf32>
      %227 = arith.select %225, %221, %226 : vector<32x16xi1>, vector<32x16xf32>
      %228 = tpu.concatenate %227, %arg30 in 1 : vector<32x16xf32>, vector<32x16xf32> -> vector<32x32xf32>
      %229 = arith.truncf %228 : vector<32x32xf32> to vector<32x32xbf16>
      %230 = arith.index_cast %220 : i32 to index
      %c0_110 = arith.constant 0 : index
      %c0_111 = arith.constant 0 : index
      %231 = vector.load %arg10[%230, %c0_110, %c0_111] : memref<4x32x16xbf16, #tpu.memory_space<vmem>>, vector<1x32x16xbf16>
      %232 = vector.shape_cast %231 : vector<1x32x16xbf16> to vector<32x16xbf16>
      %cst_112 = arith.constant dense<0.000000e+00> : vector<32x16xf32>
      %233 = tpu.matmul %229, %232, %cst_112 {dimension_numbers = #tpu.dot_dimension_numbers<[1], [0], [0], [1], [0, 0, 1, 1], [], []>} : vector<32x32xbf16>, vector<32x16xbf16>, vector<32x16xf32> -> vector<32x16xf32>
      %234 = arith.index_cast %220 : i32 to index
      %c0_113 = arith.constant 0 : index
      %c0_114 = arith.constant 0 : index
      %235 = vector.load %arg11[%234, %c0_113, %c0_114] : memref<4x1x16xf32, #tpu.memory_space<vmem>>, vector<1x1x16xf32>
      %236 = vector.shape_cast %235 : vector<1x1x16xf32> to vector<1x16xf32>
      %237 = vector.broadcast %236 : vector<1x16xf32> to vector<32x16xf32>
      %238 = arith.addf %233, %237 : vector<32x16xf32>
      %239 = arith.index_cast %220 : i32 to index
      %c0_115 = arith.constant 0 : index
      %c0_116 = arith.constant 0 : index
      %240 = vector.load %arg12[%239, %c0_115, %c0_116] : memref<4x16x16xbf16, #tpu.memory_space<vmem>>, vector<1x16x16xbf16>
      %241 = vector.shape_cast %240 : vector<1x16x16xbf16> to vector<16x16xbf16>
      %cst_117 = arith.constant dense<0.000000e+00> : vector<32x16xf32>
      %242 = tpu.matmul %154, %241, %cst_117 {dimension_numbers = #tpu.dot_dimension_numbers<[1], [0], [0], [1], [0, 0, 1, 1], [], []>} : vector<32x16xbf16>, vector<16x16xbf16>, vector<32x16xf32> -> vector<32x16xf32>
      %243 = arith.addf %238, %242 : vector<32x16xf32>
      %244 = arith.index_cast %220 : i32 to index
      %c0_118 = arith.constant 0 : index
      %c0_119 = arith.constant 0 : index
      %245 = vector.load %arg13[%244, %c0_118, %c0_119] : memref<4x1x16xf32, #tpu.memory_space<vmem>>, vector<1x1x16xf32>
      %246 = vector.shape_cast %245 : vector<1x1x16xf32> to vector<1x16xf32>
      %247 = vector.broadcast %246 : vector<1x16xf32> to vector<32x16xf32>
      %248 = arith.addf %243, %247 : vector<32x16xf32>
      %249 = arith.index_cast %220 : i32 to index
      %c0_120 = arith.constant 0 : index
      %c0_121 = arith.constant 0 : index
      %250 = vector.load %arg14[%249, %c0_120, %c0_121] : memref<4x16x32xbf16, #tpu.memory_space<vmem>>, vector<1x16x32xbf16>
      %251 = vector.shape_cast %250 : vector<1x16x32xbf16> to vector<16x32xbf16>
      %252 = arith.truncf %248 : vector<32x16xf32> to vector<32x16xbf16>
      %cst_122 = arith.constant dense<0.000000e+00> : vector<32x32xf32>
      %253 = tpu.matmul %252, %251, %cst_122 {dimension_numbers = #tpu.dot_dimension_numbers<[1], [0], [0], [1], [0, 0, 1, 1], [], []>} : vector<32x16xbf16>, vector<16x32xbf16>, vector<32x32xf32> -> vector<32x32xf32>
      %254 = arith.index_cast %220 : i32 to index
      %c0_123 = arith.constant 0 : index
      %c0_124 = arith.constant 0 : index
      %255 = vector.load %arg15[%254, %c0_123, %c0_124] : memref<4x1x32xf32, #tpu.memory_space<vmem>>, vector<1x1x32xf32>
      %256 = vector.shape_cast %255 : vector<1x1x32xf32> to vector<1x32xf32>
      %257 = vector.broadcast %256 : vector<1x32xf32> to vector<32x32xf32>
      %258 = arith.addf %253, %257 : vector<32x32xf32>
      %259 = vector.extract_strided_slice %258 {offsets = [0, 0], sizes = [32, 16], strides = [1, 1]} : vector<32x32xf32> to vector<32x16xf32>
      %260 = math.tanh %259 : vector<32x16xf32>
      %261 = vector.extract_strided_slice %258 {offsets = [0, 16], sizes = [32, 16], strides = [1, 1]} : vector<32x32xf32> to vector<32x16xf32>
      %262 = arith.negf %261 : vector<32x16xf32>
      %263 = math.exp %262 : vector<32x16xf32>
      %cst_125 = arith.constant 1.000000e+00 : f32
      %264 = vector.broadcast %cst_125 : f32 to vector<32x16xf32>
      %265 = arith.addf %264, %263 : vector<32x16xf32>
      %266 = arith.divf %264, %265 : vector<32x16xf32>
      %267 = arith.mulf %260, %266 : vector<32x16xf32>
      %268 = arith.index_cast %220 : i32 to index
      %c0_126 = arith.constant 0 : index
      %c0_127 = arith.constant 0 : index
      %269 = vector.load %arg16[%268, %c0_126, %c0_127] : memref<4x16x48xbf16, #tpu.memory_space<vmem>>, vector<1x16x48xbf16>
      %270 = vector.shape_cast %269 : vector<1x16x48xbf16> to vector<16x48xbf16>
      %271 = arith.truncf %267 : vector<32x16xf32> to vector<32x16xbf16>
      %cst_128 = arith.constant dense<0.000000e+00> : vector<32x48xf32>
      %272 = tpu.matmul %271, %270, %cst_128 {dimension_numbers = #tpu.dot_dimension_numbers<[1], [0], [0], [1], [0, 0, 1, 1], [], []>} : vector<32x16xbf16>, vector<16x48xbf16>, vector<32x48xf32> -> vector<32x48xf32>
      %273 = arith.index_cast %220 : i32 to index
      %c0_129 = arith.constant 0 : index
      %c0_130 = arith.constant 0 : index
      %274 = vector.load %arg17[%273, %c0_129, %c0_130] : memref<4x1x48xf32, #tpu.memory_space<vmem>>, vector<1x1x48xf32>
      %275 = vector.shape_cast %274 : vector<1x1x48xf32> to vector<1x48xf32>
      %276 = vector.broadcast %275 : vector<1x48xf32> to vector<32x48xf32>
      %277 = arith.addf %272, %276 : vector<32x48xf32>
      %278 = vector.extract_strided_slice %277 {offsets = [0, 0], sizes = [32, 32], strides = [1, 1]} : vector<32x48xf32> to vector<32x32xf32>
      %279 = arith.addf %arg31, %278 : vector<32x32xf32>
      %280 = vector.extract_strided_slice %277 {offsets = [0, 32], sizes = [32, 16], strides = [1, 1]} : vector<32x48xf32> to vector<32x16xf32>
      %281 = arith.addf %arg30, %280 : vector<32x16xf32>
      %c2_i32_131 = arith.constant 2 : i32
      %282 = arith.muli %arg29, %c2_i32_131 : i32
      %c1_i32_132 = arith.constant 1 : i32
      %283 = arith.addi %282, %c1_i32_132 : i32
      %c2_i32_133 = arith.constant 2 : i32
      %284 = tpu.dynamic_rotate %281 by %c2_i32_133 dim 0 : vector<32x16xf32>, i32 -> vector<32x16xf32>
      %c2_i32_134 = arith.constant 2 : i32
      %285 = vector.broadcast %c2_i32_134 : i32 to vector<32x1xi32>
      %286 = arith.cmpi sge, %17, %285 : vector<32x1xi32>
      %cst_135 = arith.constant 0.000000e+00 : f32
      %287 = vector.shape_cast %286 : vector<32x1xi1> to vector<32x1xi1>
      %288 = vector.broadcast %287 : vector<32x1xi1> to vector<32x16xi1>
      %289 = vector.broadcast %cst_135 : f32 to vector<32x16xf32>
      %290 = arith.select %288, %284, %289 : vector<32x16xi1>, vector<32x16xf32>
      %291 = tpu.concatenate %290, %281 in 1 : vector<32x16xf32>, vector<32x16xf32> -> vector<32x32xf32>
      %292 = arith.truncf %291 : vector<32x32xf32> to vector<32x32xbf16>
      %293 = arith.index_cast %283 : i32 to index
      %c0_136 = arith.constant 0 : index
      %c0_137 = arith.constant 0 : index
      %294 = vector.load %arg10[%293, %c0_136, %c0_137] : memref<4x32x16xbf16, #tpu.memory_space<vmem>>, vector<1x32x16xbf16>
      %295 = vector.shape_cast %294 : vector<1x32x16xbf16> to vector<32x16xbf16>
      %cst_138 = arith.constant dense<0.000000e+00> : vector<32x16xf32>
      %296 = tpu.matmul %292, %295, %cst_138 {dimension_numbers = #tpu.dot_dimension_numbers<[1], [0], [0], [1], [0, 0, 1, 1], [], []>} : vector<32x32xbf16>, vector<32x16xbf16>, vector<32x16xf32> -> vector<32x16xf32>
      %297 = arith.index_cast %283 : i32 to index
      %c0_139 = arith.constant 0 : index
      %c0_140 = arith.constant 0 : index
      %298 = vector.load %arg11[%297, %c0_139, %c0_140] : memref<4x1x16xf32, #tpu.memory_space<vmem>>, vector<1x1x16xf32>
      %299 = vector.shape_cast %298 : vector<1x1x16xf32> to vector<1x16xf32>
      %300 = vector.broadcast %299 : vector<1x16xf32> to vector<32x16xf32>
      %301 = arith.addf %296, %300 : vector<32x16xf32>
      %302 = arith.index_cast %283 : i32 to index
      %c0_141 = arith.constant 0 : index
      %c0_142 = arith.constant 0 : index
      %303 = vector.load %arg12[%302, %c0_141, %c0_142] : memref<4x16x16xbf16, #tpu.memory_space<vmem>>, vector<1x16x16xbf16>
      %304 = vector.shape_cast %303 : vector<1x16x16xbf16> to vector<16x16xbf16>
      %cst_143 = arith.constant dense<0.000000e+00> : vector<32x16xf32>
      %305 = tpu.matmul %154, %304, %cst_143 {dimension_numbers = #tpu.dot_dimension_numbers<[1], [0], [0], [1], [0, 0, 1, 1], [], []>} : vector<32x16xbf16>, vector<16x16xbf16>, vector<32x16xf32> -> vector<32x16xf32>
      %306 = arith.addf %301, %305 : vector<32x16xf32>
      %307 = arith.index_cast %283 : i32 to index
      %c0_144 = arith.constant 0 : index
      %c0_145 = arith.constant 0 : index
      %308 = vector.load %arg13[%307, %c0_144, %c0_145] : memref<4x1x16xf32, #tpu.memory_space<vmem>>, vector<1x1x16xf32>
      %309 = vector.shape_cast %308 : vector<1x1x16xf32> to vector<1x16xf32>
      %310 = vector.broadcast %309 : vector<1x16xf32> to vector<32x16xf32>
      %311 = arith.addf %306, %310 : vector<32x16xf32>
      %312 = arith.index_cast %283 : i32 to index
      %c0_146 = arith.constant 0 : index
      %c0_147 = arith.constant 0 : index
      %313 = vector.load %arg14[%312, %c0_146, %c0_147] : memref<4x16x32xbf16, #tpu.memory_space<vmem>>, vector<1x16x32xbf16>
      %314 = vector.shape_cast %313 : vector<1x16x32xbf16> to vector<16x32xbf16>
      %315 = arith.truncf %311 : vector<32x16xf32> to vector<32x16xbf16>
      %cst_148 = arith.constant dense<0.000000e+00> : vector<32x32xf32>
      %316 = tpu.matmul %315, %314, %cst_148 {dimension_numbers = #tpu.dot_dimension_numbers<[1], [0], [0], [1], [0, 0, 1, 1], [], []>} : vector<32x16xbf16>, vector<16x32xbf16>, vector<32x32xf32> -> vector<32x32xf32>
      %317 = arith.index_cast %283 : i32 to index
      %c0_149 = arith.constant 0 : index
      %c0_150 = arith.constant 0 : index
      %318 = vector.load %arg15[%317, %c0_149, %c0_150] : memref<4x1x32xf32, #tpu.memory_space<vmem>>, vector<1x1x32xf32>
      %319 = vector.shape_cast %318 : vector<1x1x32xf32> to vector<1x32xf32>
      %320 = vector.broadcast %319 : vector<1x32xf32> to vector<32x32xf32>
      %321 = arith.addf %316, %320 : vector<32x32xf32>
      %322 = vector.extract_strided_slice %321 {offsets = [0, 0], sizes = [32, 16], strides = [1, 1]} : vector<32x32xf32> to vector<32x16xf32>
      %323 = math.tanh %322 : vector<32x16xf32>
      %324 = vector.extract_strided_slice %321 {offsets = [0, 16], sizes = [32, 16], strides = [1, 1]} : vector<32x32xf32> to vector<32x16xf32>
      %325 = arith.negf %324 : vector<32x16xf32>
      %326 = math.exp %325 : vector<32x16xf32>
      %cst_151 = arith.constant 1.000000e+00 : f32
      %327 = vector.broadcast %cst_151 : f32 to vector<32x16xf32>
      %328 = arith.addf %327, %326 : vector<32x16xf32>
      %329 = arith.divf %327, %328 : vector<32x16xf32>
      %330 = arith.mulf %323, %329 : vector<32x16xf32>
      %331 = arith.index_cast %283 : i32 to index
      %c0_152 = arith.constant 0 : index
      %c0_153 = arith.constant 0 : index
      %332 = vector.load %arg16[%331, %c0_152, %c0_153] : memref<4x16x48xbf16, #tpu.memory_space<vmem>>, vector<1x16x48xbf16>
      %333 = vector.shape_cast %332 : vector<1x16x48xbf16> to vector<16x48xbf16>
      %334 = arith.truncf %330 : vector<32x16xf32> to vector<32x16xbf16>
      %cst_154 = arith.constant dense<0.000000e+00> : vector<32x48xf32>
      %335 = tpu.matmul %334, %333, %cst_154 {dimension_numbers = #tpu.dot_dimension_numbers<[1], [0], [0], [1], [0, 0, 1, 1], [], []>} : vector<32x16xbf16>, vector<16x48xbf16>, vector<32x48xf32> -> vector<32x48xf32>
      %336 = arith.index_cast %283 : i32 to index
      %c0_155 = arith.constant 0 : index
      %c0_156 = arith.constant 0 : index
      %337 = vector.load %arg17[%336, %c0_155, %c0_156] : memref<4x1x48xf32, #tpu.memory_space<vmem>>, vector<1x1x48xf32>
      %338 = vector.shape_cast %337 : vector<1x1x48xf32> to vector<1x48xf32>
      %339 = vector.broadcast %338 : vector<1x48xf32> to vector<32x48xf32>
      %340 = arith.addf %335, %339 : vector<32x48xf32>
      %341 = vector.extract_strided_slice %340 {offsets = [0, 0], sizes = [32, 32], strides = [1, 1]} : vector<32x48xf32> to vector<32x32xf32>
      %342 = arith.addf %279, %341 : vector<32x32xf32>
      %343 = vector.extract_strided_slice %340 {offsets = [0, 32], sizes = [32, 16], strides = [1, 1]} : vector<32x48xf32> to vector<32x16xf32>
      %344 = arith.addf %281, %343 : vector<32x16xf32>
      scf.yield %344, %342 : vector<32x16xf32>, vector<32x32xf32>
    }
    %c2_i32_69 = arith.constant 2 : i32
    %cst_70 = arith.constant 0.000000e+00 : f32
    %165 = vector.broadcast %cst_70 : f32 to vector<32x32xf32>
    %166 = arith.maximumf %164#1, %165 : vector<32x32xf32>
    %c0_71 = arith.constant 0 : index
    %c0_72 = arith.constant 0 : index
    %167 = vector.load %arg18[%c0_71, %c0_72] : memref<32x32xbf16, #tpu.memory_space<vmem>>, vector<32x32xbf16>
    %168 = arith.truncf %166 : vector<32x32xf32> to vector<32x32xbf16>
    %cst_73 = arith.constant dense<0.000000e+00> : vector<32x32xf32>
    %169 = tpu.matmul %168, %167, %cst_73 {dimension_numbers = #tpu.dot_dimension_numbers<[1], [0], [0], [1], [0, 0, 1, 1], [], []>} : vector<32x32xbf16>, vector<32x32xbf16>, vector<32x32xf32> -> vector<32x32xf32>
    %c0_74 = arith.constant 0 : index
    %c0_75 = arith.constant 0 : index
    %170 = vector.load %arg19[%c0_74, %c0_75] : memref<1x32xf32, #tpu.memory_space<vmem>>, vector<1x32xf32>
    %171 = vector.broadcast %170 : vector<1x32xf32> to vector<32x32xf32>
    %172 = arith.addf %169, %171 : vector<32x32xf32>
    %cst_76 = arith.constant 0.000000e+00 : f32
    %173 = vector.broadcast %cst_76 : f32 to vector<32x32xf32>
    %174 = arith.maximumf %172, %173 : vector<32x32xf32>
    %c0_77 = arith.constant 0 : index
    %c0_78 = arith.constant 0 : index
    %175 = vector.load %arg20[%c0_77, %c0_78] : memref<32x32xbf16, #tpu.memory_space<vmem>>, vector<32x32xbf16>
    %176 = arith.truncf %174 : vector<32x32xf32> to vector<32x32xbf16>
    %cst_79 = arith.constant dense<0.000000e+00> : vector<32x32xf32>
    %177 = tpu.matmul %176, %175, %cst_79 {dimension_numbers = #tpu.dot_dimension_numbers<[1], [0], [0], [1], [0, 0, 1, 1], [], []>} : vector<32x32xbf16>, vector<32x32xbf16>, vector<32x32xf32> -> vector<32x32xf32>
    %c0_80 = arith.constant 0 : index
    %c0_81 = arith.constant 0 : index
    %178 = vector.load %arg21[%c0_80, %c0_81] : memref<1x32xf32, #tpu.memory_space<vmem>>, vector<1x32xf32>
    %179 = vector.broadcast %178 : vector<1x32xf32> to vector<32x32xf32>
    %180 = arith.addf %177, %179 : vector<32x32xf32>
    %cst_82 = arith.constant 0.000000e+00 : f32
    %181 = vector.broadcast %cst_82 : f32 to vector<32x32xf32>
    %182 = arith.maximumf %180, %181 : vector<32x32xf32>
    %c0_83 = arith.constant 0 : index
    %c0_84 = arith.constant 0 : index
    %183 = vector.load %arg22[%c0_83, %c0_84] : memref<32x17xbf16, #tpu.memory_space<vmem>>, vector<32x17xbf16>
    %184 = arith.truncf %182 : vector<32x32xf32> to vector<32x32xbf16>
    %cst_85 = arith.constant dense<0.000000e+00> : vector<32x17xf32>
    %185 = tpu.matmul %184, %183, %cst_85 {dimension_numbers = #tpu.dot_dimension_numbers<[1], [0], [0], [1], [0, 0, 1, 1], [], []>} : vector<32x32xbf16>, vector<32x17xbf16>, vector<32x17xf32> -> vector<32x17xf32>
    %c0_86 = arith.constant 0 : index
    %c0_87 = arith.constant 0 : index
    %186 = vector.load %arg23[%c0_86, %c0_87] : memref<1x17xf32, #tpu.memory_space<vmem>>, vector<1x17xf32>
    %187 = vector.broadcast %186 : vector<1x17xf32> to vector<32x17xf32>
    %188 = arith.addf %185, %187 : vector<32x17xf32>
    %189 = vector.shape_cast %188 : vector<32x17xf32> to vector<2x16x17xf32>
    %c0_88 = arith.constant 0 : index
    %c0_89 = arith.constant 0 : index
    %c0_90 = arith.constant 0 : index
    %190 = vector.load %arg25[%c0_88, %c0_89, %c0_90] : memref<1x1x17xf32, #tpu.memory_space<vmem>>, vector<1x1x17xf32>
    %191 = vector.broadcast %190 : vector<1x1x17xf32> to vector<2x16x17xf32>
    %192 = arith.mulf %189, %191 : vector<2x16x17xf32>
    %cst_91 = arith.constant dense<0.000000e+00> : vector<2x16xf32>
    %193 = vector.multi_reduction <add>, %192, %cst_91 [2] : vector<2x16x17xf32> to vector<2x16xf32>
    %c0_92 = arith.constant 0 : index
    %c0_93 = arith.constant 0 : index
    %194 = vector.load %arg27[%c0_92, %c0_93] : memref<2x16xf32, #tpu.memory_space<vmem>>, vector<2x16xf32>
    tpu.vector_store %arg27[%c0_92, %c0_93], %193 {strides = array<i32>} : memref<2x16xf32, #tpu.memory_space<vmem>>, vector<2x16xf32>,
    %cst_94 = arith.constant 0.000000e+00 : f32
    %195 = vector.broadcast %cst_94 : f32 to vector<2x16x17xf32>
    %196 = arith.maximumf %189, %195 : vector<2x16x17xf32>
    %c0_95 = arith.constant 0 : index
    %c0_96 = arith.constant 0 : index
    %c0_97 = arith.constant 0 : index
    %197 = vector.load %arg24[%c0_95, %c0_96, %c0_97] : memref<1x1x17xf32, #tpu.memory_space<vmem>>, vector<1x1x17xf32>
    %198 = vector.broadcast %197 : vector<1x1x17xf32> to vector<2x16x17xf32>
    %199 = arith.mulf %196, %198 : vector<2x16x17xf32>
    %cst_98 = arith.constant dense<0.000000e+00> : vector<2x16xf32>
    %200 = vector.multi_reduction <add>, %199, %cst_98 [2] : vector<2x16x17xf32> to vector<2x16xf32>
    %c0_99 = arith.constant 0 : index
    %c0_100 = arith.constant 0 : index
    %201 = vector.load %arg26[%c0_99, %c0_100] : memref<1x1xf32, #tpu.memory_space<vmem>>, vector<1x1xf32>
    %202 = vector.broadcast %201 : vector<1x1xf32> to vector<2x16xf32>
    %203 = arith.addf %200, %202 : vector<2x16xf32>
    %cst_101 = arith.constant 0.000000e+00 : f32
    %204 = vector.broadcast %cst_101 : f32 to vector<2x16xf32>
    %205 = arith.maximumf %203, %204 : vector<2x16xf32>
    %206 = vector.broadcast %cst_101 : f32 to vector<2x16xf32>
    %207 = arith.subf %203, %206 : vector<2x16xf32>
    %208 = arith.cmpf one, %207, %207 : vector<2x16xf32>
    %209 = vector.broadcast %cst_101 : f32 to vector<2x16xf32>
    %210 = arith.addf %203, %209 : vector<2x16xf32>
    %211 = math.absf %207 : vector<2x16xf32>
    %cst_102 = arith.constant 0.000000e+00 : f32
    %212 = vector.broadcast %cst_102 : f32 to vector<2x16xf32>
    %213 = arith.subf %212, %211 : vector<2x16xf32>
    %214 = math.exp %213 : vector<2x16xf32>
    %215 = math.log1p %214 : vector<2x16xf32>
    %216 = arith.addf %205, %215 : vector<2x16xf32>
    %217 = arith.select %208, %210, %216 : vector<2x16xi1>, vector<2x16xf32>
    %c0_103 = arith.constant 0 : index
    %c0_104 = arith.constant 0 : index
    %218 = vector.load %arg28[%c0_103, %c0_104] : memref<2x16xf32, #tpu.memory_space<vmem>>, vector<2x16xf32>
    tpu.vector_store %arg28[%c0_103, %c0_104], %217 {strides = array<i32>} : memref<2x16xf32, #tpu.memory_space<vmem>>, vector<2x16xf32>,
    return
  }
  func.func @transform_0(%arg0: i32) -> (i32, i32) {
    %c0_i32 = arith.constant 0 : i32
    %c0_i32_0 = arith.constant 0 : i32
    return %arg0, %c0_i32 : i32, i32
  }
  func.func @transform_1(%arg0: i32) -> (i32, i32, i32) {
    %c0_i32 = arith.constant 0 : i32
    %c0_i32_0 = arith.constant 0 : i32
    %c0_i32_1 = arith.constant 0 : i32
    %c0_i32_2 = arith.constant 0 : i32
    return %c0_i32, %c0_i32_0, %c0_i32_1 : i32, i32, i32
  }
  func.func @transform_2(%arg0: i32) -> (i32, i32) {
    %c0_i32 = arith.constant 0 : i32
    %c0_i32_0 = arith.constant 0 : i32
    %c0_i32_1 = arith.constant 0 : i32
    return %c0_i32, %c0_i32_0 : i32, i32
  }
  func.func @transform_3(%arg0: i32) -> (i32, i32) {
    %c0_i32 = arith.constant 0 : i32
    %c0_i32_0 = arith.constant 0 : i32
    %c0_i32_1 = arith.constant 0 : i32
    return %c0_i32, %c0_i32_0 : i32, i32
  }
  func.func @transform_4(%arg0: i32) -> (i32, i32) {
    %c0_i32 = arith.constant 0 : i32
    %c0_i32_0 = arith.constant 0 : i32
    %c0_i32_1 = arith.constant 0 : i32
    return %c0_i32, %c0_i32_0 : i32, i32
  }
  func.func @transform_5(%arg0: i32) -> (i32, i32) {
    %c0_i32 = arith.constant 0 : i32
    %c0_i32_0 = arith.constant 0 : i32
    %c0_i32_1 = arith.constant 0 : i32
    return %c0_i32, %c0_i32_0 : i32, i32
  }
  func.func @transform_6(%arg0: i32) -> (i32, i32) {
    %c0_i32 = arith.constant 0 : i32
    %c0_i32_0 = arith.constant 0 : i32
    %c0_i32_1 = arith.constant 0 : i32
    return %c0_i32, %c0_i32_0 : i32, i32
  }
  func.func @transform_7(%arg0: i32) -> (i32, i32) {
    %c0_i32 = arith.constant 0 : i32
    %c0_i32_0 = arith.constant 0 : i32
    %c0_i32_1 = arith.constant 0 : i32
    return %c0_i32, %c0_i32_0 : i32, i32
  }
  func.func @transform_8(%arg0: i32) -> (i32, i32) {
    %c0_i32 = arith.constant 0 : i32
    %c0_i32_0 = arith.constant 0 : i32
    %c0_i32_1 = arith.constant 0 : i32
    return %c0_i32, %c0_i32_0 : i32, i32
  }
  func.func @transform_9(%arg0: i32) -> (i32, i32, i32) {
    %c0_i32 = arith.constant 0 : i32
    %c0_i32_0 = arith.constant 0 : i32
    %c0_i32_1 = arith.constant 0 : i32
    %c0_i32_2 = arith.constant 0 : i32
    return %c0_i32, %c0_i32_0, %c0_i32_1 : i32, i32, i32
  }
  func.func @transform_10(%arg0: i32) -> (i32, i32, i32) {
    %c0_i32 = arith.constant 0 : i32
    %c0_i32_0 = arith.constant 0 : i32
    %c0_i32_1 = arith.constant 0 : i32
    %c0_i32_2 = arith.constant 0 : i32
    return %c0_i32, %c0_i32_0, %c0_i32_1 : i32, i32, i32
  }
  func.func @transform_11(%arg0: i32) -> (i32, i32, i32) {
    %c0_i32 = arith.constant 0 : i32
    %c0_i32_0 = arith.constant 0 : i32
    %c0_i32_1 = arith.constant 0 : i32
    %c0_i32_2 = arith.constant 0 : i32
    return %c0_i32, %c0_i32_0, %c0_i32_1 : i32, i32, i32
  }
  func.func @transform_12(%arg0: i32) -> (i32, i32, i32) {
    %c0_i32 = arith.constant 0 : i32
    %c0_i32_0 = arith.constant 0 : i32
    %c0_i32_1 = arith.constant 0 : i32
    %c0_i32_2 = arith.constant 0 : i32
    return %c0_i32, %c0_i32_0, %c0_i32_1 : i32, i32, i32
  }
  func.func @transform_13(%arg0: i32) -> (i32, i32, i32) {
    %c0_i32 = arith.constant 0 : i32
    %c0_i32_0 = arith.constant 0 : i32
    %c0_i32_1 = arith.constant 0 : i32
    %c0_i32_2 = arith.constant 0 : i32
    return %c0_i32, %c0_i32_0, %c0_i32_1 : i32, i32, i32
  }
  func.func @transform_14(%arg0: i32) -> (i32, i32, i32) {
    %c0_i32 = arith.constant 0 : i32
    %c0_i32_0 = arith.constant 0 : i32
    %c0_i32_1 = arith.constant 0 : i32
    %c0_i32_2 = arith.constant 0 : i32
    return %c0_i32, %c0_i32_0, %c0_i32_1 : i32, i32, i32
  }
  func.func @transform_15(%arg0: i32) -> (i32, i32, i32) {
    %c0_i32 = arith.constant 0 : i32
    %c0_i32_0 = arith.constant 0 : i32
    %c0_i32_1 = arith.constant 0 : i32
    %c0_i32_2 = arith.constant 0 : i32
    return %c0_i32, %c0_i32_0, %c0_i32_1 : i32, i32, i32
  }
  func.func @transform_16(%arg0: i32) -> (i32, i32, i32) {
    %c0_i32 = arith.constant 0 : i32
    %c0_i32_0 = arith.constant 0 : i32
    %c0_i32_1 = arith.constant 0 : i32
    %c0_i32_2 = arith.constant 0 : i32
    return %c0_i32, %c0_i32_0, %c0_i32_1 : i32, i32, i32
  }
  func.func @transform_17(%arg0: i32) -> (i32, i32) {
    %c0_i32 = arith.constant 0 : i32
    %c0_i32_0 = arith.constant 0 : i32
    %c0_i32_1 = arith.constant 0 : i32
    return %c0_i32, %c0_i32_0 : i32, i32
  }
  func.func @transform_18(%arg0: i32) -> (i32, i32) {
    %c0_i32 = arith.constant 0 : i32
    %c0_i32_0 = arith.constant 0 : i32
    %c0_i32_1 = arith.constant 0 : i32
    return %c0_i32, %c0_i32_0 : i32, i32
  }
  func.func @transform_19(%arg0: i32) -> (i32, i32) {
    %c0_i32 = arith.constant 0 : i32
    %c0_i32_0 = arith.constant 0 : i32
    %c0_i32_1 = arith.constant 0 : i32
    return %c0_i32, %c0_i32_0 : i32, i32
  }
  func.func @transform_20(%arg0: i32) -> (i32, i32) {
    %c0_i32 = arith.constant 0 : i32
    %c0_i32_0 = arith.constant 0 : i32
    %c0_i32_1 = arith.constant 0 : i32
    return %c0_i32, %c0_i32_0 : i32, i32
  }
  func.func @transform_21(%arg0: i32) -> (i32, i32) {
    %c0_i32 = arith.constant 0 : i32
    %c0_i32_0 = arith.constant 0 : i32
    %c0_i32_1 = arith.constant 0 : i32
    return %c0_i32, %c0_i32_0 : i32, i32
  }
  func.func @transform_22(%arg0: i32) -> (i32, i32) {
    %c0_i32 = arith.constant 0 : i32
    %c0_i32_0 = arith.constant 0 : i32
    %c0_i32_1 = arith.constant 0 : i32
    return %c0_i32, %c0_i32_0 : i32, i32
  }
  func.func @transform_23(%arg0: i32) -> (i32, i32, i32) {
    %c0_i32 = arith.constant 0 : i32
    %c0_i32_0 = arith.constant 0 : i32
    %c0_i32_1 = arith.constant 0 : i32
    %c0_i32_2 = arith.constant 0 : i32
    return %c0_i32, %c0_i32_0, %c0_i32_1 : i32, i32, i32
  }
  func.func @transform_24(%arg0: i32) -> (i32, i32, i32) {
    %c0_i32 = arith.constant 0 : i32
    %c0_i32_0 = arith.constant 0 : i32
    %c0_i32_1 = arith.constant 0 : i32
    %c0_i32_2 = arith.constant 0 : i32
    return %c0_i32, %c0_i32_0, %c0_i32_1 : i32, i32, i32
  }
  func.func @transform_25(%arg0: i32) -> (i32, i32) {
    %c0_i32 = arith.constant 0 : i32
    %c0_i32_0 = arith.constant 0 : i32
    %c0_i32_1 = arith.constant 0 : i32
    return %c0_i32, %c0_i32_0 : i32, i32
  }
  func.func @transform_26(%arg0: i32) -> (i32, i32) {
    %c0_i32 = arith.constant 0 : i32
    %c0_i32_0 = arith.constant 0 : i32
    return %arg0, %c0_i32 : i32, i32
  }
  func.func @transform_27(%arg0: i32) -> (i32, i32) {
    %c0_i32 = arith.constant 0 : i32
    %c0_i32_0 = arith.constant 0 : i32
    return %arg0, %c0_i32 : i32, i32
  }
}

</mosaic_0001>

<llo_original>
// kernel: tpu_custom_call.1
$region0: #{tpu_custom_call.1}
  #allocation0 [shape = 'u32[]', space=smem, size = 0x4, offset = 0x4, fixed_abs, tag = 'smem constant byte address 0x4 - core index']
  #allocation1 [shape = 'u32[72,128]{1,0:T(1,128)}', space=vmem, size = 0x9000, scoped, tag = 'internal scratch']
  #allocation2 [shape = 'f32[1,1]{1,0:T(1,128)S(1)}', space=vmem, size = 0x200, scoped, tag = 'scoped memory for tpu_custom_call.1']
  %s0 = inlined_call_operand.vmem [shape: f32[32,1], index: 0, kind: input, shape index: {}]
  %s1 = inlined_call_operand.vmem [shape: f32[7,1,4], index: 1, kind: input, shape index: {}]
  %s2 = inlined_call_operand.vmem [shape: f32[1,4], index: 2, kind: input, shape index: {}]
  %s3 = inlined_call_operand.vmem [shape: bf16[20,8], index: 3, kind: input, shape index: {}]
  %s4 = inlined_call_operand.vmem [shape: f32[1,8], index: 4, kind: input, shape index: {}]
  %s5 = inlined_call_operand.vmem [shape: bf16[24,16], index: 5, kind: input, shape index: {}]
  %s6 = inlined_call_operand.vmem [shape: f32[1,16], index: 6, kind: input, shape index: {}]
  %s7 = inlined_call_operand.vmem [shape: f32[1,16], index: 7, kind: input, shape index: {}]
  %s8 = inlined_call_operand.vmem [shape: f32[1,16], index: 8, kind: input, shape index: {}]
  %s9 = inlined_call_operand.vmem [shape: bf16[4,32,16], index: 9, kind: input, shape index: {}]
  %s10 = inlined_call_operand.vmem [shape: f32[4,1,16], index: 10, kind: input, shape index: {}]
  %s11 = inlined_call_operand.vmem [shape: bf16[4,16,16], index: 11, kind: input, shape index: {}]
  %s12 = inlined_call_operand.vmem [shape: f32[4,1,16], index: 12, kind: input, shape index: {}]
  %s13 = inlined_call_operand.vmem [shape: bf16[4,16,32], index: 13, kind: input, shape index: {}]
  %s14 = inlined_call_operand.vmem [shape: f32[4,1,32], index: 14, kind: input, shape index: {}]
  %s15 = inlined_call_operand.vmem [shape: bf16[4,16,48], index: 15, kind: input, shape index: {}]
  %s16 = inlined_call_operand.vmem [shape: f32[4,1,48], index: 16, kind: input, shape index: {}]
  %s17 = inlined_call_operand.vmem [shape: bf16[32,32], index: 17, kind: input, shape index: {}]
  %s18 = inlined_call_operand.vmem [shape: f32[1,32], index: 18, kind: input, shape index: {}]
  %s19 = inlined_call_operand.vmem [shape: bf16[32,32], index: 19, kind: input, shape index: {}]
  %s20 = inlined_call_operand.vmem [shape: f32[1,32], index: 20, kind: input, shape index: {}]
  %s21 = inlined_call_operand.vmem [shape: bf16[32,17], index: 21, kind: input, shape index: {}]
  %s22 = inlined_call_operand.vmem [shape: f32[1,17], index: 22, kind: input, shape index: {}]
  %s23 = inlined_call_operand.vmem [shape: f32[1,1,17], index: 23, kind: input, shape index: {}]
  %s24 = inlined_call_operand.vmem [shape: f32[1,1,17], index: 24, kind: input, shape index: {}]
  %s25 = inlined_call_operand.<no memory space> [shape: f32[1,1], index: 25, kind: input, shape index: {}]
  %s26 = inlined_call_operand.hbm [shape: f32[2,16], index: 26, kind: output, shape index: {0}]
  %s27 = inlined_call_operand.hbm [shape: f32[2,16], index: 27, kind: output, shape index: {1}]
  %28 = xla_tuple %s26, %s27
  %s29 = sld [smem:[#allocation0]]
  $region129: #{tpu_custom_call.1} parent=0
    _
  %s31 = ssub.s32 1, %s29
  %s32 = scalar_select 0, %s31, %s29
  %v33 = vstv %s25
  %34 = vst [vmem:[#allocation2] sm:$0x1] %v33
  $region1: #{tpu_custom_call.1} parent=0
    #allocation3 [shape = 'u8[1024]{0}', space=vmem, size = 0x400, scoped, tag = 'output window, operand 0, single buffered']
    #allocation4 [shape = 's32[1]{0}', space=sflag, size = 0x4, scoped, tag = 'scoped memory for tpu_custom_call.1']
    #allocation5 [shape = 'u8[1024]{0}', space=vmem, size = 0x400, scoped, tag = 'output window, operand 1, single buffered']
    #allocation6 [shape = 's32[1]{0}', space=sflag, size = 0x4, scoped, tag = 'scoped memory for tpu_custom_call.1']
    %35 = vsyncpa [#allocation4], 0
    %36 = vsyncpa [#allocation6], 0
    // Predicated region
    $region2: #{tpu_custom_call.1} parent=1 // pred_check
      _
    $region3: #{tpu_custom_call.1} parent=1 // pred_check_branch
      %38 = sbr.rel (0) target = $region5
    $region4: #{tpu_custom_call.1} parent=1 // pred_region
      _
    $region5: #{tpu_custom_call.1} parent=1 // pred_fallthru
      _
    // Predicated region
    $region6: #{tpu_custom_call.1} parent=1 // pred_check
      _
    $region7: #{tpu_custom_call.1} parent=1 // pred_check_branch
      %40 = sbr.rel (0) target = $region9
    $region8: #{tpu_custom_call.1} parent=1 // pred_region
      _
    $region9: #{tpu_custom_call.1} parent=1 // pred_fallthru
      _
    // Predicated region
    $region10: #{tpu_custom_call.1} parent=1 // pred_check
      _
    $region11: #{tpu_custom_call.1} parent=1 // pred_check_branch
      %42 = sbr.rel (0) target = $region13
    $region12: #{tpu_custom_call.1} parent=1 // pred_region
      _
    $region13: #{tpu_custom_call.1} parent=1 // pred_fallthru
      _
    // Predicated region
    $region14: #{tpu_custom_call.1} parent=1 // pred_check
      _
    $region15: #{tpu_custom_call.1} parent=1 // pred_check_branch
      %44 = sbr.rel (0) target = $region17
    $region16: #{tpu_custom_call.1} parent=1 // pred_region
      _
    $region17: #{tpu_custom_call.1} parent=1 // pred_fallthru
      _
    // Predicated region
    $region18: #{tpu_custom_call.1} parent=1 // pred_check
      _
    $region19: #{tpu_custom_call.1} parent=1 // pred_check_branch
      %46 = sbr.rel (0) target = $region21
    $region20: #{tpu_custom_call.1} parent=1 // pred_region
      _
    $region21: #{tpu_custom_call.1} parent=1 // pred_fallthru
      _
    // Predicated region
    $region22: #{tpu_custom_call.1} parent=1 // pred_check
      _
    $region23: #{tpu_custom_call.1} parent=1 // pred_check_branch
      %48 = sbr.rel (0) target = $region25
    $region24: #{tpu_custom_call.1} parent=1 // pred_region
      _
    $region25: #{tpu_custom_call.1} parent=1 // pred_fallthru
      _
    // Predicated region
    $region26: #{tpu_custom_call.1} parent=1 // pred_check
      _
    $region27: #{tpu_custom_call.1} parent=1 // pred_check_branch
      %50 = sbr.rel (0) target = $region29
    $region28: #{tpu_custom_call.1} parent=1 // pred_region
      _
    $region29: #{tpu_custom_call.1} parent=1 // pred_fallthru
      _
    // Predicated region
    $region30: #{tpu_custom_call.1} parent=1 // pred_check
      _
    $region31: #{tpu_custom_call.1} parent=1 // pred_check_branch
      %52 = sbr.rel (0) target = $region33
    $region32: #{tpu_custom_call.1} parent=1 // pred_region
      _
    $region33: #{tpu_custom_call.1} parent=1 // pred_fallthru
      _
    // Predicated region
    $region34: #{tpu_custom_call.1} parent=1 // pred_check
      _
    $region35: #{tpu_custom_call.1} parent=1 // pred_check_branch
      %54 = sbr.rel (0) target = $region37
    $region36: #{tpu_custom_call.1} parent=1 // pred_region
      _
    $region37: #{tpu_custom_call.1} parent=1 // pred_fallthru
      _
    // Predicated region
    $region38: #{tpu_custom_call.1} parent=1 // pred_check
      _
    $region39: #{tpu_custom_call.1} parent=1 // pred_check_branch
      %56 = sbr.rel (0) target = $region41
    $region40: #{tpu_custom_call.1} parent=1 // pred_region
      _
    $region41: #{tpu_custom_call.1} parent=1 // pred_fallthru
      _
    // Predicated region
    $region42: #{tpu_custom_call.1} parent=1 // pred_check
      _
    $region43: #{tpu_custom_call.1} parent=1 // pred_check_branch
      %58 = sbr.rel (0) target = $region45
    $region44: #{tpu_custom_call.1} parent=1 // pred_region
      _
    $region45: #{tpu_custom_call.1} parent=1 // pred_fallthru
      _
    // Predicated region
    $region46: #{tpu_custom_call.1} parent=1 // pred_check
      _
    $region47: #{tpu_custom_call.1} parent=1 // pred_check_branch
      %60 = sbr.rel (0) target = $region49
    $region48: #{tpu_custom_call.1} parent=1 // pred_region
      _
    $region49: #{tpu_custom_call.1} parent=1 // pred_fallthru
      _
    // Predicated region
    $region50: #{tpu_custom_call.1} parent=1 // pred_check
      _
    $region51: #{tpu_custom_call.1} parent=1 // pred_check_branch
      %62 = sbr.rel (0) target = $region53
    $region52: #{tpu_custom_call.1} parent=1 // pred_region
      _
    $region53: #{tpu_custom_call.1} parent=1 // pred_fallthru
      _
    // Predicated region
    $region54: #{tpu_custom_call.1} parent=1 // pred_check
      _
    $region55: #{tpu_custom_call.1} parent=1 // pred_check_branch
      %64 = sbr.rel (0) target = $region57
    $region56: #{tpu_custom_call.1} parent=1 // pred_region
      _
    $region57: #{tpu_custom_call.1} parent=1 // pred_fallthru
      _
    // Predicated region
    $region58: #{tpu_custom_call.1} parent=1 // pred_check
      _
    $region59: #{tpu_custom_call.1} parent=1 // pred_check_branch
      %66 = sbr.rel (0) target = $region61
    $region60: #{tpu_custom_call.1} parent=1 // pred_region
      _
    $region61: #{tpu_custom_call.1} parent=1 // pred_fallthru
      _
    // Predicated region
    $region62: #{tpu_custom_call.1} parent=1 // pred_check
      _
    $region63: #{tpu_custom_call.1} parent=1 // pred_check_branch
      %68 = sbr.rel (0) target = $region65
    $region64: #{tpu_custom_call.1} parent=1 // pred_region
      _
    $region65: #{tpu_custom_call.1} parent=1 // pred_fallthru
      _
    // Predicated region
    $region66: #{tpu_custom_call.1} parent=1 // pred_check
      _
    $region67: #{tpu_custom_call.1} parent=1 // pred_check_branch
      %70 = sbr.rel (0) target = $region69
    $region68: #{tpu_custom_call.1} parent=1 // pred_region
      _
    $region69: #{tpu_custom_call.1} parent=1 // pred_fallthru
      _
    // Predicated region
    $region70: #{tpu_custom_call.1} parent=1 // pred_check
      _
    $region71: #{tpu_custom_call.1} parent=1 // pred_check_branch
      %72 = sbr.rel (0) target = $region73
    $region72: #{tpu_custom_call.1} parent=1 // pred_region
      _
    $region73: #{tpu_custom_call.1} parent=1 // pred_fallthru
      _
    // Predicated region
    $region74: #{tpu_custom_call.1} parent=1 // pred_check
      _
    $region75: #{tpu_custom_call.1} parent=1 // pred_check_branch
      %74 = sbr.rel (0) target = $region77
    $region76: #{tpu_custom_call.1} parent=1 // pred_region
      _
    $region77: #{tpu_custom_call.1} parent=1 // pred_fallthru
      _
    // Predicated region
    $region78: #{tpu_custom_call.1} parent=1 // pred_check
      _
    $region79: #{tpu_custom_call.1} parent=1 // pred_check_branch
      %76 = sbr.rel (0) target = $region81
    $region80: #{tpu_custom_call.1} parent=1 // pred_region
      _
    $region81: #{tpu_custom_call.1} parent=1 // pred_fallthru
      _
    // Predicated region
    $region82: #{tpu_custom_call.1} parent=1 // pred_check
      _
    $region83: #{tpu_custom_call.1} parent=1 // pred_check_branch
      %78 = sbr.rel (0) target = $region85
    $region84: #{tpu_custom_call.1} parent=1 // pred_region
      _
    $region85: #{tpu_custom_call.1} parent=1 // pred_fallthru
      _
    // Predicated region
    $region86: #{tpu_custom_call.1} parent=1 // pred_check
      _
    $region87: #{tpu_custom_call.1} parent=1 // pred_check_branch
      %80 = sbr.rel (0) target = $region89
    $region88: #{tpu_custom_call.1} parent=1 // pred_region
      _
    $region89: #{tpu_custom_call.1} parent=1 // pred_fallthru
      _
    // Predicated region
    $region90: #{tpu_custom_call.1} parent=1 // pred_check
      _
    $region91: #{tpu_custom_call.1} parent=1 // pred_check_branch
      %82 = sbr.rel (0) target = $region93
    $region92: #{tpu_custom_call.1} parent=1 // pred_region
      _
    $region93: #{tpu_custom_call.1} parent=1 // pred_fallthru
      _
    // Predicated region
    $region94: #{tpu_custom_call.1} parent=1 // pred_check
      _
    $region95: #{tpu_custom_call.1} parent=1 // pred_check_branch
      %84 = sbr.rel (0) target = $region97
    $region96: #{tpu_custom_call.1} parent=1 // pred_region
      _
    $region97: #{tpu_custom_call.1} parent=1 // pred_fallthru
      _
    // Predicated region
    $region98: #{tpu_custom_call.1} parent=1 // pred_check
      _
    $region99: #{tpu_custom_call.1} parent=1 // pred_check_branch
      %86 = sbr.rel (0) target = $region101
    $region100: #{tpu_custom_call.1} parent=1 // pred_region
      _
    $region101: #{tpu_custom_call.1} parent=1 // pred_fallthru
      _
    // Predicated region
    $region102: #{tpu_custom_call.1} parent=1 // pred_check
      _
    $region103: #{tpu_custom_call.1} parent=1 // pred_check_branch
      %88 = sbr.rel (0) target = $region105
    $region104: #{tpu_custom_call.1} parent=1 // pred_region
      _
    $region105: #{tpu_custom_call.1} parent=1 // pred_fallthru
      _
    %v90 = vld [vmem:[%s0] sm:$0xff]
    %v91 = vld [vmem:[%s0 + $0x8] sm:$0xff]
    %v92 = vld [vmem:[%s0 + $0x10] sm:$0xff]
    %v93 = vld [vmem:[%s0 + $0x18] sm:$0xff]
    %v94 = vlaneseq
    %v95 = vshrl.u32 %v94, 7
    %v96 = vadd.s32 %v95, 8
    %v97 = vadd.s32 %v95, 16
    %v98 = vadd.s32 %v95, 24
    %vm99 = vcmp.lt.s32.totalorder %v95, 0
    %v100 = vsub.s32 0, %v95
    %v101 = vsel %vm99, %v100, %v95
    %v102 = vshrl.u32 %v101, 4
    %v103 = vand.u32 %v101, 15
    %v104 = vsub.s32 0, %v103
    %v105 = vsel %vm99, %v104, %v103
    %vm106 = vcmp.lt.s32.totalorder %v96, 0
    %v107 = vsub.s32 0, %v96
    %v108 = vsel %vm106, %v107, %v96
    %v109 = vshrl.u32 %v108, 4
    %v110 = vand.u32 %v108, 15
    %v111 = vsub.s32 0, %v110
    %v112 = vsel %vm106, %v111, %v110
    %vm113 = vcmp.lt.s32.totalorder %v97, 0
    %v114 = vsub.s32 0, %v97
    %v115 = vsel %vm113, %v114, %v97
    %v116 = vshrl.u32 %v115, 4
    %v117 = vand.u32 %v115, 15
    %v118 = vsub.s32 0, %v117
    %v119 = vsel %vm113, %v118, %v117
    %vm120 = vcmp.lt.s32.totalorder %v98, 0
    %v121 = vsub.s32 0, %v98
    %v122 = vsel %vm120, %v121, %v98
    %v123 = vshrl.u32 %v122, 4
    %v124 = vand.u32 %v122, 15
    %v125 = vsub.s32 0, %v124
    %v126 = vsel %vm120, %v125, %v124
    %vm127 = vcmp.ne.s32.totalorder %v105, 0
    %vm128 = vcmp.ne.s32.totalorder %v112, 0
    %vm129 = vcmp.ne.s32.totalorder %v119, 0
    %vm130 = vcmp.ne.s32.totalorder %v126, 0
    %vm131 = vcmp.lt.s32.totalorder %v105, 0
    %vm132 = vcmp.lt.s32.totalorder %v112, 0
    %vm133 = vcmp.lt.s32.totalorder %v119, 0
    %vm134 = vcmp.lt.s32.totalorder %v126, 0
    %vm135 = vmand %vm131, %vm127
    %vm136 = vmand %vm132, %vm128
    %vm137 = vmand %vm133, %vm129
    %vm138 = vmand %vm134, %vm130
    %v139 = vadd.s32 %v105, 16
    %v140 = vadd.s32 %v112, 16
    %v141 = vadd.s32 %v119, 16
    %v142 = vadd.s32 %v126, 16
    %v143 = vsel %vm135, %v139, %v105
    %v144 = vsel %vm136, %v140, %v112
    %v145 = vsel %vm137, %v141, %v119
    %v146 = vsel %vm138, %v142, %v126
    %v147 = vrot.slane %v90, 5
    %v148 = vrot.slane %v91, 5
    %v149 = vrot.slane %v92, 5
    %v150 = vrot.slane %v93, 5
    %vm151 = vcmp.lt.s32.totalorder %v95, 3
    %v152 = vsel %vm151, %v149, %v150
    %v153 = vsel %vm151, %v148, %v149
    %v154 = vsel %vm151, %v147, %v148
    %v155 = vsel %vm151, %v150, %v147
    %vm156 = vcmp.ge.s32.totalorder %v143, 3
    %vm157 = vcmp.ge.s32.totalorder %v144, 3
    %vm158 = vcmp.ge.s32.totalorder %v145, 3
    %vm159 = vcmp.ge.s32.totalorder %v146, 3
    %v160 = vsel %vm156, %v155, 0.0
    %v161 = vsel %vm157, %v154, 0.0
    %v162 = vsel %vm158, %v153, 0.0
    %v163 = vsel %vm159, %v152, 0.0
    %v164 = vld [vmem:[%s1] sm:$0x1]
    %166 = vset.pattern.permute.xlu0 0
    %167 = vperm.xlu0 %166, %v160
    %v168 = vpop.permute.xlu0 %167
    %171 = vset.pattern.permute.xlu0 0
    %172 = vperm.xlu0 %171, %v161
    %v173 = vpop.permute.xlu0 %172
    %176 = vset.pattern.permute.xlu0 0
    %177 = vperm.xlu0 %176, %v162
    %v178 = vpop.permute.xlu0 %177
    %181 = vset.pattern.permute.xlu0 0
    %182 = vperm.xlu0 %181, %v163
    %v183 = vpop.permute.xlu0 %182
    %v186 = vperm.slane %v164, 0
    %v188 = vmul.f32 %v168, %v186
    %v189 = vmul.f32 %v173, %v186
    %v190 = vmul.f32 %v178, %v186
    %v191 = vmul.f32 %v183, %v186
    %v192 = vrot.slane %v90, 6
    %v193 = vrot.slane %v91, 6
    %v194 = vrot.slane %v92, 6
    %v195 = vrot.slane %v93, 6
    %vm196 = vcmp.lt.s32.totalorder %v95, 2
    %v197 = vsel %vm196, %v194, %v195
    %v198 = vsel %vm196, %v193, %v194
    %v199 = vsel %vm196, %v192, %v193
    %v200 = vsel %vm196, %v195, %v192
    %vm201 = vcmp.ge.s32.totalorder %v143, 2
    %vm202 = vcmp.ge.s32.totalorder %v144, 2
    %vm203 = vcmp.ge.s32.totalorder %v145, 2
    %vm204 = vcmp.ge.s32.totalorder %v146, 2
    %v205 = vsel %vm201, %v200, 0.0
    %v206 = vsel %vm202, %v199, 0.0
    %v207 = vsel %vm203, %v198, 0.0
    %v208 = vsel %vm204, %v197, 0.0
    %s209 = scalar_lea.vmem %s1, 1
    %v210 = vld [vmem:[%s209] sm:$0x1]
    %212 = vset.pattern.permute.xlu0 0
    %213 = vperm.xlu0 %212, %v205
    %v214 = vpop.permute.xlu0 %213
    %217 = vset.pattern.permute.xlu0 0
    %218 = vperm.xlu0 %217, %v206
    %v219 = vpop.permute.xlu0 %218
    %222 = vset.pattern.permute.xlu0 0
    %223 = vperm.xlu0 %222, %v207
    %v224 = vpop.permute.xlu0 %223
    %227 = vset.pattern.permute.xlu0 0
    %228 = vperm.xlu0 %227, %v208
    %v229 = vpop.permute.xlu0 %228
    %v232 = vperm.slane %v210, 0
    %v234 = vmul.f32 %v214, %v232
    %v235 = vmul.f32 %v219, %v232
    %v236 = vmul.f32 %v224, %v232
    %v237 = vmul.f32 %v229, %v232
    %v238 = vadd.f32 %v188, %v234
    %v239 = vadd.f32 %v189, %v235
    %v240 = vadd.f32 %v190, %v236
    %v241 = vadd.f32 %v191, %v237
    %v242 = vrot.slane %v90, 7
    %v243 = vrot.slane %v91, 7
    %v244 = vrot.slane %v92, 7
    %v245 = vrot.slane %v93, 7
    %vm246 = vcmp.lt.s32.totalorder %v95, 1
    %v247 = vsel %vm246, %v244, %v245
    %v248 = vsel %vm246, %v243, %v244
    %v249 = vsel %vm246, %v242, %v243
    %v250 = vsel %vm246, %v245, %v242
    %vm251 = vcmp.ge.s32.totalorder %v143, 1
    %vm252 = vcmp.ge.s32.totalorder %v144, 1
    %vm253 = vcmp.ge.s32.totalorder %v145, 1
    %vm254 = vcmp.ge.s32.totalorder %v146, 1
    %v255 = vsel %vm251, %v250, 0.0
    %v256 = vsel %vm252, %v249, 0.0
    %v257 = vsel %vm253, %v248, 0.0
    %v258 = vsel %vm254, %v247, 0.0
    %s259 = scalar_lea.vmem %s1, 2
    %v260 = vld [vmem:[%s259] sm:$0x1]
    %262 = vset.pattern.permute.xlu0 0
    %263 = vperm.xlu0 %262, %v255
    %v264 = vpop.permute.xlu0 %263
    %267 = vset.pattern.permute.xlu0 0
    %268 = vperm.xlu0 %267, %v256
    %v269 = vpop.permute.xlu0 %268
    %272 = vset.pattern.permute.xlu0 0
    %273 = vperm.xlu0 %272, %v257
    %v274 = vpop.permute.xlu0 %273
    %277 = vset.pattern.permute.xlu0 0
    %278 = vperm.xlu0 %277, %v258
    %v279 = vpop.permute.xlu0 %278
    %v282 = vperm.slane %v260, 0
    %v284 = vmul.f32 %v264, %v282
    %v285 = vmul.f32 %v269, %v282
    %v286 = vmul.f32 %v274, %v282
    %v287 = vmul.f32 %v279, %v282
    %v288 = vadd.f32 %v238, %v284
    %v289 = vadd.f32 %v239, %v285
    %v290 = vadd.f32 %v240, %v286
    %v291 = vadd.f32 %v241, %v287
    %s292 = scalar_lea.vmem %s1, 3
    %v293 = vld [vmem:[%s292] sm:$0x1]
    %295 = vset.pattern.permute.xlu0 0
    %296 = vperm.xlu0 %295, %v90
    %v297 = vpop.permute.xlu0 %296
    %300 = vset.pattern.permute.xlu0 0
    %301 = vperm.xlu0 %300, %v91
    %v302 = vpop.permute.xlu0 %301
    %305 = vset.pattern.permute.xlu0 0
    %306 = vperm.xlu0 %305, %v92
    %v307 = vpop.permute.xlu0 %306
    %310 = vset.pattern.permute.xlu0 0
    %311 = vperm.xlu0 %310, %v93
    %v312 = vpop.permute.xlu0 %311
    %v315 = vperm.slane %v293, 0
    %v317 = vmul.f32 %v297, %v315
    %v318 = vmul.f32 %v302, %v315
    %v319 = vmul.f32 %v307, %v315
    %v320 = vmul.f32 %v312, %v315
    %v321 = vadd.f32 %v288, %v317
    %v322 = vadd.f32 %v289, %v318
    %v323 = vadd.f32 %v290, %v319
    %v324 = vadd.f32 %v291, %v320
    %v325 = vrot.slane %v90, 1
    %v326 = vrot.slane %v91, 1
    %v327 = vrot.slane %v92, 1
    %v328 = vrot.slane %v93, 1
    %vm329 = vcmp.lt.s32.totalorder %v95, 7
    %v330 = vsel %vm329, %v327, %v328
    %v331 = vsel %vm329, %v326, %v327
    %v332 = vsel %vm329, %v325, %v326
    %v333 = vsel %vm329, %v328, %v325
    %vm334 = vcmp.lt.s32.totalorder %v143, 15
    %vm335 = vcmp.lt.s32.totalorder %v144, 15
    %vm336 = vcmp.lt.s32.totalorder %v145, 15
    %vm337 = vcmp.lt.s32.totalorder %v146, 15
    %v338 = vsel %vm334, %v332, 0.0
    %v339 = vsel %vm335, %v331, 0.0
    %v340 = vsel %vm336, %v330, 0.0
    %v341 = vsel %vm337, %v333, 0.0
    %s342 = scalar_lea.vmem %s1, 4
    %v343 = vld [vmem:[%s342] sm:$0x1]
    %345 = vset.pattern.permute.xlu0 0
    %346 = vperm.xlu0 %345, %v338
    %v347 = vpop.permute.xlu0 %346
    %350 = vset.pattern.permute.xlu0 0
    %351 = vperm.xlu0 %350, %v339
    %v352 = vpop.permute.xlu0 %351
    %355 = vset.pattern.permute.xlu0 0
    %356 = vperm.xlu0 %355, %v340
    %v357 = vpop.permute.xlu0 %356
    %360 = vset.pattern.permute.xlu0 0
    %361 = vperm.xlu0 %360, %v341
    %v362 = vpop.permute.xlu0 %361
    %v365 = vperm.slane %v343, 0
    %v367 = vmul.f32 %v347, %v365
    %v368 = vmul.f32 %v352, %v365
    %v369 = vmul.f32 %v357, %v365
    %v370 = vmul.f32 %v362, %v365
    %v371 = vadd.f32 %v321, %v367
    %v372 = vadd.f32 %v322, %v368
    %v373 = vadd.f32 %v323, %v369
    %v374 = vadd.f32 %v324, %v370
    %v375 = vrot.slane %v90, 2
    %v376 = vrot.slane %v91, 2
    %v377 = vrot.slane %v92, 2
    %v378 = vrot.slane %v93, 2
    %vm379 = vcmp.lt.s32.totalorder %v95, 6
    %v380 = vsel %vm379, %v377, %v378
    %v381 = vsel %vm379, %v376, %v377
    %v382 = vsel %vm379, %v375, %v376
    %v383 = vsel %vm379, %v378, %v375
    %vm384 = vcmp.lt.s32.totalorder %v143, 14
    %vm385 = vcmp.lt.s32.totalorder %v144, 14
    %vm386 = vcmp.lt.s32.totalorder %v145, 14
    %vm387 = vcmp.lt.s32.totalorder %v146, 14
    %v388 = vsel %vm384, %v382, 0.0
    %v389 = vsel %vm385, %v381, 0.0
    %v390 = vsel %vm386, %v380, 0.0
    %v391 = vsel %vm387, %v383, 0.0
    %s392 = scalar_lea.vmem %s1, 5
    %v393 = vld [vmem:[%s392] sm:$0x1]
    %395 = vset.pattern.permute.xlu0 0
    %396 = vperm.xlu0 %395, %v388
    %v397 = vpop.permute.xlu0 %396
    %400 = vset.pattern.permute.xlu0 0
    %401 = vperm.xlu0 %400, %v389
    %v402 = vpop.permute.xlu0 %401
    %405 = vset.pattern.permute.xlu0 0
    %406 = vperm.xlu0 %405, %v390
    %v407 = vpop.permute.xlu0 %406
    %410 = vset.pattern.permute.xlu0 0
    %411 = vperm.xlu0 %410, %v391
    %v412 = vpop.permute.xlu0 %411
    %v415 = vperm.slane %v393, 0
    %v417 = vmul.f32 %v397, %v415
    %v418 = vmul.f32 %v402, %v415
    %v419 = vmul.f32 %v407, %v415
    %v420 = vmul.f32 %v412, %v415
    %v421 = vadd.f32 %v371, %v417
    %v422 = vadd.f32 %v372, %v418
    %v423 = vadd.f32 %v373, %v419
    %v424 = vadd.f32 %v374, %v420
    %v425 = vrot.slane %v90, 3
    %v426 = vrot.slane %v91, 3
    %v427 = vrot.slane %v92, 3
    %v428 = vrot.slane %v93, 3
    %vm429 = vcmp.lt.s32.totalorder %v95, 5
    %v430 = vsel %vm429, %v427, %v428
    %v431 = vsel %vm429, %v426, %v427
    %v432 = vsel %vm429, %v425, %v426
    %v433 = vsel %vm429, %v428, %v425
    %vm434 = vcmp.lt.s32.totalorder %v143, 13
    %vm435 = vcmp.lt.s32.totalorder %v144, 13
    %vm436 = vcmp.lt.s32.totalorder %v145, 13
    %vm437 = vcmp.lt.s32.totalorder %v146, 13
    %v438 = vsel %vm434, %v432, 0.0
    %v439 = vsel %vm435, %v431, 0.0
    %v440 = vsel %vm436, %v430, 0.0
    %v441 = vsel %vm437, %v433, 0.0
    %s442 = scalar_lea.vmem %s1, 6
    %v443 = vld [vmem:[%s442] sm:$0x1]
    %445 = vset.pattern.permute.xlu0 0
    %446 = vperm.xlu0 %445, %v438
    %v447 = vpop.permute.xlu0 %446
    %450 = vset.pattern.permute.xlu0 0
    %451 = vperm.xlu0 %450, %v439
    %v452 = vpop.permute.xlu0 %451
    %455 = vset.pattern.permute.xlu0 0
    %456 = vperm.xlu0 %455, %v440
    %v457 = vpop.permute.xlu0 %456
    %460 = vset.pattern.permute.xlu0 0
    %461 = vperm.xlu0 %460, %v441
    %v462 = vpop.permute.xlu0 %461
    %v465 = vperm.slane %v443, 0
    %v467 = vmul.f32 %v447, %v465
    %v468 = vmul.f32 %v452, %v465
    %v469 = vmul.f32 %v457, %v465
    %v470 = vmul.f32 %v462, %v465
    %v471 = vadd.f32 %v421, %v467
    %v472 = vadd.f32 %v422, %v468
    %v473 = vadd.f32 %v423, %v469
    %v474 = vadd.f32 %v424, %v470
    %v475 = vld [vmem:[%s2] sm:$0x1]
    %v477 = vperm.slane %v475, 0
    %v479 = vadd.f32 %v471, %v477
    %v480 = vadd.f32 %v472, %v477
    %v481 = vadd.f32 %v473, %v477
    %v482 = vadd.f32 %v474, %v477
    %v483 = vmax.f32 %v479, 0.0
    %v484 = vmax.f32 %v480, 0.0
    %v485 = vmax.f32 %v481, 0.0
    %v486 = vmax.f32 %v482, 0.0
    %v487 = vrot.slane %v483, 6
    %v488 = vrot.slane %v484, 6
    %v489 = vrot.slane %v485, 6
    %v490 = vrot.slane %v486, 6
    %v491 = vsel %vm196, %v489, %v490
    %v492 = vsel %vm196, %v488, %v489
    %v493 = vsel %vm196, %v487, %v488
    %v494 = vsel %vm196, %v490, %v487
    %v495 = vsel %vm201, 1, 0
    %v496 = vsel %vm202, 1, 0
    %v497 = vsel %vm203, 1, 0
    %v498 = vsel %vm204, 1, 0
    %vm499 = vcmp.eq.s32.totalorder %v495, 1
    %vm500 = vcmp.eq.s32.totalorder %v496, 1
    %vm501 = vcmp.eq.s32.totalorder %v497, 1
    %vm502 = vcmp.eq.s32.totalorder %v498, 1
    %v503 = vsel %vm499, %v494, 0.0
    %v504 = vsel %vm500, %v493, 0.0
    %v505 = vsel %vm501, %v492, 0.0
    %v506 = vsel %vm502, %v491, 0.0
    %v507 = vrot.slane %v483, 7
    %v508 = vrot.slane %v484, 7
    %v509 = vrot.slane %v485, 7
    %v510 = vrot.slane %v486, 7
    %v511 = vsel %vm246, %v509, %v510
    %v512 = vsel %vm246, %v508, %v509
    %v513 = vsel %vm246, %v507, %v508
    %v514 = vsel %vm246, %v510, %v507
    %v515 = vsel %vm251, 1, 0
    %v516 = vsel %vm252, 1, 0
    %v517 = vsel %vm253, 1, 0
    %v518 = vsel %vm254, 1, 0
    %vm519 = vcmp.eq.s32.totalorder %v515, 1
    %vm520 = vcmp.eq.s32.totalorder %v516, 1
    %vm521 = vcmp.eq.s32.totalorder %v517, 1
    %vm522 = vcmp.eq.s32.totalorder %v518, 1
    %v523 = vsel %vm519, %v514, 0.0
    %v524 = vsel %vm520, %v513, 0.0
    %v525 = vsel %vm521, %v512, 0.0
    %v526 = vsel %vm522, %v511, 0.0
    %v527 = vrot.slane %v483, 1
    %v528 = vrot.slane %v484, 1
    %v529 = vrot.slane %v485, 1
    %v530 = vrot.slane %v486, 1
    %v531 = vsel %vm329, %v529, %v530
    %v532 = vsel %vm329, %v528, %v529
    %v533 = vsel %vm329, %v527, %v528
    %v534 = vsel %vm329, %v530, %v527
    %v535 = vsel %vm334, 1, 0
    %v536 = vsel %vm335, 1, 0
    %v537 = vsel %vm336, 1, 0
    %v538 = vsel %vm337, 1, 0
    %vm539 = vcmp.eq.s32.totalorder %v535, 1
    %vm540 = vcmp.eq.s32.totalorder %v536, 1
    %vm541 = vcmp.eq.s32.totalorder %v537, 1
    %vm542 = vcmp.eq.s32.totalorder %v538, 1
    %v543 = vsel %vm539, %v533, 0.0
    %v544 = vsel %vm540, %v532, 0.0
    %v545 = vsel %vm541, %v531, 0.0
    %v546 = vsel %vm542, %v534, 0.0
    %v547 = vrot.slane %v483, 2
    %v548 = vrot.slane %v484, 2
    %v549 = vrot.slane %v485, 2
    %v550 = vrot.slane %v486, 2
    %v551 = vsel %vm379, %v549, %v550
    %v552 = vsel %vm379, %v548, %v549
    %v553 = vsel %vm379, %v547, %v548
    %v554 = vsel %vm379, %v550, %v547
    %v555 = vsel %vm384, 1, 0
    %v556 = vsel %vm385, 1, 0
    %v557 = vsel %vm386, 1, 0
    %v558 = vsel %vm387, 1, 0
    %vm559 = vcmp.eq.s32.totalorder %v555, 1
    %vm560 = vcmp.eq.s32.totalorder %v556, 1
    %vm561 = vcmp.eq.s32.totalorder %v557, 1
    %vm562 = vcmp.eq.s32.totalorder %v558, 1
    %v563 = vsel %vm559, %v553, 0.0
    %v564 = vsel %vm560, %v552, 0.0
    %v565 = vsel %vm561, %v551, 0.0
    %v566 = vsel %vm562, %v554, 0.0
    %571 = vrot.lane.b32.xlu0 %v523, 4
    %v572 = vpop.permute.xlu0 %571
    %573 = vrot.lane.b32.xlu0 %v524, 4
    %v574 = vpop.permute.xlu0 %573
    %575 = vrot.lane.b32.xlu0 %v525, 4
    %v576 = vpop.permute.xlu0 %575
    %577 = vrot.lane.b32.xlu0 %v526, 4
    %v578 = vpop.permute.xlu0 %577
    %587 = vrot.lane.b32.xlu0 %v483, 8
    %v588 = vpop.permute.xlu0 %587
    %589 = vrot.lane.b32.xlu0 %v484, 8
    %v590 = vpop.permute.xlu0 %589
    %591 = vrot.lane.b32.xlu0 %v485, 8
    %v592 = vpop.permute.xlu0 %591
    %593 = vrot.lane.b32.xlu0 %v486, 8
    %v594 = vpop.permute.xlu0 %593
    %603 = vrot.lane.b32.xlu0 %v543, 12
    %v604 = vpop.permute.xlu0 %603
    %605 = vrot.lane.b32.xlu0 %v544, 12
    %v606 = vpop.permute.xlu0 %605
    %607 = vrot.lane.b32.xlu0 %v545, 12
    %v608 = vpop.permute.xlu0 %607
    %609 = vrot.lane.b32.xlu0 %v546, 12
    %v610 = vpop.permute.xlu0 %609
    %619 = vrot.lane.b32.xlu0 %v563, 16
    %v620 = vpop.permute.xlu0 %619
    %621 = vrot.lane.b32.xlu0 %v564, 16
    %v622 = vpop.permute.xlu0 %621
    %623 = vrot.lane.b32.xlu0 %v565, 16
    %v624 = vpop.permute.xlu0 %623
    %625 = vrot.lane.b32.xlu0 %v566, 16
    %v626 = vpop.permute.xlu0 %625
    %vm631 = vcmask 31744
    %v632 = vsel %vm631, %v503, %v572
    %v633 = vsel %vm631, %v504, %v574
    %v634 = vsel %vm631, %v505, %v576
    %v635 = vsel %vm631, %v506, %v578
    %vm636 = vcmask 64512
    %v637 = vsel %vm636, %v632, %v588
    %v638 = vsel %vm636, %v633, %v590
    %v639 = vsel %vm636, %v634, %v592
    %v640 = vsel %vm636, %v635, %v594
    %vm641 = vcmask 97280
    %v642 = vsel %vm641, %v637, %v604
    %v643 = vsel %vm641, %v638, %v606
    %v644 = vsel %vm641, %v639, %v608
    %v645 = vsel %vm641, %v640, %v610
    %vm646 = vcmask 130048
    %v647 = vsel %vm646, %v642, %v620
    %v648 = vsel %vm646, %v643, %v622
    %v649 = vsel %vm646, %v644, %v624
    %v650 = vsel %vm646, %v645, %v626
    %v651 = vld [vmem:[%s3] sm:$0xf]
    %v652 = vld [vmem:[%s3 + $0x4] sm:$0xf]
    %v653 = vld [vmem:[%s3 + $0x8] sm:$0x3]
    %v654 = vpack.c.bf16 %v648, %v647
    %v655 = vpack.c.bf16 %v650, %v649
    %v656 = vld [vmem:[%s4] sm:$0x1]
    %v658 = vperm.slane %v656, 0
    %v663 = vunpack.c.l.b16 %v651
    %v664 = vunpack.c.l.b16 %v652
    %v665 = vunpack.c.l.b16 %v653
    %v666 = vpack.c.b16 %v664, %v663
    %v667 = vpack.c.b16 %v665, %v665
    %vm669 = vcmask 162816
    %v671 = vsel %vm669, %v654, 0
    %v674 = vsel %vm669, %v655, 0
    %vm676 = vcmask 1041408
    %v678 = vsel %vm676, %v667, 0
    %680 = vmatpush.bf16.msra.mxu0 0
    %681 = vmatpush.bf16.msra.mxu0 0
    %682 = vmatpush.bf16.msra.mxu0 0
    %683 = vmatpush.bf16.msra.mxu0 0
    %684 = vmatpush.bf16.msra.mxu0 0
    %685 = vmatpush.bf16.msra.mxu0 0
    %686 = vmatpush.bf16.msra.mxu0 %v678
    %687 = vmatpush.bf16.msra.mxu0 %v666
    %688 = vmatmul.bf16.gmra.mxu0 %v671
    %v689 = vpop.f32.mrf.mxu0
    %v690 = vadd.f32 %v658, %v689
    %v691 = vpop.f32.mrf.mxu0
    %v692 = vadd.f32 %v658, %v691
    %693 = vmatmul.bf16.gmra.mxu0 %v674
    %v694 = vpop.f32.mrf.mxu0
    %v695 = vadd.f32 %v658, %v694
    %v696 = vpop.f32.mrf.mxu0
    %v697 = vadd.f32 %v658, %v696
    %698 = vdwg.mxu0
    %v699 = vmax.f32 %v690, 0.0
    %v700 = vmax.f32 %v692, 0.0
    %v701 = vmax.f32 %v695, 0.0
    %v702 = vmax.f32 %v697, 0.0
    %v703 = vrot.slane %v699, 7
    %v704 = vrot.slane %v700, 7
    %v705 = vrot.slane %v701, 7
    %v706 = vrot.slane %v702, 7
    %v707 = vsel %vm246, %v705, %v706
    %v708 = vsel %vm246, %v704, %v705
    %v709 = vsel %vm246, %v703, %v704
    %v710 = vsel %vm246, %v706, %v703
    %v711 = vsel %vm519, %v710, 0.0
    %v712 = vsel %vm520, %v709, 0.0
    %v713 = vsel %vm521, %v708, 0.0
    %v714 = vsel %vm522, %v707, 0.0
    %v715 = vrot.slane %v699, 1
    %v716 = vrot.slane %v700, 1
    %v717 = vrot.slane %v701, 1
    %v718 = vrot.slane %v702, 1
    %v719 = vsel %vm329, %v717, %v718
    %v720 = vsel %vm329, %v716, %v717
    %v721 = vsel %vm329, %v715, %v716
    %v722 = vsel %vm329, %v718, %v715
    %v723 = vsel %vm539, %v721, 0.0
    %v724 = vsel %vm540, %v720, 0.0
    %v725 = vsel %vm541, %v719, 0.0
    %v726 = vsel %vm542, %v722, 0.0
    %731 = vrot.lane.b32.xlu0 %v699, 8
    %v732 = vpop.permute.xlu0 %731
    %733 = vrot.lane.b32.xlu0 %v700, 8
    %v734 = vpop.permute.xlu0 %733
    %735 = vrot.lane.b32.xlu0 %v701, 8
    %v736 = vpop.permute.xlu0 %735
    %737 = vrot.lane.b32.xlu0 %v702, 8
    %v738 = vpop.permute.xlu0 %737
    %747 = vrot.lane.b32.xlu0 %v723, 16
    %v748 = vpop.permute.xlu0 %747
    %749 = vrot.lane.b32.xlu0 %v724, 16
    %v750 = vpop.permute.xlu0 %749
    %751 = vrot.lane.b32.xlu0 %v725, 16
    %v752 = vpop.permute.xlu0 %751
    %753 = vrot.lane.b32.xlu0 %v726, 16
    %v754 = vpop.permute.xlu0 %753
    %v759 = vsel %vm636, %v711, %v732
    %v760 = vsel %vm636, %v712, %v734
    %v761 = vsel %vm636, %v713, %v736
    %v762 = vsel %vm636, %v714, %v738
    %v763 = vsel %vm646, %v759, %v748
    %v764 = vsel %vm646, %v760, %v750
    %v765 = vsel %vm646, %v761, %v752
    %v766 = vsel %vm646, %v762, %v754
    %v767 = vld [vmem:[%s5] sm:$0xf]
    %v768 = vld [vmem:[%s5 + $0x4] sm:$0xf]
    %v769 = vld [vmem:[%s5 + $0x8] sm:$0xf]
    %v770 = vpack.c.bf16 %v764, %v763
    %v771 = vpack.c.bf16 %v766, %v765
    %v772 = vld [vmem:[%s6] sm:$0x1]
    %v774 = vperm.slane %v772, 0
    %v779 = vunpack.c.l.b16 %v767
    %v780 = vunpack.c.l.b16 %v768
    %v781 = vunpack.c.l.b16 %v769
    %v782 = vpack.c.b16 %v780, %v779
    %v783 = vpack.c.b16 %v781, %v781
    %vm785 = vcmask 195584
    %v787 = vsel %vm785, %v770, 0
    %v790 = vsel %vm785, %v771, 0
    %vm792 = vcmask 1043456
    %v794 = vsel %vm792, %v783, 0
    %796 = vmatpush.bf16.msra.mxu0 0
    %797 = vmatpush.bf16.msra.mxu0 0
    %798 = vmatpush.bf16.msra.mxu0 0
    %799 = vmatpush.bf16.msra.mxu0 0
    %800 = vmatpush.bf16.msra.mxu0 0
    %801 = vmatpush.bf16.msra.mxu0 0
    %802 = vmatpush.bf16.msra.mxu0 %v794
    %803 = vmatpush.bf16.msra.mxu0 %v782
    %804 = vmatmul.bf16.gmra.mxu0 %v787
    %v805 = vpop.f32.mrf.mxu0
    %v806 = vadd.f32 %v774, %v805
    %v807 = vpop.f32.mrf.mxu0
    %v808 = vadd.f32 %v774, %v807
    %809 = vmatmul.bf16.gmra.mxu0 %v790
    %v810 = vpop.f32.mrf.mxu0
    %v811 = vadd.f32 %v774, %v810
    %v812 = vpop.f32.mrf.mxu0
    %v813 = vadd.f32 %v774, %v812
    %814 = vdwg.mxu0
    %v815 = vmax.f32 %v806, 0.0
    %v816 = vmax.f32 %v808, 0.0
    %v817 = vmax.f32 %v811, 0.0
    %v818 = vmax.f32 %v813, 0.0
    %v819 = vpack.c.bf16 %v816, %v815
    %v820 = vpack.c.bf16 %v818, %v817
    %v821 = vld [vmem:[%s7] sm:$0x1]
    %v823 = vperm.slane %v821, 0
    %v825 = vmul.f32 %v297, %v823
    %v826 = vmul.f32 %v302, %v823
    %v827 = vmul.f32 %v307, %v823
    %v828 = vmul.f32 %v312, %v823
    %v829 = vld [vmem:[%s8] sm:$0x1]
    %v831 = vperm.slane %v829, 0
    %v833 = vadd.f32 %v825, %v831
    %v834 = vadd.f32 %v826, %v831
    %v835 = vadd.f32 %v827, %v831
    %v836 = vadd.f32 %v828, %v831
    loop: start=0, step=1, limit=2
    $region106: #{tpu_custom_call.1} parent=1 // loop_pre_header
      _
    $region107: #{tpu_custom_call.1} parent=1 // loop_header
      %s838 = sphi 0, %s842
      %p839 = scmp.ge.s32.totalorder %s838, 2
      %v843 = vphi %v833, %v1524
      %v844 = vphi %v834, %v1525
      %v845 = vphi %v835, %v1526
      %v846 = vphi %v836, %v1527
      %v847 = vphi 0.0, %v1504
      %v848 = vphi 0.0, %v1505
      %v849 = vphi 0.0, %v1506
      %v850 = vphi 0.0, %v1507
    $region108: #{tpu_custom_call.1} parent=1 // loop_header_branch
      %841 = sbr.rel (%p839) target = $region112
    $region109: #{tpu_custom_call.1} parent=1 // loop_body
      %s851 = smul.u32 %s838, 2
      %v852 = vrot.slane %v843, 7
      %v853 = vrot.slane %v844, 7
      %v854 = vrot.slane %v845, 7
      %v855 = vrot.slane %v846, 7
      %v856 = vsel %vm246, %v854, %v855
      %v857 = vsel %vm246, %v853, %v854
      %v858 = vsel %vm246, %v852, %v853
      %v859 = vsel %vm246, %v855, %v852
      %v860 = vsel %vm519, %v859, 0.0
      %v861 = vsel %vm520, %v858, 0.0
      %v862 = vsel %vm521, %v857, 0.0
      %v863 = vsel %vm522, %v856, 0.0
      %868 = vrot.lane.b32.xlu0 %v843, 16
      %v869 = vpop.permute.xlu0 %868
      %870 = vrot.lane.b32.xlu0 %v844, 16
      %v871 = vpop.permute.xlu0 %870
      %872 = vrot.lane.b32.xlu0 %v845, 16
      %v873 = vpop.permute.xlu0 %872
      %874 = vrot.lane.b32.xlu0 %v846, 16
      %v875 = vpop.permute.xlu0 %874
      %v880 = vsel %vm646, %v860, %v869
      %v881 = vsel %vm646, %v861, %v871
      %v882 = vsel %vm646, %v862, %v873
      %v883 = vsel %vm646, %v863, %v875
      %v884 = vpack.c.bf16 %v881, %v880
      %v885 = vpack.c.bf16 %v883, %v882
      %s886 = smul.u32 %s851, 4
      %s887 = smul.addr %s886, 4
      %s888 = scalar_lea.vmem %s9, %s887
      %v889 = vld [vmem:[%s888] sm:$0xf]
      %v890 = vld [vmem:[%s888 + $0x4] sm:$0xf]
      %v891 = vld [vmem:[%s888 + $0x8] sm:$0xf]
      %v892 = vld [vmem:[%s888 + $0xc] sm:$0xf]
      %s893 = scalar_lea.vmem %s10, %s851
      %v894 = vld [vmem:[%s893] sm:$0x1]
      %v896 = vperm.slane %v894, 0
      %v902 = vunpack.c.l.b16 %v889
      %v903 = vunpack.c.l.b16 %v890
      %v904 = vunpack.c.l.b16 %v891
      %v905 = vunpack.c.l.b16 %v892
      %v906 = vpack.c.b16 %v903, %v902
      %v907 = vpack.c.b16 %v905, %v904
      %vm910 = vcmask 261120
      %v912 = vsel %vm910, %v884, 0
      %v915 = vsel %vm910, %v885, 0
      %917 = vmatpush.bf16.msra.mxu0 0
      %918 = vmatpush.bf16.msra.mxu0 0
      %919 = vmatpush.bf16.msra.mxu0 0
      %920 = vmatpush.bf16.msra.mxu0 0
      %921 = vmatpush.bf16.msra.mxu0 0
      %922 = vmatpush.bf16.msra.mxu0 0
      %923 = vmatpush.bf16.msra.mxu0 %v907
      %924 = vmatpush.bf16.msra.mxu0 %v906
      %925 = vmatmul.bf16.gmra.mxu0 %v912
      %v926 = vpop.f32.mrf.mxu0
      %v927 = vadd.f32 %v896, %v926
      %v928 = vpop.f32.mrf.mxu0
      %v929 = vadd.f32 %v896, %v928
      %930 = vmatmul.bf16.gmra.mxu0 %v915
      %v931 = vpop.f32.mrf.mxu0
      %v932 = vadd.f32 %v896, %v931
      %v933 = vpop.f32.mrf.mxu0
      %v934 = vadd.f32 %v896, %v933
      %935 = vdwg.mxu0
      %s936 = smul.u32 %s851, 2
      %s937 = smul.addr %s936, 4
      %s938 = scalar_lea.vmem %s11, %s937
      %v939 = vld [vmem:[%s938] sm:$0xf]
      %v940 = vld [vmem:[%s938 + $0x4] sm:$0xf]
      %v943 = vunpack.c.l.b16 %v939
      %v944 = vunpack.c.l.b16 %v940
      %v945 = vpack.c.b16 %v944, %v943
      %v948 = vsel %vm646, %v819, 0
      %v951 = vsel %vm646, %v820, 0
      %953 = vmatpush.bf16.msra.mxu0 0
      %954 = vmatpush.bf16.msra.mxu0 0
      %955 = vmatpush.bf16.msra.mxu0 0
      %956 = vmatpush.bf16.msra.mxu0 0
      %957 = vmatpush.bf16.msra.mxu0 0
      %958 = vmatpush.bf16.msra.mxu0 0
      %959 = vmatpush.bf16.msra.mxu0 0
      %960 = vmatpush.bf16.msra.mxu0 %v945
      %961 = vmatmul.bf16.gmra.mxu0 %v948
      %v962 = vpop.f32.mrf.mxu0
      %v963 = vadd.f32 0.0, %v962
      %v964 = vpop.f32.mrf.mxu0
      %v965 = vadd.f32 0.0, %v964
      %966 = vmatmul.bf16.gmra.mxu0 %v951
      %v967 = vpop.f32.mrf.mxu0
      %v968 = vadd.f32 0.0, %v967
      %v969 = vpop.f32.mrf.mxu0
      %v970 = vadd.f32 0.0, %v969
      %971 = vdwg.mxu0
      %v972 = vadd.f32 %v927, %v963
      %v973 = vadd.f32 %v929, %v965
      %v974 = vadd.f32 %v932, %v968
      %v975 = vadd.f32 %v934, %v970
      %s976 = scalar_lea.vmem %s12, %s851
      %v977 = vld [vmem:[%s976] sm:$0x1]
      %v979 = vperm.slane %v977, 0
      %v981 = vadd.f32 %v972, %v979
      %v982 = vadd.f32 %v973, %v979
      %v983 = vadd.f32 %v974, %v979
      %v984 = vadd.f32 %v975, %v979
      %s985 = smul.addr %s936, 4
      %s986 = scalar_lea.vmem %s13, %s985
      %v987 = vld [vmem:[%s986] sm:$0xf]
      %v988 = vld [vmem:[%s986 + $0x4] sm:$0xf]
      %v989 = vpack.c.bf16 %v982, %v981
      %v990 = vpack.c.bf16 %v984, %v983
      %s991 = scalar_lea.vmem %s14, %s851
      %v992 = vld [vmem:[%s991] sm:$0x1]
      %v994 = vperm.slane %v992, 0
      %v998 = vunpack.c.l.b16 %v987
      %v999 = vunpack.c.l.b16 %v988
      %v1000 = vpack.c.b16 %v999, %v998
      %v1003 = vsel %vm646, %v989, 0
      %v1006 = vsel %vm646, %v990, 0
      %1008 = vmatpush.bf16.msra.mxu0 0
      %1009 = vmatpush.bf16.msra.mxu0 0
      %1010 = vmatpush.bf16.msra.mxu0 0
      %1011 = vmatpush.bf16.msra.mxu0 0
      %1012 = vmatpush.bf16.msra.mxu0 0
      %1013 = vmatpush.bf16.msra.mxu0 0
      %1014 = vmatpush.bf16.msra.mxu0 0
      %1015 = vmatpush.bf16.msra.mxu0 %v1000
      %1016 = vmatmul.bf16.gmra.mxu0 %v1003
      %v1017 = vpop.f32.mrf.mxu0
      %v1018 = vadd.f32 %v994, %v1017
      %v1019 = vpop.f32.mrf.mxu0
      %v1020 = vadd.f32 %v994, %v1019
      %1021 = vmatmul.bf16.gmra.mxu0 %v1006
      %v1022 = vpop.f32.mrf.mxu0
      %v1023 = vadd.f32 %v994, %v1022
      %v1024 = vpop.f32.mrf.mxu0
      %v1025 = vadd.f32 %v994, %v1024
      %1026 = vdwg.mxu0
      %v1027 = vtanh.pop %v1018
      %v1028 = vtanh.pop %v1020
      %v1029 = vtanh.pop %v1023
      %v1030 = vtanh.pop %v1025
      %v1031 = vxor.u32 %v1018, 2147483648
      %v1032 = vxor.u32 %v1020, 2147483648
      %v1033 = vxor.u32 %v1023, 2147483648
      %v1034 = vxor.u32 %v1025, 2147483648
      %v1035 = vmul.f32 %v1031, 1.442695
      %v1036 = vpow.pop %v1035
      %v1037 = vmul.f32 %v1032, 1.442695
      %v1038 = vpow.pop %v1037
      %v1039 = vmul.f32 %v1033, 1.442695
      %v1040 = vpow.pop %v1039
      %v1041 = vmul.f32 %v1034, 1.442695
      %v1042 = vpow.pop %v1041
      %v1043 = vadd.f32 %v1036, 1.0
      %v1044 = vadd.f32 %v1038, 1.0
      %v1045 = vadd.f32 %v1040, 1.0
      %v1046 = vadd.f32 %v1042, 1.0
      %v1047 = vrcp.pop %v1043
      %v1048 = vmul.f32 %v1043, %v1047
      %v1049 = vsub.f32 1.0, %v1048
      %v1050 = vmul.f32 %v1047, %v1049
      %v1051 = vadd.f32 %v1047, %v1050
      %vm1052 = vweird.f32 %v1043
      %vm1053 = vweird.f32 %v1047
      %vm1054 = vmor %vm1052, %vm1053
      %v1055 = vsel %vm1054, %v1047, %v1051
      %v1056 = vand.u32 2147483647, %v1043
      %vm1057 = vcmp.eq.f32.partialorder %v1056, 8.507059e+37
      %v1058 = vand.u32 %v1043, 2147483648
      %v1059 = vor.u32 1.1754944e-38, %v1058
      %v1060 = vsel %vm1057, %v1059, %v1055
      %v1061 = vmul.f32 1.0, %v1060
      %v1062 = vrcp.pop %v1044
      %v1063 = vmul.f32 %v1044, %v1062
      %v1064 = vsub.f32 1.0, %v1063
      %v1065 = vmul.f32 %v1062, %v1064
      %v1066 = vadd.f32 %v1062, %v1065
      %vm1067 = vweird.f32 %v1044
      %vm1068 = vweird.f32 %v1062
      %vm1069 = vmor %vm1067, %vm1068
      %v1070 = vsel %vm1069, %v1062, %v1066
      %v1071 = vand.u32 2147483647, %v1044
      %vm1072 = vcmp.eq.f32.partialorder %v1071, 8.507059e+37
      %v1073 = vand.u32 %v1044, 2147483648
      %v1074 = vor.u32 1.1754944e-38, %v1073
      %v1075 = vsel %vm1072, %v1074, %v1070
      %v1076 = vmul.f32 1.0, %v1075
      %v1077 = vrcp.pop %v1045
      %v1078 = vmul.f32 %v1045, %v1077
      %v1079 = vsub.f32 1.0, %v1078
      %v1080 = vmul.f32 %v1077, %v1079
      %v1081 = vadd.f32 %v1077, %v1080
      %vm1082 = vweird.f32 %v1045
      %vm1083 = vweird.f32 %v1077
      %vm1084 = vmor %vm1082, %vm1083
      %v1085 = vsel %vm1084, %v1077, %v1081
      %v1086 = vand.u32 2147483647, %v1045
      %vm1087 = vcmp.eq.f32.partialorder %v1086, 8.507059e+37
      %v1088 = vand.u32 %v1045, 2147483648
      %v1089 = vor.u32 1.1754944e-38, %v1088
      %v1090 = vsel %vm1087, %v1089, %v1085
      %v1091 = vmul.f32 1.0, %v1090
      %v1092 = vrcp.pop %v1046
      %v1093 = vmul.f32 %v1046, %v1092
      %v1094 = vsub.f32 1.0, %v1093
      %v1095 = vmul.f32 %v1092, %v1094
      %v1096 = vadd.f32 %v1092, %v1095
      %vm1097 = vweird.f32 %v1046
      %vm1098 = vweird.f32 %v1092
      %vm1099 = vmor %vm1097, %vm1098
      %v1100 = vsel %vm1099, %v1092, %v1096
      %v1101 = vand.u32 2147483647, %v1046
      %vm1102 = vcmp.eq.f32.partialorder %v1101, 8.507059e+37
      %v1103 = vand.u32 %v1046, 2147483648
      %v1104 = vor.u32 1.1754944e-38, %v1103
      %v1105 = vsel %vm1102, %v1104, %v1100
      %v1106 = vmul.f32 1.0, %v1105
      %1111 = vrot.lane.b32.xlu0 %v1061, 112
      %v1112 = vpop.permute.xlu0 %1111
      %1113 = vrot.lane.b32.xlu0 %v1076, 112
      %v1114 = vpop.permute.xlu0 %1113
      %1115 = vrot.lane.b32.xlu0 %v1091, 112
      %v1116 = vpop.permute.xlu0 %1115
      %1117 = vrot.lane.b32.xlu0 %v1106, 112
      %v1118 = vpop.permute.xlu0 %1117
      %v1123 = vmul.f32 %v1027, %v1112
      %v1124 = vmul.f32 %v1028, %v1114
      %v1125 = vmul.f32 %v1029, %v1116
      %v1126 = vmul.f32 %v1030, %v1118
      %s1127 = smul.addr %s936, 4
      %s1128 = scalar_lea.vmem %s15, %s1127
      %v1129 = vld [vmem:[%s1128] sm:$0xf]
      %v1130 = vld [vmem:[%s1128 + $0x4] sm:$0xf]
      %v1131 = vpack.c.bf16 %v1124, %v1123
      %v1132 = vpack.c.bf16 %v1126, %v1125
      %s1133 = scalar_lea.vmem %s16, %s851
      %v1134 = vld [vmem:[%s1133] sm:$0x1]
      %v1136 = vperm.slane %v1134, 0
      %v1140 = vunpack.c.l.b16 %v1129
      %v1141 = vunpack.c.l.b16 %v1130
      %v1142 = vpack.c.b16 %v1141, %v1140
      %v1145 = vsel %vm646, %v1131, 0
      %v1148 = vsel %vm646, %v1132, 0
      %1150 = vmatpush.bf16.msra.mxu0 0
      %1151 = vmatpush.bf16.msra.mxu0 0
      %1152 = vmatpush.bf16.msra.mxu0 0
      %1153 = vmatpush.bf16.msra.mxu0 0
      %1154 = vmatpush.bf16.msra.mxu0 0
      %1155 = vmatpush.bf16.msra.mxu0 0
      %1156 = vmatpush.bf16.msra.mxu0 0
      %1157 = vmatpush.bf16.msra.mxu0 %v1142
      %1158 = vmatmul.bf16.gmra.mxu0 %v1145
      %v1159 = vpop.f32.mrf.mxu0
      %v1160 = vadd.f32 %v1136, %v1159
      %v1161 = vpop.f32.mrf.mxu0
      %v1162 = vadd.f32 %v1136, %v1161
      %1163 = vmatmul.bf16.gmra.mxu0 %v1148
      %v1164 = vpop.f32.mrf.mxu0
      %v1165 = vadd.f32 %v1136, %v1164
      %v1166 = vpop.f32.mrf.mxu0
      %v1167 = vadd.f32 %v1136, %v1166
      %1168 = vdwg.mxu0
      %v1169 = vadd.f32 %v847, %v1160
      %v1170 = vadd.f32 %v848, %v1162
      %v1171 = vadd.f32 %v849, %v1165
      %v1172 = vadd.f32 %v850, %v1167
      %1177 = vrot.lane.b32.xlu0 %v1160, 96
      %v1178 = vpop.permute.xlu0 %1177
      %1179 = vrot.lane.b32.xlu0 %v1162, 96
      %v1180 = vpop.permute.xlu0 %1179
      %1181 = vrot.lane.b32.xlu0 %v1165, 96
      %v1182 = vpop.permute.xlu0 %1181
      %1183 = vrot.lane.b32.xlu0 %v1167, 96
      %v1184 = vpop.permute.xlu0 %1183
      %v1189 = vadd.f32 %v843, %v1178
      %v1190 = vadd.f32 %v844, %v1180
      %v1191 = vadd.f32 %v845, %v1182
      %v1192 = vadd.f32 %v846, %v1184
      %s1193 = sadd.s32 %s851, 1
      %v1194 = vrot.slane %v1189, 6
      %v1195 = vrot.slane %v1190, 6
      %v1196 = vrot.slane %v1191, 6
      %v1197 = vrot.slane %v1192, 6
      %v1198 = vsel %vm196, %v1196, %v1197
      %v1199 = vsel %vm196, %v1195, %v1196
      %v1200 = vsel %vm196, %v1194, %v1195
      %v1201 = vsel %vm196, %v1197, %v1194
      %v1202 = vsel %vm499, %v1201, 0.0
      %v1203 = vsel %vm500, %v1200, 0.0
      %v1204 = vsel %vm501, %v1199, 0.0
      %v1205 = vsel %vm502, %v1198, 0.0
      %1210 = vrot.lane.b32.xlu0 %v1189, 16
      %v1211 = vpop.permute.xlu0 %1210
      %1212 = vrot.lane.b32.xlu0 %v1190, 16
      %v1213 = vpop.permute.xlu0 %1212
      %1214 = vrot.lane.b32.xlu0 %v1191, 16
      %v1215 = vpop.permute.xlu0 %1214
      %1216 = vrot.lane.b32.xlu0 %v1192, 16
      %v1217 = vpop.permute.xlu0 %1216
      %v1222 = vsel %vm646, %v1202, %v1211
      %v1223 = vsel %vm646, %v1203, %v1213
      %v1224 = vsel %vm646, %v1204, %v1215
      %v1225 = vsel %vm646, %v1205, %v1217
      %v1226 = vpack.c.bf16 %v1223, %v1222
      %v1227 = vpack.c.bf16 %v1225, %v1224
      %s1228 = smul.u32 %s1193, 4
      %s1229 = smul.addr %s1228, 4
      %s1230 = scalar_lea.vmem %s9, %s1229
      %v1231 = vld [vmem:[%s1230] sm:$0xf]
      %v1232 = vld [vmem:[%s1230 + $0x4] sm:$0xf]
      %v1233 = vld [vmem:[%s1230 + $0x8] sm:$0xf]
      %v1234 = vld [vmem:[%s1230 + $0xc] sm:$0xf]
      %s1235 = scalar_lea.vmem %s10, %s1193
      %v1236 = vld [vmem:[%s1235] sm:$0x1]
      %v1238 = vperm.slane %v1236, 0
      %v1244 = vunpack.c.l.b16 %v1231
      %v1245 = vunpack.c.l.b16 %v1232
      %v1246 = vunpack.c.l.b16 %v1233
      %v1247 = vunpack.c.l.b16 %v1234
      %v1248 = vpack.c.b16 %v1245, %v1244
      %v1249 = vpack.c.b16 %v1247, %v1246
      %v1253 = vsel %vm910, %v1226, 0
      %v1256 = vsel %vm910, %v1227, 0
      %1258 = vmatpush.bf16.msra.mxu0 0
      %1259 = vmatpush.bf16.msra.mxu0 0
      %1260 = vmatpush.bf16.msra.mxu0 0
      %1261 = vmatpush.bf16.msra.mxu0 0
      %1262 = vmatpush.bf16.msra.mxu0 0
      %1263 = vmatpush.bf16.msra.mxu0 0
      %1264 = vmatpush.bf16.msra.mxu0 %v1249
      %1265 = vmatpush.bf16.msra.mxu0 %v1248
      %1266 = vmatmul.bf16.gmra.mxu0 %v1253
      %v1267 = vpop.f32.mrf.mxu0
      %v1268 = vadd.f32 %v1238, %v1267
      %v1269 = vpop.f32.mrf.mxu0
      %v1270 = vadd.f32 %v1238, %v1269
      %1271 = vmatmul.bf16.gmra.mxu0 %v1256
      %v1272 = vpop.f32.mrf.mxu0
      %v1273 = vadd.f32 %v1238, %v1272
      %v1274 = vpop.f32.mrf.mxu0
      %v1275 = vadd.f32 %v1238, %v1274
      %1276 = vdwg.mxu0
      %s1277 = smul.u32 %s1193, 2
      %s1278 = smul.addr %s1277, 4
      %s1279 = scalar_lea.vmem %s11, %s1278
      %v1280 = vld [vmem:[%s1279] sm:$0xf]
      %v1281 = vld [vmem:[%s1279 + $0x4] sm:$0xf]
      %v1284 = vunpack.c.l.b16 %v1280
      %v1285 = vunpack.c.l.b16 %v1281
      %v1286 = vpack.c.b16 %v1285, %v1284
      %1288 = vmatpush.bf16.msra.mxu0 0
      %1289 = vmatpush.bf16.msra.mxu0 0
      %1290 = vmatpush.bf16.msra.mxu0 0
      %1291 = vmatpush.bf16.msra.mxu0 0
      %1292 = vmatpush.bf16.msra.mxu0 0
      %1293 = vmatpush.bf16.msra.mxu0 0
      %1294 = vmatpush.bf16.msra.mxu0 0
      %1295 = vmatpush.bf16.msra.mxu0 %v1286
      %1296 = vmatmul.bf16.gmra.mxu0 %v948
      %v1297 = vpop.f32.mrf.mxu0
      %v1298 = vadd.f32 0.0, %v1297
      %v1299 = vpop.f32.mrf.mxu0
      %v1300 = vadd.f32 0.0, %v1299
      %1301 = vmatmul.bf16.gmra.mxu0 %v951
      %v1302 = vpop.f32.mrf.mxu0
      %v1303 = vadd.f32 0.0, %v1302
      %v1304 = vpop.f32.mrf.mxu0
      %v1305 = vadd.f32 0.0, %v1304
      %1306 = vdwg.mxu0
      %v1307 = vadd.f32 %v1268, %v1298
      %v1308 = vadd.f32 %v1270, %v1300
      %v1309 = vadd.f32 %v1273, %v1303
      %v1310 = vadd.f32 %v1275, %v1305
      %s1311 = scalar_lea.vmem %s12, %s1193
      %v1312 = vld [vmem:[%s1311] sm:$0x1]
      %v1314 = vperm.slane %v1312, 0
      %v1316 = vadd.f32 %v1307, %v1314
      %v1317 = vadd.f32 %v1308, %v1314
      %v1318 = vadd.f32 %v1309, %v1314
      %v1319 = vadd.f32 %v1310, %v1314
      %s1320 = smul.addr %s1277, 4
      %s1321 = scalar_lea.vmem %s13, %s1320
      %v1322 = vld [vmem:[%s1321] sm:$0xf]
      %v1323 = vld [vmem:[%s1321 + $0x4] sm:$0xf]
      %v1324 = vpack.c.bf16 %v1317, %v1316
      %v1325 = vpack.c.bf16 %v1319, %v1318
      %s1326 = scalar_lea.vmem %s14, %s1193
      %v1327 = vld [vmem:[%s1326] sm:$0x1]
      %v1329 = vperm.slane %v1327, 0
      %v1333 = vunpack.c.l.b16 %v1322
      %v1334 = vunpack.c.l.b16 %v1323
      %v1335 = vpack.c.b16 %v1334, %v1333
      %v1338 = vsel %vm646, %v1324, 0
      %v1341 = vsel %vm646, %v1325, 0
      %1343 = vmatpush.bf16.msra.mxu0 0
      %1344 = vmatpush.bf16.msra.mxu0 0
      %1345 = vmatpush.bf16.msra.mxu0 0
      %1346 = vmatpush.bf16.msra.mxu0 0
      %1347 = vmatpush.bf16.msra.mxu0 0
      %1348 = vmatpush.bf16.msra.mxu0 0
      %1349 = vmatpush.bf16.msra.mxu0 0
      %1350 = vmatpush.bf16.msra.mxu0 %v1335
      %1351 = vmatmul.bf16.gmra.mxu0 %v1338
      %v1352 = vpop.f32.mrf.mxu0
      %v1353 = vadd.f32 %v1329, %v1352
      %v1354 = vpop.f32.mrf.mxu0
      %v1355 = vadd.f32 %v1329, %v1354
      %1356 = vmatmul.bf16.gmra.mxu0 %v1341
      %v1357 = vpop.f32.mrf.mxu0
      %v1358 = vadd.f32 %v1329, %v1357
      %v1359 = vpop.f32.mrf.mxu0
      %v1360 = vadd.f32 %v1329, %v1359
      %1361 = vdwg.mxu0
      %v1362 = vtanh.pop %v1353
      %v1363 = vtanh.pop %v1355
      %v1364 = vtanh.pop %v1358
      %v1365 = vtanh.pop %v1360
      %v1366 = vxor.u32 %v1353, 2147483648
      %v1367 = vxor.u32 %v1355, 2147483648
      %v1368 = vxor.u32 %v1358, 2147483648
      %v1369 = vxor.u32 %v1360, 2147483648
      %v1370 = vmul.f32 %v1366, 1.442695
      %v1371 = vpow.pop %v1370
      %v1372 = vmul.f32 %v1367, 1.442695
      %v1373 = vpow.pop %v1372
      %v1374 = vmul.f32 %v1368, 1.442695
      %v1375 = vpow.pop %v1374
      %v1376 = vmul.f32 %v1369, 1.442695
      %v1377 = vpow.pop %v1376
      %v1378 = vadd.f32 %v1371, 1.0
      %v1379 = vadd.f32 %v1373, 1.0
      %v1380 = vadd.f32 %v1375, 1.0
      %v1381 = vadd.f32 %v1377, 1.0
      %v1382 = vrcp.pop %v1378
      %v1383 = vmul.f32 %v1378, %v1382
      %v1384 = vsub.f32 1.0, %v1383
      %v1385 = vmul.f32 %v1382, %v1384
      %v1386 = vadd.f32 %v1382, %v1385
      %vm1387 = vweird.f32 %v1378
      %vm1388 = vweird.f32 %v1382
      %vm1389 = vmor %vm1387, %vm1388
      %v1390 = vsel %vm1389, %v1382, %v1386
      %v1391 = vand.u32 2147483647, %v1378
      %vm1392 = vcmp.eq.f32.partialorder %v1391, 8.507059e+37
      %v1393 = vand.u32 %v1378, 2147483648
      %v1394 = vor.u32 1.1754944e-38, %v1393
      %v1395 = vsel %vm1392, %v1394, %v1390
      %v1396 = vmul.f32 1.0, %v1395
      %v1397 = vrcp.pop %v1379
      %v1398 = vmul.f32 %v1379, %v1397
      %v1399 = vsub.f32 1.0, %v1398
      %v1400 = vmul.f32 %v1397, %v1399
      %v1401 = vadd.f32 %v1397, %v1400
      %vm1402 = vweird.f32 %v1379
      %vm1403 = vweird.f32 %v1397
      %vm1404 = vmor %vm1402, %vm1403
      %v1405 = vsel %vm1404, %v1397, %v1401
      %v1406 = vand.u32 2147483647, %v1379
      %vm1407 = vcmp.eq.f32.partialorder %v1406, 8.507059e+37
      %v1408 = vand.u32 %v1379, 2147483648
      %v1409 = vor.u32 1.1754944e-38, %v1408
      %v1410 = vsel %vm1407, %v1409, %v1405
      %v1411 = vmul.f32 1.0, %v1410
      %v1412 = vrcp.pop %v1380
      %v1413 = vmul.f32 %v1380, %v1412
      %v1414 = vsub.f32 1.0, %v1413
      %v1415 = vmul.f32 %v1412, %v1414
      %v1416 = vadd.f32 %v1412, %v1415
      %vm1417 = vweird.f32 %v1380
      %vm1418 = vweird.f32 %v1412
      %vm1419 = vmor %vm1417, %vm1418
      %v1420 = vsel %vm1419, %v1412, %v1416
      %v1421 = vand.u32 2147483647, %v1380
      %vm1422 = vcmp.eq.f32.partialorder %v1421, 8.507059e+37
      %v1423 = vand.u32 %v1380, 2147483648
      %v1424 = vor.u32 1.1754944e-38, %v1423
      %v1425 = vsel %vm1422, %v1424, %v1420
      %v1426 = vmul.f32 1.0, %v1425
      %v1427 = vrcp.pop %v1381
      %v1428 = vmul.f32 %v1381, %v1427
      %v1429 = vsub.f32 1.0, %v1428
      %v1430 = vmul.f32 %v1427, %v1429
      %v1431 = vadd.f32 %v1427, %v1430
      %vm1432 = vweird.f32 %v1381
      %vm1433 = vweird.f32 %v1427
      %vm1434 = vmor %vm1432, %vm1433
      %v1435 = vsel %vm1434, %v1427, %v1431
      %v1436 = vand.u32 2147483647, %v1381
      %vm1437 = vcmp.eq.f32.partialorder %v1436, 8.507059e+37
      %v1438 = vand.u32 %v1381, 2147483648
      %v1439 = vor.u32 1.1754944e-38, %v1438
      %v1440 = vsel %vm1437, %v1439, %v1435
      %v1441 = vmul.f32 1.0, %v1440
      %1446 = vrot.lane.b32.xlu0 %v1396, 112
      %v1447 = vpop.permute.xlu0 %1446
      %1448 = vrot.lane.b32.xlu0 %v1411, 112
      %v1449 = vpop.permute.xlu0 %1448
      %1450 = vrot.lane.b32.xlu0 %v1426, 112
      %v1451 = vpop.permute.xlu0 %1450
      %1452 = vrot.lane.b32.xlu0 %v1441, 112
      %v1453 = vpop.permute.xlu0 %1452
      %v1458 = vmul.f32 %v1362, %v1447
      %v1459 = vmul.f32 %v1363, %v1449
      %v1460 = vmul.f32 %v1364, %v1451
      %v1461 = vmul.f32 %v1365, %v1453
      %s1462 = smul.addr %s1277, 4
      %s1463 = scalar_lea.vmem %s15, %s1462
      %v1464 = vld [vmem:[%s1463] sm:$0xf]
      %v1465 = vld [vmem:[%s1463 + $0x4] sm:$0xf]
      %v1466 = vpack.c.bf16 %v1459, %v1458
      %v1467 = vpack.c.bf16 %v1461, %v1460
      %s1468 = scalar_lea.vmem %s16, %s1193
      %v1469 = vld [vmem:[%s1468] sm:$0x1]
      %v1471 = vperm.slane %v1469, 0
      %v1475 = vunpack.c.l.b16 %v1464
      %v1476 = vunpack.c.l.b16 %v1465
      %v1477 = vpack.c.b16 %v1476, %v1475
      %v1480 = vsel %vm646, %v1466, 0
      %v1483 = vsel %vm646, %v1467, 0
      %1485 = vmatpush.bf16.msra.mxu0 0
      %1486 = vmatpush.bf16.msra.mxu0 0
      %1487 = vmatpush.bf16.msra.mxu0 0
      %1488 = vmatpush.bf16.msra.mxu0 0
      %1489 = vmatpush.bf16.msra.mxu0 0
      %1490 = vmatpush.bf16.msra.mxu0 0
      %1491 = vmatpush.bf16.msra.mxu0 0
      %1492 = vmatpush.bf16.msra.mxu0 %v1477
      %1493 = vmatmul.bf16.gmra.mxu0 %v1480
      %v1494 = vpop.f32.mrf.mxu0
      %v1495 = vadd.f32 %v1471, %v1494
      %v1496 = vpop.f32.mrf.mxu0
      %v1497 = vadd.f32 %v1471, %v1496
      %1498 = vmatmul.bf16.gmra.mxu0 %v1483
      %v1499 = vpop.f32.mrf.mxu0
      %v1500 = vadd.f32 %v1471, %v1499
      %v1501 = vpop.f32.mrf.mxu0
      %v1502 = vadd.f32 %v1471, %v1501
      %1503 = vdwg.mxu0
      %v1504 = vadd.f32 %v1169, %v1495
      %v1505 = vadd.f32 %v1170, %v1497
      %v1506 = vadd.f32 %v1171, %v1500
      %v1507 = vadd.f32 %v1172, %v1502
      %1512 = vrot.lane.b32.xlu0 %v1495, 96
      %v1513 = vpop.permute.xlu0 %1512
      %1514 = vrot.lane.b32.xlu0 %v1497, 96
      %v1515 = vpop.permute.xlu0 %1514
      %1516 = vrot.lane.b32.xlu0 %v1500, 96
      %v1517 = vpop.permute.xlu0 %1516
      %1518 = vrot.lane.b32.xlu0 %v1502, 96
      %v1519 = vpop.permute.xlu0 %1518
      %v1524 = vadd.f32 %v1189, %v1513
      %v1525 = vadd.f32 %v1190, %v1515
      %v1526 = vadd.f32 %v1191, %v1517
      %v1527 = vadd.f32 %v1192, %v1519
    $region110: #{tpu_custom_call.1} parent=1 // loop_footer
      %s842 = sadd.s32 1, %s838
    $region111: #{tpu_custom_call.1} parent=1 // loop_footer_branch
      %837 = sbr.rel target = $region107
    $region112: #{tpu_custom_call.1} parent=1 // loop_exit
      _
    %v1528 = vmax.f32 %v847, 0.0
    %v1529 = vmax.f32 %v848, 0.0
    %v1530 = vmax.f32 %v849, 0.0
    %v1531 = vmax.f32 %v850, 0.0
    %v1532 = vld [vmem:[%s17] sm:$0xf]
    %v1533 = vld [vmem:[%s17 + $0x4] sm:$0xf]
    %v1534 = vld [vmem:[%s17 + $0x8] sm:$0xf]
    %v1535 = vld [vmem:[%s17 + $0xc] sm:$0xf]
    %v1536 = vpack.c.bf16 %v1529, %v1528
    %v1537 = vpack.c.bf16 %v1531, %v1530
    %v1538 = vld [vmem:[%s18] sm:$0x1]
    %v1540 = vperm.slane %v1538, 0
    %v1546 = vunpack.c.l.b16 %v1532
    %v1547 = vunpack.c.l.b16 %v1533
    %v1548 = vunpack.c.l.b16 %v1534
    %v1549 = vunpack.c.l.b16 %v1535
    %v1550 = vpack.c.b16 %v1547, %v1546
    %v1551 = vpack.c.b16 %v1549, %v1548
    %vm1554 = vcmask 261120
    %v1556 = vsel %vm1554, %v1536, 0
    %v1559 = vsel %vm1554, %v1537, 0
    %1561 = vmatpush.bf16.msra.mxu0 0
    %1562 = vmatpush.bf16.msra.mxu0 0
    %1563 = vmatpush.bf16.msra.mxu0 0
    %1564 = vmatpush.bf16.msra.mxu0 0
    %1565 = vmatpush.bf16.msra.mxu0 0
    %1566 = vmatpush.bf16.msra.mxu0 0
    %1567 = vmatpush.bf16.msra.mxu0 %v1551
    %1568 = vmatpush.bf16.msra.mxu0 %v1550
    %1569 = vmatmul.bf16.gmra.mxu0 %v1556
    %v1570 = vpop.f32.mrf.mxu0
    %v1571 = vadd.f32 %v1540, %v1570
    %v1572 = vpop.f32.mrf.mxu0
    %v1573 = vadd.f32 %v1540, %v1572
    %1574 = vmatmul.bf16.gmra.mxu0 %v1559
    %v1575 = vpop.f32.mrf.mxu0
    %v1576 = vadd.f32 %v1540, %v1575
    %v1577 = vpop.f32.mrf.mxu0
    %v1578 = vadd.f32 %v1540, %v1577
    %1579 = vdwg.mxu0
    %v1580 = vmax.f32 %v1571, 0.0
    %v1581 = vmax.f32 %v1573, 0.0
    %v1582 = vmax.f32 %v1576, 0.0
    %v1583 = vmax.f32 %v1578, 0.0
    %v1584 = vld [vmem:[%s19] sm:$0xf]
    %v1585 = vld [vmem:[%s19 + $0x4] sm:$0xf]
    %v1586 = vld [vmem:[%s19 + $0x8] sm:$0xf]
    %v1587 = vld [vmem:[%s19 + $0xc] sm:$0xf]
    %v1588 = vpack.c.bf16 %v1581, %v1580
    %v1589 = vpack.c.bf16 %v1583, %v1582
    %v1590 = vld [vmem:[%s20] sm:$0x1]
    %v1592 = vperm.slane %v1590, 0
    %v1598 = vunpack.c.l.b16 %v1584
    %v1599 = vunpack.c.l.b16 %v1585
    %v1600 = vunpack.c.l.b16 %v1586
    %v1601 = vunpack.c.l.b16 %v1587
    %v1602 = vpack.c.b16 %v1599, %v1598
    %v1603 = vpack.c.b16 %v1601, %v1600
    %v1607 = vsel %vm1554, %v1588, 0
    %v1610 = vsel %vm1554, %v1589, 0
    %1612 = vmatpush.bf16.msra.mxu0 0
    %1613 = vmatpush.bf16.msra.mxu0 0
    %1614 = vmatpush.bf16.msra.mxu0 0
    %1615 = vmatpush.bf16.msra.mxu0 0
    %1616 = vmatpush.bf16.msra.mxu0 0
    %1617 = vmatpush.bf16.msra.mxu0 0
    %1618 = vmatpush.bf16.msra.mxu0 %v1603
    %1619 = vmatpush.bf16.msra.mxu0 %v1602
    %1620 = vmatmul.bf16.gmra.mxu0 %v1607
    %v1621 = vpop.f32.mrf.mxu0
    %v1622 = vadd.f32 %v1592, %v1621
    %v1623 = vpop.f32.mrf.mxu0
    %v1624 = vadd.f32 %v1592, %v1623
    %1625 = vmatmul.bf16.gmra.mxu0 %v1610
    %v1626 = vpop.f32.mrf.mxu0
    %v1627 = vadd.f32 %v1592, %v1626
    %v1628 = vpop.f32.mrf.mxu0
    %v1629 = vadd.f32 %v1592, %v1628
    %1630 = vdwg.mxu0
    %v1631 = vmax.f32 %v1622, 0.0
    %v1632 = vmax.f32 %v1624, 0.0
    %v1633 = vmax.f32 %v1627, 0.0
    %v1634 = vmax.f32 %v1629, 0.0
    %v1635 = vld [vmem:[%s21] sm:$0xf]
    %v1636 = vld [vmem:[%s21 + $0x4] sm:$0xf]
    %v1637 = vld [vmem:[%s21 + $0x8] sm:$0xf]
    %v1638 = vld [vmem:[%s21 + $0xc] sm:$0xf]
    %v1639 = vpack.c.bf16 %v1632, %v1631
    %v1640 = vpack.c.bf16 %v1634, %v1633
    %v1641 = vld [vmem:[%s22] sm:$0x1]
    %v1643 = vperm.slane %v1641, 0
    %v1649 = vunpack.c.l.b16 %v1635
    %v1650 = vunpack.c.l.b16 %v1636
    %v1651 = vunpack.c.l.b16 %v1637
    %v1652 = vunpack.c.l.b16 %v1638
    %v1653 = vpack.c.b16 %v1650, %v1649
    %v1654 = vpack.c.b16 %v1652, %v1651
    %v1658 = vsel %vm1554, %v1639, 0
    %v1661 = vsel %vm1554, %v1640, 0
    %1663 = vmatpush.bf16.msra.mxu0 0
    %1664 = vmatpush.bf16.msra.mxu0 0
    %1665 = vmatpush.bf16.msra.mxu0 0
    %1666 = vmatpush.bf16.msra.mxu0 0
    %1667 = vmatpush.bf16.msra.mxu0 0
    %1668 = vmatpush.bf16.msra.mxu0 0
    %1669 = vmatpush.bf16.msra.mxu0 %v1654
    %1670 = vmatpush.bf16.msra.mxu0 %v1653
    %1671 = vmatmul.bf16.gmra.mxu0 %v1658
    %v1672 = vpop.f32.mrf.mxu0
    %v1673 = vadd.f32 %v1643, %v1672
    %v1674 = vpop.f32.mrf.mxu0
    %v1675 = vadd.f32 %v1643, %v1674
    %1676 = vmatmul.bf16.gmra.mxu0 %v1661
    %v1677 = vpop.f32.mrf.mxu0
    %v1678 = vadd.f32 %v1643, %v1677
    %v1679 = vpop.f32.mrf.mxu0
    %v1680 = vadd.f32 %v1643, %v1679
    %1681 = vdwg.mxu0
    %v1682 = vld [vmem:[%s24] sm:$0x1]
    %v1684 = vperm.slane %v1682, 0
    %v1686 = vmul.f32 %v1673, %v1684
    %v1687 = vmul.f32 %v1675, %v1684
    %v1688 = vmul.f32 %v1678, %v1684
    %v1689 = vmul.f32 %v1680, %v1684
    %vm1690 = vcmask 138240
    %v1691 = vsel %vm1690, %v1686, 0.0
    %1692 = vadd.xlane.f32.xlu0 %v1691
    %v1693 = vpop.xlane.xlu0 %1692
    %v1694 = vsel %vm1690, %v1687, 0.0
    %1695 = vadd.xlane.f32.xlu0 %v1694
    %v1696 = vpop.xlane.xlu0 %1695
    %v1697 = vsel %vm1690, %v1688, 0.0
    %1698 = vadd.xlane.f32.xlu0 %v1697
    %v1699 = vpop.xlane.xlu0 %1698
    %v1700 = vsel %vm1690, %v1689, 0.0
    %1701 = vadd.xlane.f32.xlu0 %v1700
    %v1702 = vpop.xlane.xlu0 %1701
    %v1707 = vlaneseq
    %v1708 = vand.u32 %v1707, 127
    %v1709 = vperm.slane %v1693, %v1708
    %v1710 = vadd.s32 %v1708, 4294967288
    %v1711 = vperm.slane %v1696, %v1710
    %vm1712 = vcmask 130112
    %v1713 = vsel %vm1712, %v1711, %v1709
    %v1714 = vperm.slane %v1699, %v1708
    %v1715 = vperm.slane %v1702, %v1710
    %v1716 = vsel %vm1712, %v1715, %v1714
    %vm1717 = vcmask 1041409
    %v1718 = vsel %vm1717, %v1716, %v1713
    %vm1720 = vcmask 123904
    %1721 = vst.msk [vmem:[#allocation3] sm:$0x3] %vm1720, %v1718
    %v1722 = vmax.f32 %v1673, 0.0
    %v1723 = vmax.f32 %v1675, 0.0
    %v1724 = vmax.f32 %v1678, 0.0
    %v1725 = vmax.f32 %v1680, 0.0
    %v1726 = vld [vmem:[%s23] sm:$0x1]
    %v1728 = vperm.slane %v1726, 0
    %v1730 = vmul.f32 %v1722, %v1728
    %v1731 = vmul.f32 %v1723, %v1728
    %v1732 = vmul.f32 %v1724, %v1728
    %v1733 = vmul.f32 %v1725, %v1728
    %v1734 = vsel %vm1690, %v1730, 0.0
    %1735 = vadd.xlane.f32.xlu0 %v1734
    %v1736 = vpop.xlane.xlu0 %1735
    %v1737 = vsel %vm1690, %v1731, 0.0
    %1738 = vadd.xlane.f32.xlu0 %v1737
    %v1739 = vpop.xlane.xlu0 %1738
    %v1740 = vsel %vm1690, %v1732, 0.0
    %1741 = vadd.xlane.f32.xlu0 %v1740
    %v1742 = vpop.xlane.xlu0 %1741
    %v1743 = vsel %vm1690, %v1733, 0.0
    %1744 = vadd.xlane.f32.xlu0 %v1743
    %v1745 = vpop.xlane.xlu0 %1744
    %v1746 = vld [vmem:[#allocation2] sm:$0x1]
    %v1748 = vperm.slane %v1746, 0
    %1749 = vset.pattern.permute.xlu0 0
    %1750 = vperm.xlu0 %1749, %v1748
    %v1751 = vpop.permute.xlu0 %1750
    %v1753 = vadd.f32 %v1736, %v1751
    %v1754 = vadd.f32 %v1739, %v1751
    %v1755 = vadd.f32 %v1742, %v1751
    %v1756 = vadd.f32 %v1745, %v1751
    %v1757 = vmax.f32 %v1753, 0.0
    %v1758 = vmax.f32 %v1754, 0.0
    %v1759 = vmax.f32 %v1755, 0.0
    %v1760 = vmax.f32 %v1756, 0.0
    %vm1761 = vcmp.ne.f32.partialorder %v1753, %v1753
    %vm1762 = vcmp.ne.f32.partialorder %v1754, %v1754
    %vm1763 = vcmp.ne.f32.partialorder %v1755, %v1755
    %vm1764 = vcmp.ne.f32.partialorder %v1756, %v1756
    %v1765 = vadd.f32 %v1753, 0.0
    %v1766 = vadd.f32 %v1754, 0.0
    %v1767 = vadd.f32 %v1755, 0.0
    %v1768 = vadd.f32 %v1756, 0.0
    %v1769 = vand.u32 2147483647, %v1753
    %v1770 = vand.u32 2147483647, %v1754
    %v1771 = vand.u32 2147483647, %v1755
    %v1772 = vand.u32 2147483647, %v1756
    %v1773 = vsub.f32 0.0, %v1769
    %v1774 = vsub.f32 0.0, %v1770
    %v1775 = vsub.f32 0.0, %v1771
    %v1776 = vsub.f32 0.0, %v1772
    %v1777 = vmul.f32 %v1773, 1.442695
    %v1778 = vpow.pop %v1777
    %v1779 = vmul.f32 %v1774, 1.442695
    %v1780 = vpow.pop %v1779
    %v1781 = vmul.f32 %v1775, 1.442695
    %v1782 = vpow.pop %v1781
    %v1783 = vmul.f32 %v1776, 1.442695
    %v1784 = vpow.pop %v1783
    %v1785 = vadd.f32 %v1778, 1.0
    %v1786 = vlog2.pop %v1785
    %v1787 = vmul.f32 %v1786, 0.6931472
    %v1788 = vmul.f32 -0.5, %v1778
    %v1789 = vadd.f32 %v1788, 1.0
    %v1790 = vmul.f32 %v1789, %v1778
    %v1791 = vand.u32 2147483647, %v1778
    %vm1792 = vcmp.lt.f32.partialorder %v1791, 0.0004427343
    %v1793 = vsel %vm1792, %v1790, %v1787
    %v1794 = vadd.f32 %v1780, 1.0
    %v1795 = vlog2.pop %v1794
    %v1796 = vmul.f32 %v1795, 0.6931472
    %v1797 = vmul.f32 -0.5, %v1780
    %v1798 = vadd.f32 %v1797, 1.0
    %v1799 = vmul.f32 %v1798, %v1780
    %v1800 = vand.u32 2147483647, %v1780
    %vm1801 = vcmp.lt.f32.partialorder %v1800, 0.0004427343
    %v1802 = vsel %vm1801, %v1799, %v1796
    %v1803 = vadd.f32 %v1782, 1.0
    %v1804 = vlog2.pop %v1803
    %v1805 = vmul.f32 %v1804, 0.6931472
    %v1806 = vmul.f32 -0.5, %v1782
    %v1807 = vadd.f32 %v1806, 1.0
    %v1808 = vmul.f32 %v1807, %v1782
    %v1809 = vand.u32 2147483647, %v1782
    %vm1810 = vcmp.lt.f32.partialorder %v1809, 0.0004427343
    %v1811 = vsel %vm1810, %v1808, %v1805
    %v1812 = vadd.f32 %v1784, 1.0
    %v1813 = vlog2.pop %v1812
    %v1814 = vmul.f32 %v1813, 0.6931472
    %v1815 = vmul.f32 -0.5, %v1784
    %v1816 = vadd.f32 %v1815, 1.0
    %v1817 = vmul.f32 %v1816, %v1784
    %v1818 = vand.u32 2147483647, %v1784
    %vm1819 = vcmp.lt.f32.partialorder %v1818, 0.0004427343
    %v1820 = vsel %vm1819, %v1817, %v1814
    %v1821 = vadd.f32 %v1757, %v1793
    %v1822 = vadd.f32 %v1758, %v1802
    %v1823 = vadd.f32 %v1759, %v1811
    %v1824 = vadd.f32 %v1760, %v1820
    %v1825 = vsel %vm1761, %v1765, %v1821
    %v1826 = vsel %vm1762, %v1766, %v1822
    %v1827 = vsel %vm1763, %v1767, %v1823
    %v1828 = vsel %vm1764, %v1768, %v1824
    %v1833 = vperm.slane %v1825, %v1708
    %v1834 = vperm.slane %v1826, %v1710
    %v1835 = vsel %vm1712, %v1834, %v1833
    %v1836 = vperm.slane %v1827, %v1708
    %v1837 = vperm.slane %v1828, %v1710
    %v1838 = vsel %vm1712, %v1837, %v1836
    %v1839 = vsel %vm1717, %v1838, %v1835
    %1841 = vst.msk [vmem:[#allocation5] sm:$0x3] %vm1720, %v1839
    // Predicated region
    $region113: #{tpu_custom_call.1} parent=1 // pred_check
      _
    $region114: #{tpu_custom_call.1} parent=1 // pred_check_branch
      %1843 = sbr.rel (0) target = $region116
    $region115: #{tpu_custom_call.1} parent=1 // pred_region
      %1845 = vsyncadd [#allocation4], 0
      %s1847 = sshll.u32 [#allocation3], 4
      %s1848 = int_to_ptr.vmem [resolvable:$true] %s1847
      %s1849 = sshll.u32 %s26, 4
      %s1850 = int_to_ptr.hbm [resolvable:$true] %s1849
      %1852 = dma.vmem_to_hbm [thread:$0]  %s1848, 32, %s1850, [#allocation4]
    $region116: #{tpu_custom_call.1} parent=1 // pred_fallthru
      _
    // Predicated region
    $region117: #{tpu_custom_call.1} parent=1 // pred_check
      _
    $region118: #{tpu_custom_call.1} parent=1 // pred_check_branch
      %1854 = sbr.rel (0) target = $region120
    $region119: #{tpu_custom_call.1} parent=1 // pred_region
      %1856 = vsyncadd [#allocation6], 0
      %s1858 = sshll.u32 [#allocation5], 4
      %s1859 = int_to_ptr.vmem [resolvable:$true] %s1858
      %s1860 = sshll.u32 %s27, 4
      %s1861 = int_to_ptr.hbm [resolvable:$true] %s1860
      %1863 = dma.vmem_to_hbm [thread:$0]  %s1859, 32, %s1861, [#allocation6]
    $region120: #{tpu_custom_call.1} parent=1 // pred_fallthru
      _
    // Predicated region
    $region121: #{tpu_custom_call.1} parent=1 // pred_check
      _
    $region122: #{tpu_custom_call.1} parent=1 // pred_check_branch
      %1865 = sbr.rel (0) target = $region124
    $region123: #{tpu_custom_call.1} parent=1 // pred_region
      %1867 = dma.done [#allocation4], 32
    $region124: #{tpu_custom_call.1} parent=1 // pred_fallthru
      _
    // Predicated region
    $region125: #{tpu_custom_call.1} parent=1 // pred_check
      _
    $region126: #{tpu_custom_call.1} parent=1 // pred_check_branch
      %1869 = sbr.rel (0) target = $region128
    $region127: #{tpu_custom_call.1} parent=1 // pred_region
      %1871 = dma.done [#allocation6], 32
    $region128: #{tpu_custom_call.1} parent=1 // pred_fallthru
      _
    %1872 = vsyncpa [#allocation4], 1
    %1873 = vsyncpa [#allocation6], 1

// kernel: tpu_custom_call.1
$region0: #{tpu_custom_call.1}
  #allocation0 [shape = 'u32[]', space=smem, size = 0x4, offset = 0x4, fixed_abs, tag = 'smem constant byte address 0x4 - core index']
  #allocation1 [shape = 'u32[72,128]{1,0:T(1,128)}', space=vmem, size = 0x9000, scoped, tag = 'internal scratch']
  #allocation2 [shape = 'f32[1,1]{1,0:T(1,128)S(1)}', space=vmem, size = 0x200, scoped, tag = 'scoped memory for tpu_custom_call.1']
  %s0 = inlined_call_operand.vmem [shape: f32[32,1], index: 0, kind: input, shape index: {}]
  %s1 = inlined_call_operand.vmem [shape: f32[7,1,4], index: 1, kind: input, shape index: {}]
  %s2 = inlined_call_operand.vmem [shape: f32[1,4], index: 2, kind: input, shape index: {}]
  %s3 = inlined_call_operand.vmem [shape: bf16[20,8], index: 3, kind: input, shape index: {}]
  %s4 = inlined_call_operand.vmem [shape: f32[1,8], index: 4, kind: input, shape index: {}]
  %s5 = inlined_call_operand.vmem [shape: bf16[24,16], index: 5, kind: input, shape index: {}]
  %s6 = inlined_call_operand.vmem [shape: f32[1,16], index: 6, kind: input, shape index: {}]
  %s7 = inlined_call_operand.vmem [shape: f32[1,16], index: 7, kind: input, shape index: {}]
  %s8 = inlined_call_operand.vmem [shape: f32[1,16], index: 8, kind: input, shape index: {}]
  %s9 = inlined_call_operand.vmem [shape: bf16[4,32,16], index: 9, kind: input, shape index: {}]
  %s10 = inlined_call_operand.vmem [shape: f32[4,1,16], index: 10, kind: input, shape index: {}]
  %s11 = inlined_call_operand.vmem [shape: bf16[4,16,16], index: 11, kind: input, shape index: {}]
  %s12 = inlined_call_operand.vmem [shape: f32[4,1,16], index: 12, kind: input, shape index: {}]
  %s13 = inlined_call_operand.vmem [shape: bf16[4,16,32], index: 13, kind: input, shape index: {}]
  %s14 = inlined_call_operand.vmem [shape: f32[4,1,32], index: 14, kind: input, shape index: {}]
  %s15 = inlined_call_operand.vmem [shape: bf16[4,16,48], index: 15, kind: input, shape index: {}]
  %s16 = inlined_call_operand.vmem [shape: f32[4,1,48], index: 16, kind: input, shape index: {}]
  %s17 = inlined_call_operand.vmem [shape: bf16[32,32], index: 17, kind: input, shape index: {}]
  %s18 = inlined_call_operand.vmem [shape: f32[1,32], index: 18, kind: input, shape index: {}]
  %s19 = inlined_call_operand.vmem [shape: bf16[32,32], index: 19, kind: input, shape index: {}]
  %s20 = inlined_call_operand.vmem [shape: f32[1,32], index: 20, kind: input, shape index: {}]
  %s21 = inlined_call_operand.vmem [shape: bf16[32,17], index: 21, kind: input, shape index: {}]
  %s22 = inlined_call_operand.vmem [shape: f32[1,17], index: 22, kind: input, shape index: {}]
  %s23 = inlined_call_operand.vmem [shape: f32[1,1,17], index: 23, kind: input, shape index: {}]
  %s24 = inlined_call_operand.vmem [shape: f32[1,1,17], index: 24, kind: input, shape index: {}]
  %s25 = inlined_call_operand.<no memory space> [shape: f32[1,1], index: 25, kind: input, shape index: {}]
  %s26 = inlined_call_operand.hbm [shape: f32[2,16], index: 26, kind: output, shape index: {0}]
  %s27 = inlined_call_operand.hbm [shape: f32[2,16], index: 27, kind: output, shape index: {1}]
  %28 = xla_tuple %s26, %s27
  %s29 = sld [smem:[#allocation0]]
  $region129: #{tpu_custom_call.1} parent=0
    _
  %s31 = ssub.s32 1, %s29
  %s32 = scalar_select 0, %s31, %s29
  %v33 = vstv %s25
  %34 = vst [vmem:[#allocation2] sm:$0x1] %v33
  $region1: #{tpu_custom_call.1} parent=0
    #allocation3 [shape = 'u8[1024]{0}', space=vmem, size = 0x400, scoped, tag = 'output window, operand 0, single buffered']
    #allocation4 [shape = 's32[1]{0}', space=sflag, size = 0x4, scoped, tag = 'scoped memory for tpu_custom_call.1']
    #allocation5 [shape = 'u8[1024]{0}', space=vmem, size = 0x400, scoped, tag = 'output window, operand 1, single buffered']
    #allocation6 [shape = 's32[1]{0}', space=sflag, size = 0x4, scoped, tag = 'scoped memory for tpu_custom_call.1']
    %35 = vsyncpa [#allocation4], 0
    %36 = vsyncpa [#allocation6], 0
    // Predicated region
    $region2: #{tpu_custom_call.1} parent=1 // pred_check
      _
    $region3: #{tpu_custom_call.1} parent=1 // pred_check_branch
      %38 = sbr.rel (0) target = $region5
    $region4: #{tpu_custom_call.1} parent=1 // pred_region
      _
    $region5: #{tpu_custom_call.1} parent=1 // pred_fallthru
      _
    // Predicated region
    $region6: #{tpu_custom_call.1} parent=1 // pred_check
      _
    $region7: #{tpu_custom_call.1} parent=1 // pred_check_branch
      %40 = sbr.rel (0) target = $region9
    $region8: #{tpu_custom_call.1} parent=1 // pred_region
      _
    $region9: #{tpu_custom_call.1} parent=1 // pred_fallthru
      _
    // Predicated region
    $region10: #{tpu_custom_call.1} parent=1 // pred_check
      _
    $region11: #{tpu_custom_call.1} parent=1 // pred_check_branch
      %42 = sbr.rel (0) target = $region13
    $region12: #{tpu_custom_call.1} parent=1 // pred_region
      _
    $region13: #{tpu_custom_call.1} parent=1 // pred_fallthru
      _
    // Predicated region
    $region14: #{tpu_custom_call.1} parent=1 // pred_check
      _
    $region15: #{tpu_custom_call.1} parent=1 // pred_check_branch
      %44 = sbr.rel (0) target = $region17
    $region16: #{tpu_custom_call.1} parent=1 // pred_region
      _
    $region17: #{tpu_custom_call.1} parent=1 // pred_fallthru
      _
    // Predicated region
    $region18: #{tpu_custom_call.1} parent=1 // pred_check
      _
    $region19: #{tpu_custom_call.1} parent=1 // pred_check_branch
      %46 = sbr.rel (0) target = $region21
    $region20: #{tpu_custom_call.1} parent=1 // pred_region
      _
    $region21: #{tpu_custom_call.1} parent=1 // pred_fallthru
      _
    // Predicated region
    $region22: #{tpu_custom_call.1} parent=1 // pred_check
      _
    $region23: #{tpu_custom_call.1} parent=1 // pred_check_branch
      %48 = sbr.rel (0) target = $region25
    $region24: #{tpu_custom_call.1} parent=1 // pred_region
      _
    $region25: #{tpu_custom_call.1} parent=1 // pred_fallthru
      _
    // Predicated region
    $region26: #{tpu_custom_call.1} parent=1 // pred_check
      _
    $region27: #{tpu_custom_call.1} parent=1 // pred_check_branch
      %50 = sbr.rel (0) target = $region29
    $region28: #{tpu_custom_call.1} parent=1 // pred_region
      _
    $region29: #{tpu_custom_call.1} parent=1 // pred_fallthru
      _
    // Predicated region
    $region30: #{tpu_custom_call.1} parent=1 // pred_check
      _
    $region31: #{tpu_custom_call.1} parent=1 // pred_check_branch
      %52 = sbr.rel (0) target = $region33
    $region32: #{tpu_custom_call.1} parent=1 // pred_region
      _
    $region33: #{tpu_custom_call.1} parent=1 // pred_fallthru
      _
    // Predicated region
    $region34: #{tpu_custom_call.1} parent=1 // pred_check
      _
    $region35: #{tpu_custom_call.1} parent=1 // pred_check_branch
      %54 = sbr.rel (0) target = $region37
    $region36: #{tpu_custom_call.1} parent=1 // pred_region
      _
    $region37: #{tpu_custom_call.1} parent=1 // pred_fallthru
      _
    // Predicated region
    $region38: #{tpu_custom_call.1} parent=1 // pred_check
      _
    $region39: #{tpu_custom_call.1} parent=1 // pred_check_branch
      %56 = sbr.rel (0) target = $region41
    $region40: #{tpu_custom_call.1} parent=1 // pred_region
      _
    $region41: #{tpu_custom_call.1} parent=1 // pred_fallthru
      _
    // Predicated region
    $region42: #{tpu_custom_call.1} parent=1 // pred_check
      _
    $region43: #{tpu_custom_call.1} parent=1 // pred_check_branch
      %58 = sbr.rel (0) target = $region45
    $region44: #{tpu_custom_call.1} parent=1 // pred_region
      _
    $region45: #{tpu_custom_call.1} parent=1 // pred_fallthru
      _
    // Predicated region
    $region46: #{tpu_custom_call.1} parent=1 // pred_check
      _
    $region47: #{tpu_custom_call.1} parent=1 // pred_check_branch
      %60 = sbr.rel (0) target = $region49
    $region48: #{tpu_custom_call.1} parent=1 // pred_region
      _
    $region49: #{tpu_custom_call.1} parent=1 // pred_fallthru
      _
    // Predicated region
    $region50: #{tpu_custom_call.1} parent=1 // pred_check
      _
    $region51: #{tpu_custom_call.1} parent=1 // pred_check_branch
      %62 = sbr.rel (0) target = $region53
    $region52: #{tpu_custom_call.1} parent=1 // pred_region
      _
    $region53: #{tpu_custom_call.1} parent=1 // pred_fallthru
      _
    // Predicated region
    $region54: #{tpu_custom_call.1} parent=1 // pred_check
      _
    $region55: #{tpu_custom_call.1} parent=1 // pred_check_branch
      %64 = sbr.rel (0) target = $region57
    $region56: #{tpu_custom_call.1} parent=1 // pred_region
      _
    $region57: #{tpu_custom_call.1} parent=1 // pred_fallthru
      _
    // Predicated region
    $region58: #{tpu_custom_call.1} parent=1 // pred_check
      _
    $region59: #{tpu_custom_call.1} parent=1 // pred_check_branch
      %66 = sbr.rel (0) target = $region61
    $region60: #{tpu_custom_call.1} parent=1 // pred_region
      _
    $region61: #{tpu_custom_call.1} parent=1 // pred_fallthru
      _
    // Predicated region
    $region62: #{tpu_custom_call.1} parent=1 // pred_check
      _
    $region63: #{tpu_custom_call.1} parent=1 // pred_check_branch
      %68 = sbr.rel (0) target = $region65
    $region64: #{tpu_custom_call.1} parent=1 // pred_region
      _
    $region65: #{tpu_custom_call.1} parent=1 // pred_fallthru
      _
    // Predicated region
    $region66: #{tpu_custom_call.1} parent=1 // pred_check
      _
    $region67: #{tpu_custom_call.1} parent=1 // pred_check_branch
      %70 = sbr.rel (0) target = $region69
    $region68: #{tpu_custom_call.1} parent=1 // pred_region
      _
    $region69: #{tpu_custom_call.1} parent=1 // pred_fallthru
      _
    // Predicated region
    $region70: #{tpu_custom_call.1} parent=1 // pred_check
      _
    $region71: #{tpu_custom_call.1} parent=1 // pred_check_branch
      %72 = sbr.rel (0) target = $region73
    $region72: #{tpu_custom_call.1} parent=1 // pred_region
      _
    $region73: #{tpu_custom_call.1} parent=1 // pred_fallthru
      _
    // Predicated region
    $region74: #{tpu_custom_call.1} parent=1 // pred_check
      _
    $region75: #{tpu_custom_call.1} parent=1 // pred_check_branch
      %74 = sbr.rel (0) target = $region77
    $region76: #{tpu_custom_call.1} parent=1 // pred_region
      _
    $region77: #{tpu_custom_call.1} parent=1 // pred_fallthru
      _
    // Predicated region
    $region78: #{tpu_custom_call.1} parent=1 // pred_check
      _
    $region79: #{tpu_custom_call.1} parent=1 // pred_check_branch
      %76 = sbr.rel (0) target = $region81
    $region80: #{tpu_custom_call.1} parent=1 // pred_region
      _
    $region81: #{tpu_custom_call.1} parent=1 // pred_fallthru
      _
    // Predicated region
    $region82: #{tpu_custom_call.1} parent=1 // pred_check
      _
    $region83: #{tpu_custom_call.1} parent=1 // pred_check_branch
      %78 = sbr.rel (0) target = $region85
    $region84: #{tpu_custom_call.1} parent=1 // pred_region
      _
    $region85: #{tpu_custom_call.1} parent=1 // pred_fallthru
      _
    // Predicated region
    $region86: #{tpu_custom_call.1} parent=1 // pred_check
      _
    $region87: #{tpu_custom_call.1} parent=1 // pred_check_branch
      %80 = sbr.rel (0) target = $region89
    $region88: #{tpu_custom_call.1} parent=1 // pred_region
      _
    $region89: #{tpu_custom_call.1} parent=1 // pred_fallthru
      _
    // Predicated region
    $region90: #{tpu_custom_call.1} parent=1 // pred_check
      _
    $region91: #{tpu_custom_call.1} parent=1 // pred_check_branch
      %82 = sbr.rel (0) target = $region93
    $region92: #{tpu_custom_call.1} parent=1 // pred_region
      _
    $region93: #{tpu_custom_call.1} parent=1 // pred_fallthru
      _
    // Predicated region
    $region94: #{tpu_custom_call.1} parent=1 // pred_check
      _
    $region95: #{tpu_custom_call.1} parent=1 // pred_check_branch
      %84 = sbr.rel (0) target = $region97
    $region96: #{tpu_custom_call.1} parent=1 // pred_region
      _
    $region97: #{tpu_custom_call.1} parent=1 // pred_fallthru
      _
    // Predicated region
    $region98: #{tpu_custom_call.1} parent=1 // pred_check
      _
    $region99: #{tpu_custom_call.1} parent=1 // pred_check_branch
      %86 = sbr.rel (0) target = $region101
    $region100: #{tpu_custom_call.1} parent=1 // pred_region
      _
    $region101: #{tpu_custom_call.1} parent=1 // pred_fallthru
      _
    // Predicated region
    $region102: #{tpu_custom_call.1} parent=1 // pred_check
      _
    $region103: #{tpu_custom_call.1} parent=1 // pred_check_branch
      %88 = sbr.rel (0) target = $region105
    $region104: #{tpu_custom_call.1} parent=1 // pred_region
      _
    $region105: #{tpu_custom_call.1} parent=1 // pred_fallthru
      _
    %v90 = vld [vmem:[%s0] sm:$0xff]
    %v91 = vld [vmem:[%s0 + $0x8] sm:$0xff]
    %v92 = vld [vmem:[%s0 + $0x10] sm:$0xff]
    %v93 = vld [vmem:[%s0 + $0x18] sm:$0xff]
    %v94 = vlaneseq
    %v95 = vshrl.u32 %v94, 7
    %v96 = vadd.s32 %v95, 8
    %v97 = vadd.s32 %v95, 16
    %v98 = vadd.s32 %v95, 24
    %vm99 = vcmp.lt.s32.totalorder %v95, 0
    %v100 = vsub.s32 0, %v95
    %v101 = vsel %vm99, %v100, %v95
    %v102 = vshrl.u32 %v101, 4
    %v103 = vand.u32 %v101, 15
    %v104 = vsub.s32 0, %v103
    %v105 = vsel %vm99, %v104, %v103
    %vm106 = vcmp.lt.s32.totalorder %v96, 0
    %v107 = vsub.s32 0, %v96
    %v108 = vsel %vm106, %v107, %v96
    %v109 = vshrl.u32 %v108, 4
    %v110 = vand.u32 %v108, 15
    %v111 = vsub.s32 0, %v110
    %v112 = vsel %vm106, %v111, %v110
    %vm113 = vcmp.lt.s32.totalorder %v97, 0
    %v114 = vsub.s32 0, %v97
    %v115 = vsel %vm113, %v114, %v97
    %v116 = vshrl.u32 %v115, 4
    %v117 = vand.u32 %v115, 15
    %v118 = vsub.s32 0, %v117
    %v119 = vsel %vm113, %v118, %v117
    %vm120 = vcmp.lt.s32.totalorder %v98, 0
    %v121 = vsub.s32 0, %v98
    %v122 = vsel %vm120, %v121, %v98
    %v123 = vshrl.u32 %v122, 4
    %v124 = vand.u32 %v122, 15
    %v125 = vsub.s32 0, %v124
    %v126 = vsel %vm120, %v125, %v124
    %vm127 = vcmp.ne.s32.totalorder %v105, 0
    %vm128 = vcmp.ne.s32.totalorder %v112, 0
    %vm129 = vcmp.ne.s32.totalorder %v119, 0
    %vm130 = vcmp.ne.s32.totalorder %v126, 0
    %vm131 = vcmp.lt.s32.totalorder %v105, 0
    %vm132 = vcmp.lt.s32.totalorder %v112, 0
    %vm133 = vcmp.lt.s32.totalorder %v119, 0
    %vm134 = vcmp.lt.s32.totalorder %v126, 0
    %vm135 = vmand %vm131, %vm127
    %vm136 = vmand %vm132, %vm128
    %vm137 = vmand %vm133, %vm129
    %vm138 = vmand %vm134, %vm130
    %v139 = vadd.s32 %v105, 16
    %v140 = vadd.s32 %v112, 16
    %v141 = vadd.s32 %v119, 16
    %v142 = vadd.s32 %v126, 16
    %v143 = vsel %vm135, %v139, %v105
    %v144 = vsel %vm136, %v140, %v112
    %v145 = vsel %vm137, %v141, %v119
    %v146 = vsel %vm138, %v142, %v126
    %v147 = vrot.slane %v90, 5
    %v148 = vrot.slane %v91, 5
    %v149 = vrot.slane %v92, 5
    %v150 = vrot.slane %v93, 5
    %vm151 = vcmp.lt.s32.totalorder %v95, 3
    %v152 = vsel %vm151, %v149, %v150
    %v153 = vsel %vm151, %v148, %v149
    %v154 = vsel %vm151, %v147, %v148
    %v155 = vsel %vm151, %v150, %v147
    %vm156 = vcmp.ge.s32.totalorder %v143, 3
    %vm157 = vcmp.ge.s32.totalorder %v144, 3
    %vm158 = vcmp.ge.s32.totalorder %v145, 3
    %vm159 = vcmp.ge.s32.totalorder %v146, 3
    %v160 = vsel %vm156, %v155, 0.0
    %v161 = vsel %vm157, %v154, 0.0
    %v162 = vsel %vm158, %v153, 0.0
    %v163 = vsel %vm159, %v152, 0.0
    %v164 = vld [vmem:[%s1] sm:$0x1]
    %166 = vset.pattern.permute.xlu0 0
    %167 = vperm.xlu0 %166, %v160
    %v168 = vpop.permute.xlu0 %167
    %171 = vset.pattern.permute.xlu0 0
    %172 = vperm.xlu0 %171, %v161
    %v173 = vpop.permute.xlu0 %172
    %176 = vset.pattern.permute.xlu0 0
    %177 = vperm.xlu0 %176, %v162
    %v178 = vpop.permute.xlu0 %177
    %181 = vset.pattern.permute.xlu0 0
    %182 = vperm.xlu0 %181, %v163
    %v183 = vpop.permute.xlu0 %182
    %v186 = vperm.slane %v164, 0
    %v188 = vmul.f32 %v168, %v186
    %v189 = vmul.f32 %v173, %v186
    %v190 = vmul.f32 %v178, %v186
    %v191 = vmul.f32 %v183, %v186
    %v192 = vrot.slane %v90, 6
    %v193 = vrot.slane %v91, 6
    %v194 = vrot.slane %v92, 6
    %v195 = vrot.slane %v93, 6
    %vm196 = vcmp.lt.s32.totalorder %v95, 2
    %v197 = vsel %vm196, %v194, %v195
    %v198 = vsel %vm196, %v193, %v194
    %v199 = vsel %vm196, %v192, %v193
    %v200 = vsel %vm196, %v195, %v192
    %vm201 = vcmp.ge.s32.totalorder %v143, 2
    %vm202 = vcmp.ge.s32.totalorder %v144, 2
    %vm203 = vcmp.ge.s32.totalorder %v145, 2
    %vm204 = vcmp.ge.s32.totalorder %v146, 2
    %v205 = vsel %vm201, %v200, 0.0
    %v206 = vsel %vm202, %v199, 0.0
    %v207 = vsel %vm203, %v198, 0.0
    %v208 = vsel %vm204, %v197, 0.0
    %s209 = scalar_lea.vmem %s1, 1
    %v210 = vld [vmem:[%s209] sm:$0x1]
    %212 = vset.pattern.permute.xlu0 0
    %213 = vperm.xlu0 %212, %v205
    %v214 = vpop.permute.xlu0 %213
    %217 = vset.pattern.permute.xlu0 0
    %218 = vperm.xlu0 %217, %v206
    %v219 = vpop.permute.xlu0 %218
    %222 = vset.pattern.permute.xlu0 0
    %223 = vperm.xlu0 %222, %v207
    %v224 = vpop.permute.xlu0 %223
    %227 = vset.pattern.permute.xlu0 0
    %228 = vperm.xlu0 %227, %v208
    %v229 = vpop.permute.xlu0 %228
    %v232 = vperm.slane %v210, 0
    %v234 = vmul.f32 %v214, %v232
    %v235 = vmul.f32 %v219, %v232
    %v236 = vmul.f32 %v224, %v232
    %v237 = vmul.f32 %v229, %v232
    %v238 = vadd.f32 %v188, %v234
    %v239 = vadd.f32 %v189, %v235
    %v240 = vadd.f32 %v190, %v236
    %v241 = vadd.f32 %v191, %v237
    %v242 = vrot.slane %v90, 7
    %v243 = vrot.slane %v91, 7
    %v244 = vrot.slane %v92, 7
    %v245 = vrot.slane %v93, 7
    %vm246 = vcmp.lt.s32.totalorder %v95, 1
    %v247 = vsel %vm246, %v244, %v245
    %v248 = vsel %vm246, %v243, %v244
    %v249 = vsel %vm246, %v242, %v243
    %v250 = vsel %vm246, %v245, %v242
    %vm251 = vcmp.ge.s32.totalorder %v143, 1
    %vm252 = vcmp.ge.s32.totalorder %v144, 1
    %vm253 = vcmp.ge.s32.totalorder %v145, 1
    %vm254 = vcmp.ge.s32.totalorder %v146, 1
    %v255 = vsel %vm251, %v250, 0.0
    %v256 = vsel %vm252, %v249, 0.0
    %v257 = vsel %vm253, %v248, 0.0
    %v258 = vsel %vm254, %v247, 0.0
    %s259 = scalar_lea.vmem %s1, 2
    %v260 = vld [vmem:[%s259] sm:$0x1]
    %262 = vset.pattern.permute.xlu0 0
    %263 = vperm.xlu0 %262, %v255
    %v264 = vpop.permute.xlu0 %263
    %267 = vset.pattern.permute.xlu0 0
    %268 = vperm.xlu0 %267, %v256
    %v269 = vpop.permute.xlu0 %268
    %272 = vset.pattern.permute.xlu0 0
    %273 = vperm.xlu0 %272, %v257
    %v274 = vpop.permute.xlu0 %273
    %277 = vset.pattern.permute.xlu0 0
    %278 = vperm.xlu0 %277, %v258
    %v279 = vpop.permute.xlu0 %278
    %v282 = vperm.slane %v260, 0
    %v284 = vmul.f32 %v264, %v282
    %v285 = vmul.f32 %v269, %v282
    %v286 = vmul.f32 %v274, %v282
    %v287 = vmul.f32 %v279, %v282
    %v288 = vadd.f32 %v238, %v284
    %v289 = vadd.f32 %v239, %v285
    %v290 = vadd.f32 %v240, %v286
    %v291 = vadd.f32 %v241, %v287
    %s292 = scalar_lea.vmem %s1, 3
    %v293 = vld [vmem:[%s292] sm:$0x1]
    %295 = vset.pattern.permute.xlu0 0
    %296 = vperm.xlu0 %295, %v90
    %v297 = vpop.permute.xlu0 %296
    %300 = vset.pattern.permute.xlu0 0
    %301 = vperm.xlu0 %300, %v91
    %v302 = vpop.permute.xlu0 %301
    %305 = vset.pattern.permute.xlu0 0
    %306 = vperm.xlu0 %305, %v92
    %v307 = vpop.permute.xlu0 %306
    %310 = vset.pattern.permute.xlu0 0
    %311 = vperm.xlu0 %310, %v93
    %v312 = vpop.permute.xlu0 %311
    %v315 = vperm.slane %v293, 0
    %v317 = vmul.f32 %v297, %v315
    %v318 = vmul.f32 %v302, %v315
    %v319 = vmul.f32 %v307, %v315
    %v320 = vmul.f32 %v312, %v315
    %v321 = vadd.f32 %v288, %v317
    %v322 = vadd.f32 %v289, %v318
    %v323 = vadd.f32 %v290, %v319
    %v324 = vadd.f32 %v291, %v320
    %v325 = vrot.slane %v90, 1
    %v326 = vrot.slane %v91, 1
    %v327 = vrot.slane %v92, 1
    %v328 = vrot.slane %v93, 1
    %vm329 = vcmp.lt.s32.totalorder %v95, 7
    %v330 = vsel %vm329, %v327, %v328
    %v331 = vsel %vm329, %v326, %v327
    %v332 = vsel %vm329, %v325, %v326
    %v333 = vsel %vm329, %v328, %v325
    %vm334 = vcmp.lt.s32.totalorder %v143, 15
    %vm335 = vcmp.lt.s32.totalorder %v144, 15
    %vm336 = vcmp.lt.s32.totalorder %v145, 15
    %vm337 = vcmp.lt.s32.totalorder %v146, 15
    %v338 = vsel %vm334, %v332, 0.0
    %v339 = vsel %vm335, %v331, 0.0
    %v340 = vsel %vm336, %v330, 0.0
    %v341 = vsel %vm337, %v333, 0.0
    %s342 = scalar_lea.vmem %s1, 4
    %v343 = vld [vmem:[%s342] sm:$0x1]
    %345 = vset.pattern.permute.xlu0 0
    %346 = vperm.xlu0 %345, %v338
    %v347 = vpop.permute.xlu0 %346
    %350 = vset.pattern.permute.xlu0 0
    %351 = vperm.xlu0 %350, %v339
    %v352 = vpop.permute.xlu0 %351
    %355 = vset.pattern.permute.xlu0 0
    %356 = vperm.xlu0 %355, %v340
    %v357 = vpop.permute.xlu0 %356
    %360 = vset.pattern.permute.xlu0 0
    %361 = vperm.xlu0 %360, %v341
    %v362 = vpop.permute.xlu0 %361
    %v365 = vperm.slane %v343, 0
    %v367 = vmul.f32 %v347, %v365
    %v368 = vmul.f32 %v352, %v365
    %v369 = vmul.f32 %v357, %v365
    %v370 = vmul.f32 %v362, %v365
    %v371 = vadd.f32 %v321, %v367
    %v372 = vadd.f32 %v322, %v368
    %v373 = vadd.f32 %v323, %v369
    %v374 = vadd.f32 %v324, %v370
    %v375 = vrot.slane %v90, 2
    %v376 = vrot.slane %v91, 2
    %v377 = vrot.slane %v92, 2
    %v378 = vrot.slane %v93, 2
    %vm379 = vcmp.lt.s32.totalorder %v95, 6
    %v380 = vsel %vm379, %v377, %v378
    %v381 = vsel %vm379, %v376, %v377
    %v382 = vsel %vm379, %v375, %v376
    %v383 = vsel %vm379, %v378, %v375
    %vm384 = vcmp.lt.s32.totalorder %v143, 14
    %vm385 = vcmp.lt.s32.totalorder %v144, 14
    %vm386 = vcmp.lt.s32.totalorder %v145, 14
    %vm387 = vcmp.lt.s32.totalorder %v146, 14
    %v388 = vsel %vm384, %v382, 0.0
    %v389 = vsel %vm385, %v381, 0.0
    %v390 = vsel %vm386, %v380, 0.0
    %v391 = vsel %vm387, %v383, 0.0
    %s392 = scalar_lea.vmem %s1, 5
    %v393 = vld [vmem:[%s392] sm:$0x1]
    %395 = vset.pattern.permute.xlu0 0
    %396 = vperm.xlu0 %395, %v388
    %v397 = vpop.permute.xlu0 %396
    %400 = vset.pattern.permute.xlu0 0
    %401 = vperm.xlu0 %400, %v389
    %v402 = vpop.permute.xlu0 %401
    %405 = vset.pattern.permute.xlu0 0
    %406 = vperm.xlu0 %405, %v390
    %v407 = vpop.permute.xlu0 %406
    %410 = vset.pattern.permute.xlu0 0
    %411 = vperm.xlu0 %410, %v391
    %v412 = vpop.permute.xlu0 %411
    %v415 = vperm.slane %v393, 0
    %v417 = vmul.f32 %v397, %v415
    %v418 = vmul.f32 %v402, %v415
    %v419 = vmul.f32 %v407, %v415
    %v420 = vmul.f32 %v412, %v415
    %v421 = vadd.f32 %v371, %v417
    %v422 = vadd.f32 %v372, %v418
    %v423 = vadd.f32 %v373, %v419
    %v424 = vadd.f32 %v374, %v420
    %v425 = vrot.slane %v90, 3
    %v426 = vrot.slane %v91, 3
    %v427 = vrot.slane %v92, 3
    %v428 = vrot.slane %v93, 3
    %vm429 = vcmp.lt.s32.totalorder %v95, 5
    %v430 = vsel %vm429, %v427, %v428
    %v431 = vsel %vm429, %v426, %v427
    %v432 = vsel %vm429, %v425, %v426
    %v433 = vsel %vm429, %v428, %v425
    %vm434 = vcmp.lt.s32.totalorder %v143, 13
    %vm435 = vcmp.lt.s32.totalorder %v144, 13
    %vm436 = vcmp.lt.s32.totalorder %v145, 13
    %vm437 = vcmp.lt.s32.totalorder %v146, 13
    %v438 = vsel %vm434, %v432, 0.0
    %v439 = vsel %vm435, %v431, 0.0
    %v440 = vsel %vm436, %v430, 0.0
    %v441 = vsel %vm437, %v433, 0.0
    %s442 = scalar_lea.vmem %s1, 6
    %v443 = vld [vmem:[%s442] sm:$0x1]
    %445 = vset.pattern.permute.xlu0 0
    %446 = vperm.xlu0 %445, %v438
    %v447 = vpop.permute.xlu0 %446
    %450 = vset.pattern.permute.xlu0 0
    %451 = vperm.xlu0 %450, %v439
    %v452 = vpop.permute.xlu0 %451
    %455 = vset.pattern.permute.xlu0 0
    %456 = vperm.xlu0 %455, %v440
    %v457 = vpop.permute.xlu0 %456
    %460 = vset.pattern.permute.xlu0 0
    %461 = vperm.xlu0 %460, %v441
    %v462 = vpop.permute.xlu0 %461
    %v465 = vperm.slane %v443, 0
    %v467 = vmul.f32 %v447, %v465
    %v468 = vmul.f32 %v452, %v465
    %v469 = vmul.f32 %v457, %v465
    %v470 = vmul.f32 %v462, %v465
    %v471 = vadd.f32 %v421, %v467
    %v472 = vadd.f32 %v422, %v468
    %v473 = vadd.f32 %v423, %v469
    %v474 = vadd.f32 %v424, %v470
    %v475 = vld [vmem:[%s2] sm:$0x1]
    %v477 = vperm.slane %v475, 0
    %v479 = vadd.f32 %v471, %v477
    %v480 = vadd.f32 %v472, %v477
    %v481 = vadd.f32 %v473, %v477
    %v482 = vadd.f32 %v474, %v477
    %v483 = vmax.f32 %v479, 0.0
    %v484 = vmax.f32 %v480, 0.0
    %v485 = vmax.f32 %v481, 0.0
    %v486 = vmax.f32 %v482, 0.0
    %v487 = vrot.slane %v483, 6
    %v488 = vrot.slane %v484, 6
    %v489 = vrot.slane %v485, 6
    %v490 = vrot.slane %v486, 6
    %v491 = vsel %vm196, %v489, %v490
    %v492 = vsel %vm196, %v488, %v489
    %v493 = vsel %vm196, %v487, %v488
    %v494 = vsel %vm196, %v490, %v487
    %v495 = vsel %vm201, 1, 0
    %v496 = vsel %vm202, 1, 0
    %v497 = vsel %vm203, 1, 0
    %v498 = vsel %vm204, 1, 0
    %vm499 = vcmp.eq.s32.totalorder %v495, 1
    %vm500 = vcmp.eq.s32.totalorder %v496, 1
    %vm501 = vcmp.eq.s32.totalorder %v497, 1
    %vm502 = vcmp.eq.s32.totalorder %v498, 1
    %v503 = vsel %vm499, %v494, 0.0
    %v504 = vsel %vm500, %v493, 0.0
    %v505 = vsel %vm501, %v492, 0.0
    %v506 = vsel %vm502, %v491, 0.0
    %v507 = vrot.slane %v483, 7
    %v508 = vrot.slane %v484, 7
    %v509 = vrot.slane %v485, 7
    %v510 = vrot.slane %v486, 7
    %v511 = vsel %vm246, %v509, %v510
    %v512 = vsel %vm246, %v508, %v509
    %v513 = vsel %vm246, %v507, %v508
    %v514 = vsel %vm246, %v510, %v507
    %v515 = vsel %vm251, 1, 0
    %v516 = vsel %vm252, 1, 0
    %v517 = vsel %vm253, 1, 0
    %v518 = vsel %vm254, 1, 0
    %vm519 = vcmp.eq.s32.totalorder %v515, 1
    %vm520 = vcmp.eq.s32.totalorder %v516, 1
    %vm521 = vcmp.eq.s32.totalorder %v517, 1
    %vm522 = vcmp.eq.s32.totalorder %v518, 1
    %v523 = vsel %vm519, %v514, 0.0
    %v524 = vsel %vm520, %v513, 0.0
    %v525 = vsel %vm521, %v512, 0.0
    %v526 = vsel %vm522, %v511, 0.0
    %v527 = vrot.slane %v483, 1
    %v528 = vrot.slane %v484, 1
    %v529 = vrot.slane %v485, 1
    %v530 = vrot.slane %v486, 1
    %v531 = vsel %vm329, %v529, %v530
    %v532 = vsel %vm329, %v528, %v529
    %v533 = vsel %vm329, %v527, %v528
    %v534 = vsel %vm329, %v530, %v527
    %v535 = vsel %vm334, 1, 0
    %v536 = vsel %vm335, 1, 0
    %v537 = vsel %vm336, 1, 0
    %v538 = vsel %vm337, 1, 0
    %vm539 = vcmp.eq.s32.totalorder %v535, 1
    %vm540 = vcmp.eq.s32.totalorder %v536, 1
    %vm541 = vcmp.eq.s32.totalorder %v537, 1
    %vm542 = vcmp.eq.s32.totalorder %v538, 1
    %v543 = vsel %vm539, %v533, 0.0
    %v544 = vsel %vm540, %v532, 0.0
    %v545 = vsel %vm541, %v531, 0.0
    %v546 = vsel %vm542, %v534, 0.0
    %v547 = vrot.slane %v483, 2
    %v548 = vrot.slane %v484, 2
    %v549 = vrot.slane %v485, 2
    %v550 = vrot.slane %v486, 2
    %v551 = vsel %vm379, %v549, %v550
    %v552 = vsel %vm379, %v548, %v549
    %v553 = vsel %vm379, %v547, %v548
    %v554 = vsel %vm379, %v550, %v547
    %v555 = vsel %vm384, 1, 0
    %v556 = vsel %vm385, 1, 0
    %v557 = vsel %vm386, 1, 0
    %v558 = vsel %vm387, 1, 0
    %vm559 = vcmp.eq.s32.totalorder %v555, 1
    %vm560 = vcmp.eq.s32.totalorder %v556, 1
    %vm561 = vcmp.eq.s32.totalorder %v557, 1
    %vm562 = vcmp.eq.s32.totalorder %v558, 1
    %v563 = vsel %vm559, %v553, 0.0
    %v564 = vsel %vm560, %v552, 0.0
    %v565 = vsel %vm561, %v551, 0.0
    %v566 = vsel %vm562, %v554, 0.0
    %571 = vrot.lane.b32.xlu0 %v523, 4
    %v572 = vpop.permute.xlu0 %571
    %573 = vrot.lane.b32.xlu0 %v524, 4
    %v574 = vpop.permute.xlu0 %573
    %575 = vrot.lane.b32.xlu0 %v525, 4
    %v576 = vpop.permute.xlu0 %575
    %577 = vrot.lane.b32.xlu0 %v526, 4
    %v578 = vpop.permute.xlu0 %577
    %587 = vrot.lane.b32.xlu0 %v483, 8
    %v588 = vpop.permute.xlu0 %587
    %589 = vrot.lane.b32.xlu0 %v484, 8
    %v590 = vpop.permute.xlu0 %589
    %591 = vrot.lane.b32.xlu0 %v485, 8
    %v592 = vpop.permute.xlu0 %591
    %593 = vrot.lane.b32.xlu0 %v486, 8
    %v594 = vpop.permute.xlu0 %593
    %603 = vrot.lane.b32.xlu0 %v543, 12
    %v604 = vpop.permute.xlu0 %603
    %605 = vrot.lane.b32.xlu0 %v544, 12
    %v606 = vpop.permute.xlu0 %605
    %607 = vrot.lane.b32.xlu0 %v545, 12
    %v608 = vpop.permute.xlu0 %607
    %609 = vrot.lane.b32.xlu0 %v546, 12
    %v610 = vpop.permute.xlu0 %609
    %619 = vrot.lane.b32.xlu0 %v563, 16
    %v620 = vpop.permute.xlu0 %619
    %621 = vrot.lane.b32.xlu0 %v564, 16
    %v622 = vpop.permute.xlu0 %621
    %623 = vrot.lane.b32.xlu0 %v565, 16
    %v624 = vpop.permute.xlu0 %623
    %625 = vrot.lane.b32.xlu0 %v566, 16
    %v626 = vpop.permute.xlu0 %625
    %vm631 = vcmask 31744
    %v632 = vsel %vm631, %v503, %v572
    %v633 = vsel %vm631, %v504, %v574
    %v634 = vsel %vm631, %v505, %v576
    %v635 = vsel %vm631, %v506, %v578
    %vm636 = vcmask 64512
    %v637 = vsel %vm636, %v632, %v588
    %v638 = vsel %vm636, %v633, %v590
    %v639 = vsel %vm636, %v634, %v592
    %v640 = vsel %vm636, %v635, %v594
    %vm641 = vcmask 97280
    %v642 = vsel %vm641, %v637, %v604
    %v643 = vsel %vm641, %v638, %v606
    %v644 = vsel %vm641, %v639, %v608
    %v645 = vsel %vm641, %v640, %v610
    %vm646 = vcmask 130048
    %v647 = vsel %vm646, %v642, %v620
    %v648 = vsel %vm646, %v643, %v622
    %v649 = vsel %vm646, %v644, %v624
    %v650 = vsel %vm646, %v645, %v626
    %v651 = vld [vmem:[%s3] sm:$0xf]
    %v652 = vld [vmem:[%s3 + $0x4] sm:$0xf]
    %v653 = vld [vmem:[%s3 + $0x8] sm:$0x3]
    %v654 = vpack.c.bf16 %v648, %v647
    %v655 = vpack.c.bf16 %v650, %v649
    %v656 = vld [vmem:[%s4] sm:$0x1]
    %v658 = vperm.slane %v656, 0
    %v663 = vunpack.c.l.b16 %v651
    %v664 = vunpack.c.l.b16 %v652
    %v665 = vunpack.c.l.b16 %v653
    %v666 = vpack.c.b16 %v664, %v663
    %v667 = vpack.c.b16 %v665, %v665
    %vm669 = vcmask 162816
    %v671 = vsel %vm669, %v654, 0
    %v674 = vsel %vm669, %v655, 0
    %vm676 = vcmask 1041408
    %v678 = vsel %vm676, %v667, 0
    %680 = vmatpush.bf16.msra.mxu0 0
    %681 = vmatpush.bf16.msra.mxu0 0
    %682 = vmatpush.bf16.msra.mxu0 0
    %683 = vmatpush.bf16.msra.mxu0 0
    %684 = vmatpush.bf16.msra.mxu0 0
    %685 = vmatpush.bf16.msra.mxu0 0
    %686 = vmatpush.bf16.msra.mxu0 %v678
    %687 = vmatpush.bf16.msra.mxu0 %v666
    %688 = vmatmul.bf16.gmra.mxu0 %v671
    %v689 = vpop.f32.mrf.mxu0
    %v690 = vadd.f32 %v658, %v689
    %v691 = vpop.f32.mrf.mxu0
    %v692 = vadd.f32 %v658, %v691
    %693 = vmatmul.bf16.gmra.mxu0 %v674
    %v694 = vpop.f32.mrf.mxu0
    %v695 = vadd.f32 %v658, %v694
    %v696 = vpop.f32.mrf.mxu0
    %v697 = vadd.f32 %v658, %v696
    %698 = vdwg.mxu0
    %v699 = vmax.f32 %v690, 0.0
    %v700 = vmax.f32 %v692, 0.0
    %v701 = vmax.f32 %v695, 0.0
    %v702 = vmax.f32 %v697, 0.0
    %v703 = vrot.slane %v699, 7
    %v704 = vrot.slane %v700, 7
    %v705 = vrot.slane %v701, 7
    %v706 = vrot.slane %v702, 7
    %v707 = vsel %vm246, %v705, %v706
    %v708 = vsel %vm246, %v704, %v705
    %v709 = vsel %vm246, %v703, %v704
    %v710 = vsel %vm246, %v706, %v703
    %v711 = vsel %vm519, %v710, 0.0
    %v712 = vsel %vm520, %v709, 0.0
    %v713 = vsel %vm521, %v708, 0.0
    %v714 = vsel %vm522, %v707, 0.0
    %v715 = vrot.slane %v699, 1
    %v716 = vrot.slane %v700, 1
    %v717 = vrot.slane %v701, 1
    %v718 = vrot.slane %v702, 1
    %v719 = vsel %vm329, %v717, %v718
    %v720 = vsel %vm329, %v716, %v717
    %v721 = vsel %vm329, %v715, %v716
    %v722 = vsel %vm329, %v718, %v715
    %v723 = vsel %vm539, %v721, 0.0
    %v724 = vsel %vm540, %v720, 0.0
    %v725 = vsel %vm541, %v719, 0.0
    %v726 = vsel %vm542, %v722, 0.0
    %731 = vrot.lane.b32.xlu0 %v699, 8
    %v732 = vpop.permute.xlu0 %731
    %733 = vrot.lane.b32.xlu0 %v700, 8
    %v734 = vpop.permute.xlu0 %733
    %735 = vrot.lane.b32.xlu0 %v701, 8
    %v736 = vpop.permute.xlu0 %735
    %737 = vrot.lane.b32.xlu0 %v702, 8
    %v738 = vpop.permute.xlu0 %737
    %747 = vrot.lane.b32.xlu0 %v723, 16
    %v748 = vpop.permute.xlu0 %747
    %749 = vrot.lane.b32.xlu0 %v724, 16
    %v750 = vpop.permute.xlu0 %749
    %751 = vrot.lane.b32.xlu0 %v725, 16
    %v752 = vpop.permute.xlu0 %751
    %753 = vrot.lane.b32.xlu0 %v726, 16
    %v754 = vpop.permute.xlu0 %753
    %v759 = vsel %vm636, %v711, %v732
    %v760 = vsel %vm636, %v712, %v734
    %v761 = vsel %vm636, %v713, %v736
    %v762 = vsel %vm636, %v714, %v738
    %v763 = vsel %vm646, %v759, %v748
    %v764 = vsel %vm646, %v760, %v750
    %v765 = vsel %vm646, %v761, %v752
    %v766 = vsel %vm646, %v762, %v754
    %v767 = vld [vmem:[%s5] sm:$0xf]
    %v768 = vld [vmem:[%s5 + $0x4] sm:$0xf]
    %v769 = vld [vmem:[%s5 + $0x8] sm:$0xf]
    %v770 = vpack.c.bf16 %v764, %v763
    %v771 = vpack.c.bf16 %v766, %v765
    %v772 = vld [vmem:[%s6] sm:$0x1]
    %v774 = vperm.slane %v772, 0
    %v779 = vunpack.c.l.b16 %v767
    %v780 = vunpack.c.l.b16 %v768
    %v781 = vunpack.c.l.b16 %v769
    %v782 = vpack.c.b16 %v780, %v779
    %v783 = vpack.c.b16 %v781, %v781
    %vm785 = vcmask 195584
    %v787 = vsel %vm785, %v770, 0
    %v790 = vsel %vm785, %v771, 0
    %vm792 = vcmask 1043456
    %v794 = vsel %vm792, %v783, 0
    %796 = vmatpush.bf16.msra.mxu0 0
    %797 = vmatpush.bf16.msra.mxu0 0
    %798 = vmatpush.bf16.msra.mxu0 0
    %799 = vmatpush.bf16.msra.mxu0 0
    %800 = vmatpush.bf16.msra.mxu0 0
    %801 = vmatpush.bf16.msra.mxu0 0
    %802 = vmatpush.bf16.msra.mxu0 %v794
    %803 = vmatpush.bf16.msra.mxu0 %v782
    %804 = vmatmul.bf16.gmra.mxu0 %v787
    %v805 = vpop.f32.mrf.mxu0
    %v806 = vadd.f32 %v774, %v805
    %v807 = vpop.f32.mrf.mxu0
    %v808 = vadd.f32 %v774, %v807
    %809 = vmatmul.bf16.gmra.mxu0 %v790
    %v810 = vpop.f32.mrf.mxu0
    %v811 = vadd.f32 %v774, %v810
    %v812 = vpop.f32.mrf.mxu0
    %v813 = vadd.f32 %v774, %v812
    %814 = vdwg.mxu0
    %v815 = vmax.f32 %v806, 0.0
    %v816 = vmax.f32 %v808, 0.0
    %v817 = vmax.f32 %v811, 0.0
    %v818 = vmax.f32 %v813, 0.0
    %v819 = vpack.c.bf16 %v816, %v815
    %v820 = vpack.c.bf16 %v818, %v817
    %v821 = vld [vmem:[%s7] sm:$0x1]
    %v823 = vperm.slane %v821, 0
    %v825 = vmul.f32 %v297, %v823
    %v826 = vmul.f32 %v302, %v823
    %v827 = vmul.f32 %v307, %v823
    %v828 = vmul.f32 %v312, %v823
    %v829 = vld [vmem:[%s8] sm:$0x1]
    %v831 = vperm.slane %v829, 0
    %v833 = vadd.f32 %v825, %v831
    %v834 = vadd.f32 %v826, %v831
    %v835 = vadd.f32 %v827, %v831
    %v836 = vadd.f32 %v828, %v831
    loop: start=0, step=1, limit=2
    $region106: #{tpu_custom_call.1} parent=1 // loop_pre_header
      _
    $region107: #{tpu_custom_call.1} parent=1 // loop_header
      %s838 = sphi 0, %s842
      %p839 = scmp.ge.s32.totalorder %s838, 2
      %v843 = vphi %v833, %v1524
      %v844 = vphi %v834, %v1525
      %v845 = vphi %v835, %v1526
      %v846 = vphi %v836, %v1527
      %v847 = vphi 0.0, %v1504
      %v848 = vphi 0.0, %v1505
      %v849 = vphi 0.0, %v1506
      %v850 = vphi 0.0, %v1507
    $region108: #{tpu_custom_call.1} parent=1 // loop_header_branch
      %841 = sbr.rel (%p839) target = $region112
    $region109: #{tpu_custom_call.1} parent=1 // loop_body
      %s851 = smul.u32 %s838, 2
      %v852 = vrot.slane %v843, 7
      %v853 = vrot.slane %v844, 7
      %v854 = vrot.slane %v845, 7
      %v855 = vrot.slane %v846, 7
      %v856 = vsel %vm246, %v854, %v855
      %v857 = vsel %vm246, %v853, %v854
      %v858 = vsel %vm246, %v852, %v853
      %v859 = vsel %vm246, %v855, %v852
      %v860 = vsel %vm519, %v859, 0.0
      %v861 = vsel %vm520, %v858, 0.0
      %v862 = vsel %vm521, %v857, 0.0
      %v863 = vsel %vm522, %v856, 0.0
      %868 = vrot.lane.b32.xlu0 %v843, 16
      %v869 = vpop.permute.xlu0 %868
      %870 = vrot.lane.b32.xlu0 %v844, 16
      %v871 = vpop.permute.xlu0 %870
      %872 = vrot.lane.b32.xlu0 %v845, 16
      %v873 = vpop.permute.xlu0 %872
      %874 = vrot.lane.b32.xlu0 %v846, 16
      %v875 = vpop.permute.xlu0 %874
      %v880 = vsel %vm646, %v860, %v869
      %v881 = vsel %vm646, %v861, %v871
      %v882 = vsel %vm646, %v862, %v873
      %v883 = vsel %vm646, %v863, %v875
      %v884 = vpack.c.bf16 %v881, %v880
      %v885 = vpack.c.bf16 %v883, %v882
      %s886 = smul.u32 %s851, 4
      %s887 = smul.addr %s886, 4
      %s888 = scalar_lea.vmem %s9, %s887
      %v889 = vld [vmem:[%s888] sm:$0xf]
      %v890 = vld [vmem:[%s888 + $0x4] sm:$0xf]
      %v891 = vld [vmem:[%s888 + $0x8] sm:$0xf]
      %v892 = vld [vmem:[%s888 + $0xc] sm:$0xf]
      %s893 = scalar_lea.vmem %s10, %s851
      %v894 = vld [vmem:[%s893] sm:$0x1]
      %v896 = vperm.slane %v894, 0
      %v902 = vunpack.c.l.b16 %v889
      %v903 = vunpack.c.l.b16 %v890
      %v904 = vunpack.c.l.b16 %v891
      %v905 = vunpack.c.l.b16 %v892
      %v906 = vpack.c.b16 %v903, %v902
      %v907 = vpack.c.b16 %v905, %v904
      %vm910 = vcmask 261120
      %v912 = vsel %vm910, %v884, 0
      %v915 = vsel %vm910, %v885, 0
      %917 = vmatpush.bf16.msra.mxu0 0
      %918 = vmatpush.bf16.msra.mxu0 0
      %919 = vmatpush.bf16.msra.mxu0 0
      %920 = vmatpush.bf16.msra.mxu0 0
      %921 = vmatpush.bf16.msra.mxu0 0
      %922 = vmatpush.bf16.msra.mxu0 0
      %923 = vmatpush.bf16.msra.mxu0 %v907
      %924 = vmatpush.bf16.msra.mxu0 %v906
      %925 = vmatmul.bf16.gmra.mxu0 %v912
      %v926 = vpop.f32.mrf.mxu0
      %v927 = vadd.f32 %v896, %v926
      %v928 = vpop.f32.mrf.mxu0
      %v929 = vadd.f32 %v896, %v928
      %930 = vmatmul.bf16.gmra.mxu0 %v915
      %v931 = vpop.f32.mrf.mxu0
      %v932 = vadd.f32 %v896, %v931
      %v933 = vpop.f32.mrf.mxu0
      %v934 = vadd.f32 %v896, %v933
      %935 = vdwg.mxu0
      %s936 = smul.u32 %s851, 2
      %s937 = smul.addr %s936, 4
      %s938 = scalar_lea.vmem %s11, %s937
      %v939 = vld [vmem:[%s938] sm:$0xf]
      %v940 = vld [vmem:[%s938 + $0x4] sm:$0xf]
      %v943 = vunpack.c.l.b16 %v939
      %v944 = vunpack.c.l.b16 %v940
      %v945 = vpack.c.b16 %v944, %v943
      %v948 = vsel %vm646, %v819, 0
      %v951 = vsel %vm646, %v820, 0
      %953 = vmatpush.bf16.msra.mxu0 0
      %954 = vmatpush.bf16.msra.mxu0 0
      %955 = vmatpush.bf16.msra.mxu0 0
      %956 = vmatpush.bf16.msra.mxu0 0
      %957 = vmatpush.bf16.msra.mxu0 0
      %958 = vmatpush.bf16.msra.mxu0 0
      %959 = vmatpush.bf16.msra.mxu0 0
      %960 = vmatpush.bf16.msra.mxu0 %v945
      %961 = vmatmul.bf16.gmra.mxu0 %v948
      %v962 = vpop.f32.mrf.mxu0
      %v963 = vadd.f32 0.0, %v962
      %v964 = vpop.f32.mrf.mxu0
      %v965 = vadd.f32 0.0, %v964
      %966 = vmatmul.bf16.gmra.mxu0 %v951
      %v967 = vpop.f32.mrf.mxu0
      %v968 = vadd.f32 0.0, %v967
      %v969 = vpop.f32.mrf.mxu0
      %v970 = vadd.f32 0.0, %v969
      %971 = vdwg.mxu0
      %v972 = vadd.f32 %v927, %v963
      %v973 = vadd.f32 %v929, %v965
      %v974 = vadd.f32 %v932, %v968
      %v975 = vadd.f32 %v934, %v970
      %s976 = scalar_lea.vmem %s12, %s851
      %v977 = vld [vmem:[%s976] sm:$0x1]
      %v979 = vperm.slane %v977, 0
      %v981 = vadd.f32 %v972, %v979
      %v982 = vadd.f32 %v973, %v979
      %v983 = vadd.f32 %v974, %v979
      %v984 = vadd.f32 %v975, %v979
      %s985 = smul.addr %s936, 4
      %s986 = scalar_lea.vmem %s13, %s985
      %v987 = vld [vmem:[%s986] sm:$0xf]
      %v988 = vld [vmem:[%s986 + $0x4] sm:$0xf]
      %v989 = vpack.c.bf16 %v982, %v981
      %v990 = vpack.c.bf16 %v984, %v983
      %s991 = scalar_lea.vmem %s14, %s851
      %v992 = vld [vmem:[%s991] sm:$0x1]
      %v994 = vperm.slane %v992, 0
      %v998 = vunpack.c.l.b16 %v987
      %v999 = vunpack.c.l.b16 %v988
      %v1000 = vpack.c.b16 %v999, %v998
      %v1003 = vsel %vm646, %v989, 0
      %v1006 = vsel %vm646, %v990, 0
      %1008 = vmatpush.bf16.msra.mxu0 0
      %1009 = vmatpush.bf16.msra.mxu0 0
      %1010 = vmatpush.bf16.msra.mxu0 0
      %1011 = vmatpush.bf16.msra.mxu0 0
      %1012 = vmatpush.bf16.msra.mxu0 0
      %1013 = vmatpush.bf16.msra.mxu0 0
      %1014 = vmatpush.bf16.msra.mxu0 0
      %1015 = vmatpush.bf16.msra.mxu0 %v1000
      %1016 = vmatmul.bf16.gmra.mxu0 %v1003
      %v1017 = vpop.f32.mrf.mxu0
      %v1018 = vadd.f32 %v994, %v1017
      %v1019 = vpop.f32.mrf.mxu0
      %v1020 = vadd.f32 %v994, %v1019
      %1021 = vmatmul.bf16.gmra.mxu0 %v1006
      %v1022 = vpop.f32.mrf.mxu0
      %v1023 = vadd.f32 %v994, %v1022
      %v1024 = vpop.f32.mrf.mxu0
      %v1025 = vadd.f32 %v994, %v1024
      %1026 = vdwg.mxu0
      %v1027 = vtanh.pop %v1018
      %v1028 = vtanh.pop %v1020
      %v1029 = vtanh.pop %v1023
      %v1030 = vtanh.pop %v1025
      %v1031 = vxor.u32 %v1018, 2147483648
      %v1032 = vxor.u32 %v1020, 2147483648
      %v1033 = vxor.u32 %v1023, 2147483648
      %v1034 = vxor.u32 %v1025, 2147483648
      %v1035 = vmul.f32 %v1031, 1.442695
      %v1036 = vpow.pop %v1035
      %v1037 = vmul.f32 %v1032, 1.442695
      %v1038 = vpow.pop %v1037
      %v1039 = vmul.f32 %v1033, 1.442695
      %v1040 = vpow.pop %v1039
      %v1041 = vmul.f32 %v1034, 1.442695
      %v1042 = vpow.pop %v1041
      %v1043 = vadd.f32 %v1036, 1.0
      %v1044 = vadd.f32 %v1038, 1.0
      %v1045 = vadd.f32 %v1040, 1.0
      %v1046 = vadd.f32 %v1042, 1.0
      %v1047 = vrcp.pop %v1043
      %v1048 = vmul.f32 %v1043, %v1047
      %v1049 = vsub.f32 1.0, %v1048
      %v1050 = vmul.f32 %v1047, %v1049
      %v1051 = vadd.f32 %v1047, %v1050
      %vm1052 = vweird.f32 %v1043
      %vm1053 = vweird.f32 %v1047
      %vm1054 = vmor %vm1052, %vm1053
      %v1055 = vsel %vm1054, %v1047, %v1051
      %v1056 = vand.u32 2147483647, %v1043
      %vm1057 = vcmp.eq.f32.partialorder %v1056, 8.507059e+37
      %v1058 = vand.u32 %v1043, 2147483648
      %v1059 = vor.u32 1.1754944e-38, %v1058
      %v1060 = vsel %vm1057, %v1059, %v1055
      %v1061 = vmul.f32 1.0, %v1060
      %v1062 = vrcp.pop %v1044
      %v1063 = vmul.f32 %v1044, %v1062
      %v1064 = vsub.f32 1.0, %v1063
      %v1065 = vmul.f32 %v1062, %v1064
      %v1066 = vadd.f32 %v1062, %v1065
      %vm1067 = vweird.f32 %v1044
      %vm1068 = vweird.f32 %v1062
      %vm1069 = vmor %vm1067, %vm1068
      %v1070 = vsel %vm1069, %v1062, %v1066
      %v1071 = vand.u32 2147483647, %v1044
      %vm1072 = vcmp.eq.f32.partialorder %v1071, 8.507059e+37
      %v1073 = vand.u32 %v1044, 2147483648
      %v1074 = vor.u32 1.1754944e-38, %v1073
      %v1075 = vsel %vm1072, %v1074, %v1070
      %v1076 = vmul.f32 1.0, %v1075
      %v1077 = vrcp.pop %v1045
      %v1078 = vmul.f32 %v1045, %v1077
      %v1079 = vsub.f32 1.0, %v1078
      %v1080 = vmul.f32 %v1077, %v1079
      %v1081 = vadd.f32 %v1077, %v1080
      %vm1082 = vweird.f32 %v1045
      %vm1083 = vweird.f32 %v1077
      %vm1084 = vmor %vm1082, %vm1083
      %v1085 = vsel %vm1084, %v1077, %v1081
      %v1086 = vand.u32 2147483647, %v1045
      %vm1087 = vcmp.eq.f32.partialorder %v1086, 8.507059e+37
      %v1088 = vand.u32 %v1045, 2147483648
      %v1089 = vor.u32 1.1754944e-38, %v1088
      %v1090 = vsel %vm1087, %v1089, %v1085
      %v1091 = vmul.f32 1.0, %v1090
      %v1092 = vrcp.pop %v1046
      %v1093 = vmul.f32 %v1046, %v1092
      %v1094 = vsub.f32 1.0, %v1093
      %v1095 = vmul.f32 %v1092, %v1094
      %v1096 = vadd.f32 %v1092, %v1095
      %vm1097 = vweird.f32 %v1046
      %vm1098 = vweird.f32 %v1092
      %vm1099 = vmor %vm1097, %vm1098
      %v1100 = vsel %vm1099, %v1092, %v1096
      %v1101 = vand.u32 2147483647, %v1046
      %vm1102 = vcmp.eq.f32.partialorder %v1101, 8.507059e+37
      %v1103 = vand.u32 %v1046, 2147483648
      %v1104 = vor.u32 1.1754944e-38, %v1103
      %v1105 = vsel %vm1102, %v1104, %v1100
      %v1106 = vmul.f32 1.0, %v1105
      %1111 = vrot.lane.b32.xlu0 %v1061, 112
      %v1112 = vpop.permute.xlu0 %1111
      %1113 = vrot.lane.b32.xlu0 %v1076, 112
      %v1114 = vpop.permute.xlu0 %1113
      %1115 = vrot.lane.b32.xlu0 %v1091, 112
      %v1116 = vpop.permute.xlu0 %1115
      %1117 = vrot.lane.b32.xlu0 %v1106, 112
      %v1118 = vpop.permute.xlu0 %1117
      %v1123 = vmul.f32 %v1027, %v1112
      %v1124 = vmul.f32 %v1028, %v1114
      %v1125 = vmul.f32 %v1029, %v1116
      %v1126 = vmul.f32 %v1030, %v1118
      %s1127 = smul.addr %s936, 4
      %s1128 = scalar_lea.vmem %s15, %s1127
      %v1129 = vld [vmem:[%s1128] sm:$0xf]
      %v1130 = vld [vmem:[%s1128 + $0x4] sm:$0xf]
      %v1131 = vpack.c.bf16 %v1124, %v1123
      %v1132 = vpack.c.bf16 %v1126, %v1125
      %s1133 = scalar_lea.vmem %s16, %s851
      %v1134 = vld [vmem:[%s1133] sm:$0x1]
      %v1136 = vperm.slane %v1134, 0
      %v1140 = vunpack.c.l.b16 %v1129
      %v1141 = vunpack.c.l.b16 %v1130
      %v1142 = vpack.c.b16 %v1141, %v1140
      %v1145 = vsel %vm646, %v1131, 0
      %v1148 = vsel %vm646, %v1132, 0
      %1150 = vmatpush.bf16.msra.mxu0 0
      %1151 = vmatpush.bf16.msra.mxu0 0
      %1152 = vmatpush.bf16.msra.mxu0 0
      %1153 = vmatpush.bf16.msra.mxu0 0
      %1154 = vmatpush.bf16.msra.mxu0 0
      %1155 = vmatpush.bf16.msra.mxu0 0
      %1156 = vmatpush.bf16.msra.mxu0 0
      %1157 = vmatpush.bf16.msra.mxu0 %v1142
      %1158 = vmatmul.bf16.gmra.mxu0 %v1145
      %v1159 = vpop.f32.mrf.mxu0
      %v1160 = vadd.f32 %v1136, %v1159
      %v1161 = vpop.f32.mrf.mxu0
      %v1162 = vadd.f32 %v1136, %v1161
      %1163 = vmatmul.bf16.gmra.mxu0 %v1148
      %v1164 = vpop.f32.mrf.mxu0
      %v1165 = vadd.f32 %v1136, %v1164
      %v1166 = vpop.f32.mrf.mxu0
      %v1167 = vadd.f32 %v1136, %v1166
      %1168 = vdwg.mxu0
      %v1169 = vadd.f32 %v847, %v1160
      %v1170 = vadd.f32 %v848, %v1162
      %v1171 = vadd.f32 %v849, %v1165
      %v1172 = vadd.f32 %v850, %v1167
      %1177 = vrot.lane.b32.xlu0 %v1160, 96
      %v1178 = vpop.permute.xlu0 %1177
      %1179 = vrot.lane.b32.xlu0 %v1162, 96
      %v1180 = vpop.permute.xlu0 %1179
      %1181 = vrot.lane.b32.xlu0 %v1165, 96
      %v1182 = vpop.permute.xlu0 %1181
      %1183 = vrot.lane.b32.xlu0 %v1167, 96
      %v1184 = vpop.permute.xlu0 %1183
      %v1189 = vadd.f32 %v843, %v1178
      %v1190 = vadd.f32 %v844, %v1180
      %v1191 = vadd.f32 %v845, %v1182
      %v1192 = vadd.f32 %v846, %v1184
      %s1193 = sadd.s32 %s851, 1
      %v1194 = vrot.slane %v1189, 6
      %v1195 = vrot.slane %v1190, 6
      %v1196 = vrot.slane %v1191, 6
      %v1197 = vrot.slane %v1192, 6
      %v1198 = vsel %vm196, %v1196, %v1197
      %v1199 = vsel %vm196, %v1195, %v1196
      %v1200 = vsel %vm196, %v1194, %v1195
      %v1201 = vsel %vm196, %v1197, %v1194
      %v1202 = vsel %vm499, %v1201, 0.0
      %v1203 = vsel %vm500, %v1200, 0.0
      %v1204 = vsel %vm501, %v1199, 0.0
      %v1205 = vsel %vm502, %v1198, 0.0
      %1210 = vrot.lane.b32.xlu0 %v1189, 16
      %v1211 = vpop.permute.xlu0 %1210
      %1212 = vrot.lane.b32.xlu0 %v1190, 16
      %v1213 = vpop.permute.xlu0 %1212
      %1214 = vrot.lane.b32.xlu0 %v1191, 16
      %v1215 = vpop.permute.xlu0 %1214
      %1216 = vrot.lane.b32.xlu0 %v1192, 16
      %v1217 = vpop.permute.xlu0 %1216
      %v1222 = vsel %vm646, %v1202, %v1211
      %v1223 = vsel %vm646, %v1203, %v1213
      %v1224 = vsel %vm646, %v1204, %v1215
      %v1225 = vsel %vm646, %v1205, %v1217
      %v1226 = vpack.c.bf16 %v1223, %v1222
      %v1227 = vpack.c.bf16 %v1225, %v1224
      %s1228 = smul.u32 %s1193, 4
      %s1229 = smul.addr %s1228, 4
      %s1230 = scalar_lea.vmem %s9, %s1229
      %v1231 = vld [vmem:[%s1230] sm:$0xf]
      %v1232 = vld [vmem:[%s1230 + $0x4] sm:$0xf]
      %v1233 = vld [vmem:[%s1230 + $0x8] sm:$0xf]
      %v1234 = vld [vmem:[%s1230 + $0xc] sm:$0xf]
      %s1235 = scalar_lea.vmem %s10, %s1193
      %v1236 = vld [vmem:[%s1235] sm:$0x1]
      %v1238 = vperm.slane %v1236, 0
      %v1244 = vunpack.c.l.b16 %v1231
      %v1245 = vunpack.c.l.b16 %v1232
      %v1246 = vunpack.c.l.b16 %v1233
      %v1247 = vunpack.c.l.b16 %v1234
      %v1248 = vpack.c.b16 %v1245, %v1244
      %v1249 = vpack.c.b16 %v1247, %v1246
      %v1253 = vsel %vm910, %v1226, 0
      %v1256 = vsel %vm910, %v1227, 0
      %1258 = vmatpush.bf16.msra.mxu0 0
      %1259 = vmatpush.bf16.msra.mxu0 0
      %1260 = vmatpush.bf16.msra.mxu0 0
      %1261 = vmatpush.bf16.msra.mxu0 0
      %1262 = vmatpush.bf16.msra.mxu0 0
      %1263 = vmatpush.bf16.msra.mxu0 0
      %1264 = vmatpush.bf16.msra.mxu0 %v1249
      %1265 = vmatpush.bf16.msra.mxu0 %v1248
      %1266 = vmatmul.bf16.gmra.mxu0 %v1253
      %v1267 = vpop.f32.mrf.mxu0
      %v1268 = vadd.f32 %v1238, %v1267
      %v1269 = vpop.f32.mrf.mxu0
      %v1270 = vadd.f32 %v1238, %v1269
      %1271 = vmatmul.bf16.gmra.mxu0 %v1256
      %v1272 = vpop.f32.mrf.mxu0
      %v1273 = vadd.f32 %v1238, %v1272
      %v1274 = vpop.f32.mrf.mxu0
      %v1275 = vadd.f32 %v1238, %v1274
      %1276 = vdwg.mxu0
      %s1277 = smul.u32 %s1193, 2
      %s1278 = smul.addr %s1277, 4
      %s1279 = scalar_lea.vmem %s11, %s1278
      %v1280 = vld [vmem:[%s1279] sm:$0xf]
      %v1281 = vld [vmem:[%s1279 + $0x4] sm:$0xf]
      %v1284 = vunpack.c.l.b16 %v1280
      %v1285 = vunpack.c.l.b16 %v1281
      %v1286 = vpack.c.b16 %v1285, %v1284
      %1288 = vmatpush.bf16.msra.mxu0 0
      %1289 = vmatpush.bf16.msra.mxu0 0
      %1290 = vmatpush.bf16.msra.mxu0 0
      %1291 = vmatpush.bf16.msra.mxu0 0
      %1292 = vmatpush.bf16.msra.mxu0 0
      %1293 = vmatpush.bf16.msra.mxu0 0
      %1294 = vmatpush.bf16.msra.mxu0 0
      %1295 = vmatpush.bf16.msra.mxu0 %v1286
      %1296 = vmatmul.bf16.gmra.mxu0 %v948
      %v1297 = vpop.f32.mrf.mxu0
      %v1298 = vadd.f32 0.0, %v1297
      %v1299 = vpop.f32.mrf.mxu0
      %v1300 = vadd.f32 0.0, %v1299
      %1301 = vmatmul.bf16.gmra.mxu0 %v951
      %v1302 = vpop.f32.mrf.mxu0
      %v1303 = vadd.f32 0.0, %v1302
      %v1304 = vpop.f32.mrf.mxu0
      %v1305 = vadd.f32 0.0, %v1304
      %1306 = vdwg.mxu0
      %v1307 = vadd.f32 %v1268, %v1298
      %v1308 = vadd.f32 %v1270, %v1300
      %v1309 = vadd.f32 %v1273, %v1303
      %v1310 = vadd.f32 %v1275, %v1305
      %s1311 = scalar_lea.vmem %s12, %s1193
      %v1312 = vld [vmem:[%s1311] sm:$0x1]
      %v1314 = vperm.slane %v1312, 0
      %v1316 = vadd.f32 %v1307, %v1314
      %v1317 = vadd.f32 %v1308, %v1314
      %v1318 = vadd.f32 %v1309, %v1314
      %v1319 = vadd.f32 %v1310, %v1314
      %s1320 = smul.addr %s1277, 4
      %s1321 = scalar_lea.vmem %s13, %s1320
      %v1322 = vld [vmem:[%s1321] sm:$0xf]
      %v1323 = vld [vmem:[%s1321 + $0x4] sm:$0xf]
      %v1324 = vpack.c.bf16 %v1317, %v1316
      %v1325 = vpack.c.bf16 %v1319, %v1318
      %s1326 = scalar_lea.vmem %s14, %s1193
      %v1327 = vld [vmem:[%s1326] sm:$0x1]
      %v1329 = vperm.slane %v1327, 0
      %v1333 = vunpack.c.l.b16 %v1322
      %v1334 = vunpack.c.l.b16 %v1323
      %v1335 = vpack.c.b16 %v1334, %v1333
      %v1338 = vsel %vm646, %v1324, 0
      %v1341 = vsel %vm646, %v1325, 0
      %1343 = vmatpush.bf16.msra.mxu0 0
      %1344 = vmatpush.bf16.msra.mxu0 0
      %1345 = vmatpush.bf16.msra.mxu0 0
      %1346 = vmatpush.bf16.msra.mxu0 0
      %1347 = vmatpush.bf16.msra.mxu0 0
      %1348 = vmatpush.bf16.msra.mxu0 0
      %1349 = vmatpush.bf16.msra.mxu0 0
      %1350 = vmatpush.bf16.msra.mxu0 %v1335
      %1351 = vmatmul.bf16.gmra.mxu0 %v1338
      %v1352 = vpop.f32.mrf.mxu0
      %v1353 = vadd.f32 %v1329, %v1352
      %v1354 = vpop.f32.mrf.mxu0
      %v1355 = vadd.f32 %v1329, %v1354
      %1356 = vmatmul.bf16.gmra.mxu0 %v1341
      %v1357 = vpop.f32.mrf.mxu0
      %v1358 = vadd.f32 %v1329, %v1357
      %v1359 = vpop.f32.mrf.mxu0
      %v1360 = vadd.f32 %v1329, %v1359
      %1361 = vdwg.mxu0
      %v1362 = vtanh.pop %v1353
      %v1363 = vtanh.pop %v1355
      %v1364 = vtanh.pop %v1358
      %v1365 = vtanh.pop %v1360
      %v1366 = vxor.u32 %v1353, 2147483648
      %v1367 = vxor.u32 %v1355, 2147483648
      %v1368 = vxor.u32 %v1358, 2147483648
      %v1369 = vxor.u32 %v1360, 2147483648
      %v1370 = vmul.f32 %v1366, 1.442695
      %v1371 = vpow.pop %v1370
      %v1372 = vmul.f32 %v1367, 1.442695
      %v1373 = vpow.pop %v1372
      %v1374 = vmul.f32 %v1368, 1.442695
      %v1375 = vpow.pop %v1374
      %v1376 = vmul.f32 %v1369, 1.442695
      %v1377 = vpow.pop %v1376
      %v1378 = vadd.f32 %v1371, 1.0
      %v1379 = vadd.f32 %v1373, 1.0
      %v1380 = vadd.f32 %v1375, 1.0
      %v1381 = vadd.f32 %v1377, 1.0
      %v1382 = vrcp.pop %v1378
      %v1383 = vmul.f32 %v1378, %v1382
      %v1384 = vsub.f32 1.0, %v1383
      %v1385 = vmul.f32 %v1382, %v1384
      %v1386 = vadd.f32 %v1382, %v1385
      %vm1387 = vweird.f32 %v1378
      %vm1388 = vweird.f32 %v1382
      %vm1389 = vmor %vm1387, %vm1388
      %v1390 = vsel %vm1389, %v1382, %v1386
      %v1391 = vand.u32 2147483647, %v1378
      %vm1392 = vcmp.eq.f32.partialorder %v1391, 8.507059e+37
      %v1393 = vand.u32 %v1378, 2147483648
      %v1394 = vor.u32 1.1754944e-38, %v1393
      %v1395 = vsel %vm1392, %v1394, %v1390
      %v1396 = vmul.f32 1.0, %v1395
      %v1397 = vrcp.pop %v1379
      %v1398 = vmul.f32 %v1379, %v1397
      %v1399 = vsub.f32 1.0, %v1398
      %v1400 = vmul.f32 %v1397, %v1399
      %v1401 = vadd.f32 %v1397, %v1400
      %vm1402 = vweird.f32 %v1379
      %vm1403 = vweird.f32 %v1397
      %vm1404 = vmor %vm1402, %vm1403
      %v1405 = vsel %vm1404, %v1397, %v1401
      %v1406 = vand.u32 2147483647, %v1379
      %vm1407 = vcmp.eq.f32.partialorder %v1406, 8.507059e+37
      %v1408 = vand.u32 %v1379, 2147483648
      %v1409 = vor.u32 1.1754944e-38, %v1408
      %v1410 = vsel %vm1407, %v1409, %v1405
      %v1411 = vmul.f32 1.0, %v1410
      %v1412 = vrcp.pop %v1380
      %v1413 = vmul.f32 %v1380, %v1412
      %v1414 = vsub.f32 1.0, %v1413
      %v1415 = vmul.f32 %v1412, %v1414
      %v1416 = vadd.f32 %v1412, %v1415
      %vm1417 = vweird.f32 %v1380
      %vm1418 = vweird.f32 %v1412
      %vm1419 = vmor %vm1417, %vm1418
      %v1420 = vsel %vm1419, %v1412, %v1416
      %v1421 = vand.u32 2147483647, %v1380
      %vm1422 = vcmp.eq.f32.partialorder %v1421, 8.507059e+37
      %v1423 = vand.u32 %v1380, 2147483648
      %v1424 = vor.u32 1.1754944e-38, %v1423
      %v1425 = vsel %vm1422, %v1424, %v1420
      %v1426 = vmul.f32 1.0, %v1425
      %v1427 = vrcp.pop %v1381
      %v1428 = vmul.f32 %v1381, %v1427
      %v1429 = vsub.f32 1.0, %v1428
      %v1430 = vmul.f32 %v1427, %v1429
      %v1431 = vadd.f32 %v1427, %v1430
      %vm1432 = vweird.f32 %v1381
      %vm1433 = vweird.f32 %v1427
      %vm1434 = vmor %vm1432, %vm1433
      %v1435 = vsel %vm1434, %v1427, %v1431
      %v1436 = vand.u32 2147483647, %v1381
      %vm1437 = vcmp.eq.f32.partialorder %v1436, 8.507059e+37
      %v1438 = vand.u32 %v1381, 2147483648
      %v1439 = vor.u32 1.1754944e-38, %v1438
      %v1440 = vsel %vm1437, %v1439, %v1435
      %v1441 = vmul.f32 1.0, %v1440
      %1446 = vrot.lane.b32.xlu0 %v1396, 112
      %v1447 = vpop.permute.xlu0 %1446
      %1448 = vrot.lane.b32.xlu0 %v1411, 112
      %v1449 = vpop.permute.xlu0 %1448
      %1450 = vrot.lane.b32.xlu0 %v1426, 112
      %v1451 = vpop.permute.xlu0 %1450
      %1452 = vrot.lane.b32.xlu0 %v1441, 112
      %v1453 = vpop.permute.xlu0 %1452
      %v1458 = vmul.f32 %v1362, %v1447
      %v1459 = vmul.f32 %v1363, %v1449
      %v1460 = vmul.f32 %v1364, %v1451
      %v1461 = vmul.f32 %v1365, %v1453
      %s1462 = smul.addr %s1277, 4
      %s1463 = scalar_lea.vmem %s15, %s1462
      %v1464 = vld [vmem:[%s1463] sm:$0xf]
      %v1465 = vld [vmem:[%s1463 + $0x4] sm:$0xf]
      %v1466 = vpack.c.bf16 %v1459, %v1458
      %v1467 = vpack.c.bf16 %v1461, %v1460
      %s1468 = scalar_lea.vmem %s16, %s1193
      %v1469 = vld [vmem:[%s1468] sm:$0x1]
      %v1471 = vperm.slane %v1469, 0
      %v1475 = vunpack.c.l.b16 %v1464
      %v1476 = vunpack.c.l.b16 %v1465
      %v1477 = vpack.c.b16 %v1476, %v1475
      %v1480 = vsel %vm646, %v1466, 0
      %v1483 = vsel %vm646, %v1467, 0
      %1485 = vmatpush.bf16.msra.mxu0 0
      %1486 = vmatpush.bf16.msra.mxu0 0
      %1487 = vmatpush.bf16.msra.mxu0 0
      %1488 = vmatpush.bf16.msra.mxu0 0
      %1489 = vmatpush.bf16.msra.mxu0 0
      %1490 = vmatpush.bf16.msra.mxu0 0
      %1491 = vmatpush.bf16.msra.mxu0 0
      %1492 = vmatpush.bf16.msra.mxu0 %v1477
      %1493 = vmatmul.bf16.gmra.mxu0 %v1480
      %v1494 = vpop.f32.mrf.mxu0
      %v1495 = vadd.f32 %v1471, %v1494
      %v1496 = vpop.f32.mrf.mxu0
      %v1497 = vadd.f32 %v1471, %v1496
      %1498 = vmatmul.bf16.gmra.mxu0 %v1483
      %v1499 = vpop.f32.mrf.mxu0
      %v1500 = vadd.f32 %v1471, %v1499
      %v1501 = vpop.f32.mrf.mxu0
      %v1502 = vadd.f32 %v1471, %v1501
      %1503 = vdwg.mxu0
      %v1504 = vadd.f32 %v1169, %v1495
      %v1505 = vadd.f32 %v1170, %v1497
      %v1506 = vadd.f32 %v1171, %v1500
      %v1507 = vadd.f32 %v1172, %v1502
      %1512 = vrot.lane.b32.xlu0 %v1495, 96
      %v1513 = vpop.permute.xlu0 %1512
      %1514 = vrot.lane.b32.xlu0 %v1497, 96
      %v1515 = vpop.permute.xlu0 %1514
      %1516 = vrot.lane.b32.xlu0 %v1500, 96
      %v1517 = vpop.permute.xlu0 %1516
      %1518 = vrot.lane.b32.xlu0 %v1502, 96
      %v1519 = vpop.permute.xlu0 %1518
      %v1524 = vadd.f32 %v1189, %v1513
      %v1525 = vadd.f32 %v1190, %v1515
      %v1526 = vadd.f32 %v1191, %v1517
      %v1527 = vadd.f32 %v1192, %v1519
    $region110: #{tpu_custom_call.1} parent=1 // loop_footer
      %s842 = sadd.s32 1, %s838
    $region111: #{tpu_custom_call.1} parent=1 // loop_footer_branch
      %837 = sbr.rel target = $region107
    $region112: #{tpu_custom_call.1} parent=1 // loop_exit
      _
    %v1528 = vmax.f32 %v847, 0.0
    %v1529 = vmax.f32 %v848, 0.0
    %v1530 = vmax.f32 %v849, 0.0
    %v1531 = vmax.f32 %v850, 0.0
    %v1532 = vld [vmem:[%s17] sm:$0xf]
    %v1533 = vld [vmem:[%s17 + $0x4] sm:$0xf]
    %v1534 = vld [vmem:[%s17 + $0x8] sm:$0xf]
    %v1535 = vld [vmem:[%s17 + $0xc] sm:$0xf]
    %v1536 = vpack.c.bf16 %v1529, %v1528
    %v1537 = vpack.c.bf16 %v1531, %v1530
    %v1538 = vld [vmem:[%s18] sm:$0x1]
    %v1540 = vperm.slane %v1538, 0
    %v1546 = vunpack.c.l.b16 %v1532
    %v1547 = vunpack.c.l.b16 %v1533
    %v1548 = vunpack.c.l.b16 %v1534
    %v1549 = vunpack.c.l.b16 %v1535
    %v1550 = vpack.c.b16 %v1547, %v1546
    %v1551 = vpack.c.b16 %v1549, %v1548
    %vm1554 = vcmask 261120
    %v1556 = vsel %vm1554, %v1536, 0
    %v1559 = vsel %vm1554, %v1537, 0
    %1561 = vmatpush.bf16.msra.mxu0 0
    %1562 = vmatpush.bf16.msra.mxu0 0
    %1563 = vmatpush.bf16.msra.mxu0 0
    %1564 = vmatpush.bf16.msra.mxu0 0
    %1565 = vmatpush.bf16.msra.mxu0 0
    %1566 = vmatpush.bf16.msra.mxu0 0
    %1567 = vmatpush.bf16.msra.mxu0 %v1551
    %1568 = vmatpush.bf16.msra.mxu0 %v1550
    %1569 = vmatmul.bf16.gmra.mxu0 %v1556
    %v1570 = vpop.f32.mrf.mxu0
    %v1571 = vadd.f32 %v1540, %v1570
    %v1572 = vpop.f32.mrf.mxu0
    %v1573 = vadd.f32 %v1540, %v1572
    %1574 = vmatmul.bf16.gmra.mxu0 %v1559
    %v1575 = vpop.f32.mrf.mxu0
    %v1576 = vadd.f32 %v1540, %v1575
    %v1577 = vpop.f32.mrf.mxu0
    %v1578 = vadd.f32 %v1540, %v1577
    %1579 = vdwg.mxu0
    %v1580 = vmax.f32 %v1571, 0.0
    %v1581 = vmax.f32 %v1573, 0.0
    %v1582 = vmax.f32 %v1576, 0.0
    %v1583 = vmax.f32 %v1578, 0.0
    %v1584 = vld [vmem:[%s19] sm:$0xf]
    %v1585 = vld [vmem:[%s19 + $0x4] sm:$0xf]
    %v1586 = vld [vmem:[%s19 + $0x8] sm:$0xf]
    %v1587 = vld [vmem:[%s19 + $0xc] sm:$0xf]
    %v1588 = vpack.c.bf16 %v1581, %v1580
    %v1589 = vpack.c.bf16 %v1583, %v1582
    %v1590 = vld [vmem:[%s20] sm:$0x1]
    %v1592 = vperm.slane %v1590, 0
    %v1598 = vunpack.c.l.b16 %v1584
    %v1599 = vunpack.c.l.b16 %v1585
    %v1600 = vunpack.c.l.b16 %v1586
    %v1601 = vunpack.c.l.b16 %v1587
    %v1602 = vpack.c.b16 %v1599, %v1598
    %v1603 = vpack.c.b16 %v1601, %v1600
    %v1607 = vsel %vm1554, %v1588, 0
    %v1610 = vsel %vm1554, %v1589, 0
    %1612 = vmatpush.bf16.msra.mxu0 0
    %1613 = vmatpush.bf16.msra.mxu0 0
    %1614 = vmatpush.bf16.msra.mxu0 0
    %1615 = vmatpush.bf16.msra.mxu0 0
    %1616 = vmatpush.bf16.msra.mxu0 0
    %1617 = vmatpush.bf16.msra.mxu0 0
    %1618 = vmatpush.bf16.msra.mxu0 %v1603
    %1619 = vmatpush.bf16.msra.mxu0 %v1602
    %1620 = vmatmul.bf16.gmra.mxu0 %v1607
    %v1621 = vpop.f32.mrf.mxu0
    %v1622 = vadd.f32 %v1592, %v1621
    %v1623 = vpop.f32.mrf.mxu0
    %v1624 = vadd.f32 %v1592, %v1623
    %1625 = vmatmul.bf16.gmra.mxu0 %v1610
    %v1626 = vpop.f32.mrf.mxu0
    %v1627 = vadd.f32 %v1592, %v1626
    %v1628 = vpop.f32.mrf.mxu0
    %v1629 = vadd.f32 %v1592, %v1628
    %1630 = vdwg.mxu0
    %v1631 = vmax.f32 %v1622, 0.0
    %v1632 = vmax.f32 %v1624, 0.0
    %v1633 = vmax.f32 %v1627, 0.0
    %v1634 = vmax.f32 %v1629, 0.0
    %v1635 = vld [vmem:[%s21] sm:$0xf]
    %v1636 = vld [vmem:[%s21 + $0x4] sm:$0xf]
    %v1637 = vld [vmem:[%s21 + $0x8] sm:$0xf]
    %v1638 = vld [vmem:[%s21 + $0xc] sm:$0xf]
    %v1639 = vpack.c.bf16 %v1632, %v1631
    %v1640 = vpack.c.bf16 %v1634, %v1633
    %v1641 = vld [vmem:[%s22] sm:$0x1]
    %v1643 = vperm.slane %v1641, 0
    %v1649 = vunpack.c.l.b16 %v1635
    %v1650 = vunpack.c.l.b16 %v1636
    %v1651 = vunpack.c.l.b16 %v1637
    %v1652 = vunpack.c.l.b16 %v1638
    %v1653 = vpack.c.b16 %v1650, %v1649
    %v1654 = vpack.c.b16 %v1652, %v1651
    %v1658 = vsel %vm1554, %v1639, 0
    %v1661 = vsel %vm1554, %v1640, 0
    %1663 = vmatpush.bf16.msra.mxu0 0
    %1664 = vmatpush.bf16.msra.mxu0 0
    %1665 = vmatpush.bf16.msra.mxu0 0
    %1666 = vmatpush.bf16.msra.mxu0 0
    %1667 = vmatpush.bf16.msra.mxu0 0
    %1668 = vmatpush.bf16.msra.mxu0 0
    %1669 = vmatpush.bf16.msra.mxu0 %v1654
    %1670 = vmatpush.bf16.msra.mxu0 %v1653
    %1671 = vmatmul.bf16.gmra.mxu0 %v1658
    %v1672 = vpop.f32.mrf.mxu0
    %v1673 = vadd.f32 %v1643, %v1672
    %v1674 = vpop.f32.mrf.mxu0
    %v1675 = vadd.f32 %v1643, %v1674
    %1676 = vmatmul.bf16.gmra.mxu0 %v1661
    %v1677 = vpop.f32.mrf.mxu0
    %v1678 = vadd.f32 %v1643, %v1677
    %v1679 = vpop.f32.mrf.mxu0
    %v1680 = vadd.f32 %v1643, %v1679
    %1681 = vdwg.mxu0
    %v1682 = vld [vmem:[%s24] sm:$0x1]
    %v1684 = vperm.slane %v1682, 0
    %v1686 = vmul.f32 %v1673, %v1684
    %v1687 = vmul.f32 %v1675, %v1684
    %v1688 = vmul.f32 %v1678, %v1684
    %v1689 = vmul.f32 %v1680, %v1684
    %vm1690 = vcmask 138240
    %v1691 = vsel %vm1690, %v1686, 0.0
    %1692 = vadd.xlane.f32.xlu0 %v1691
    %v1693 = vpop.xlane.xlu0 %1692
    %v1694 = vsel %vm1690, %v1687, 0.0
    %1695 = vadd.xlane.f32.xlu0 %v1694
    %v1696 = vpop.xlane.xlu0 %1695
    %v1697 = vsel %vm1690, %v1688, 0.0
    %1698 = vadd.xlane.f32.xlu0 %v1697
    %v1699 = vpop.xlane.xlu0 %1698
    %v1700 = vsel %vm1690, %v1689, 0.0
    %1701 = vadd.xlane.f32.xlu0 %v1700
    %v1702 = vpop.xlane.xlu0 %1701
    %v1707 = vlaneseq
    %v1708 = vand.u32 %v1707, 127
    %v1709 = vperm.slane %v1693, %v1708
    %v1710 = vadd.s32 %v1708, 4294967288
    %v1711 = vperm.slane %v1696, %v1710
    %vm1712 = vcmask 130112
    %v1713 = vsel %vm1712, %v1711, %v1709
    %v1714 = vperm.slane %v1699, %v1708
    %v1715 = vperm.slane %v1702, %v1710
    %v1716 = vsel %vm1712, %v1715, %v1714
    %vm1717 = vcmask 1041409
    %v1718 = vsel %vm1717, %v1716, %v1713
    %vm1720 = vcmask 123904
    %1721 = vst.msk [vmem:[#allocation3] sm:$0x3] %vm1720, %v1718
    %v1722 = vmax.f32 %v1673, 0.0
    %v1723 = vmax.f32 %v1675, 0.0
    %v1724 = vmax.f32 %v1678, 0.0
    %v1725 = vmax.f32 %v1680, 0.0
    %v1726 = vld [vmem:[%s23] sm:$0x1]
    %v1728 = vperm.slane %v1726, 0
    %v1730 = vmul.f32 %v1722, %v1728
    %v1731 = vmul.f32 %v1723, %v1728
    %v1732 = vmul.f32 %v1724, %v1728
    %v1733 = vmul.f32 %v1725, %v1728
    %v1734 = vsel %vm1690, %v1730, 0.0
    %1735 = vadd.xlane.f32.xlu0 %v1734
    %v1736 = vpop.xlane.xlu0 %1735
    %v1737 = vsel %vm1690, %v1731, 0.0
    %1738 = vadd.xlane.f32.xlu0 %v1737
    %v1739 = vpop.xlane.xlu0 %1738
    %v1740 = vsel %vm1690, %v1732, 0.0
    %1741 = vadd.xlane.f32.xlu0 %v1740
    %v1742 = vpop.xlane.xlu0 %1741
    %v1743 = vsel %vm1690, %v1733, 0.0
    %1744 = vadd.xlane.f32.xlu0 %v1743
    %v1745 = vpop.xlane.xlu0 %1744
    %v1746 = vld [vmem:[#allocation2] sm:$0x1]
    %v1748 = vperm.slane %v1746, 0
    %1749 = vset.pattern.permute.xlu0 0
    %1750 = vperm.xlu0 %1749, %v1748
    %v1751 = vpop.permute.xlu0 %1750
    %v1753 = vadd.f32 %v1736, %v1751
    %v1754 = vadd.f32 %v1739, %v1751
    %v1755 = vadd.f32 %v1742, %v1751
    %v1756 = vadd.f32 %v1745, %v1751
    %v1757 = vmax.f32 %v1753, 0.0
    %v1758 = vmax.f32 %v1754, 0.0
    %v1759 = vmax.f32 %v1755, 0.0
    %v1760 = vmax.f32 %v1756, 0.0
    %vm1761 = vcmp.ne.f32.partialorder %v1753, %v1753
    %vm1762 = vcmp.ne.f32.partialorder %v1754, %v1754
    %vm1763 = vcmp.ne.f32.partialorder %v1755, %v1755
    %vm1764 = vcmp.ne.f32.partialorder %v1756, %v1756
    %v1765 = vadd.f32 %v1753, 0.0
    %v1766 = vadd.f32 %v1754, 0.0
    %v1767 = vadd.f32 %v1755, 0.0
    %v1768 = vadd.f32 %v1756, 0.0
    %v1769 = vand.u32 2147483647, %v1753
    %v1770 = vand.u32 2147483647, %v1754
    %v1771 = vand.u32 2147483647, %v1755
    %v1772 = vand.u32 2147483647, %v1756
    %v1773 = vsub.f32 0.0, %v1769
    %v1774 = vsub.f32 0.0, %v1770
    %v1775 = vsub.f32 0.0, %v1771
    %v1776 = vsub.f32 0.0, %v1772
    %v1777 = vmul.f32 %v1773, 1.442695
    %v1778 = vpow.pop %v1777
    %v1779 = vmul.f32 %v1774, 1.442695
    %v1780 = vpow.pop %v1779
    %v1781 = vmul.f32 %v1775, 1.442695
    %v1782 = vpow.pop %v1781
    %v1783 = vmul.f32 %v1776, 1.442695
    %v1784 = vpow.pop %v1783
    %v1785 = vadd.f32 %v1778, 1.0
    %v1786 = vlog2.pop %v1785
    %v1787 = vmul.f32 %v1786, 0.6931472
    %v1788 = vmul.f32 -0.5, %v1778
    %v1789 = vadd.f32 %v1788, 1.0
    %v1790 = vmul.f32 %v1789, %v1778
    %v1791 = vand.u32 2147483647, %v1778
    %vm1792 = vcmp.lt.f32.partialorder %v1791, 0.0004427343
    %v1793 = vsel %vm1792, %v1790, %v1787
    %v1794 = vadd.f32 %v1780, 1.0
    %v1795 = vlog2.pop %v1794
    %v1796 = vmul.f32 %v1795, 0.6931472
    %v1797 = vmul.f32 -0.5, %v1780
    %v1798 = vadd.f32 %v1797, 1.0
    %v1799 = vmul.f32 %v1798, %v1780
    %v1800 = vand.u32 2147483647, %v1780
    %vm1801 = vcmp.lt.f32.partialorder %v1800, 0.0004427343
    %v1802 = vsel %vm1801, %v1799, %v1796
    %v1803 = vadd.f32 %v1782, 1.0
    %v1804 = vlog2.pop %v1803
    %v1805 = vmul.f32 %v1804, 0.6931472
    %v1806 = vmul.f32 -0.5, %v1782
    %v1807 = vadd.f32 %v1806, 1.0
    %v1808 = vmul.f32 %v1807, %v1782
    %v1809 = vand.u32 2147483647, %v1782
    %vm1810 = vcmp.lt.f32.partialorder %v1809, 0.0004427343
    %v1811 = vsel %vm1810, %v1808, %v1805
    %v1812 = vadd.f32 %v1784, 1.0
    %v1813 = vlog2.pop %v1812
    %v1814 = vmul.f32 %v1813, 0.6931472
    %v1815 = vmul.f32 -0.5, %v1784
    %v1816 = vadd.f32 %v1815, 1.0
    %v1817 = vmul.f32 %v1816, %v1784
    %v1818 = vand.u32 2147483647, %v1784
    %vm1819 = vcmp.lt.f32.partialorder %v1818, 0.0004427343
    %v1820 = vsel %vm1819, %v1817, %v1814
    %v1821 = vadd.f32 %v1757, %v1793
    %v1822 = vadd.f32 %v1758, %v1802
    %v1823 = vadd.f32 %v1759, %v1811
    %v1824 = vadd.f32 %v1760, %v1820
    %v1825 = vsel %vm1761, %v1765, %v1821
    %v1826 = vsel %vm1762, %v1766, %v1822
    %v1827 = vsel %vm1763, %v1767, %v1823
    %v1828 = vsel %vm1764, %v1768, %v1824
    %v1833 = vperm.slane %v1825, %v1708
    %v1834 = vperm.slane %v1826, %v1710
    %v1835 = vsel %vm1712, %v1834, %v1833
    %v1836 = vperm.slane %v1827, %v1708
    %v1837 = vperm.slane %v1828, %v1710
    %v1838 = vsel %vm1712, %v1837, %v1836
    %v1839 = vsel %vm1717, %v1838, %v1835
    %1841 = vst.msk [vmem:[#allocation5] sm:$0x3] %vm1720, %v1839
    // Predicated region
    $region113: #{tpu_custom_call.1} parent=1 // pred_check
      _
    $region114: #{tpu_custom_call.1} parent=1 // pred_check_branch
      %1843 = sbr.rel (0) target = $region116
    $region115: #{tpu_custom_call.1} parent=1 // pred_region
      %1845 = vsyncadd [#allocation4], 0
      %s1847 = sshll.u32 [#allocation3], 4
      %s1848 = int_to_ptr.vmem [resolvable:$true] %s1847
      %s1849 = sshll.u32 %s26, 4
      %s1850 = int_to_ptr.hbm [resolvable:$true] %s1849
      %1852 = dma.vmem_to_hbm [thread:$0]  %s1848, 32, %s1850, [#allocation4]
    $region116: #{tpu_custom_call.1} parent=1 // pred_fallthru
      _
    // Predicated region
    $region117: #{tpu_custom_call.1} parent=1 // pred_check
      _
    $region118: #{tpu_custom_call.1} parent=1 // pred_check_branch
      %1854 = sbr.rel (0) target = $region120
    $region119: #{tpu_custom_call.1} parent=1 // pred_region
      %1856 = vsyncadd [#allocation6], 0
      %s1858 = sshll.u32 [#allocation5], 4
      %s1859 = int_to_ptr.vmem [resolvable:$true] %s1858
      %s1860 = sshll.u32 %s27, 4
      %s1861 = int_to_ptr.hbm [resolvable:$true] %s1860
      %1863 = dma.vmem_to_hbm [thread:$0]  %s1859, 32, %s1861, [#allocation6]
    $region120: #{tpu_custom_call.1} parent=1 // pred_fallthru
      _
    // Predicated region
    $region121: #{tpu_custom_call.1} parent=1 // pred_check
      _
    $region122: #{tpu_custom_call.1} parent=1 // pred_check_branch
      %1865 = sbr.rel (0) target = $region124
    $region123: #{tpu_custom_call.1} parent=1 // pred_region
      %1867 = dma.done [#allocation4], 32
    $region124: #{tpu_custom_call.1} parent=1 // pred_fallthru
      _
    // Predicated region
    $region125: #{tpu_custom_call.1} parent=1 // pred_check
      _
    $region126: #{tpu_custom_call.1} parent=1 // pred_check_branch
      %1869 = sbr.rel (0) target = $region128
    $region127: #{tpu_custom_call.1} parent=1 // pred_region
      %1871 = dma.done [#allocation6], 32
    $region128: #{tpu_custom_call.1} parent=1 // pred_fallthru
      _
    %1872 = vsyncpa [#allocation4], 1
    %1873 = vsyncpa [#allocation6], 1

</llo_original>
